<compile_context>
chip_gen: v7x
topology: tpu7x:2x2x1
jax: 0.10.0
libtpu: 0.0.40
codegen_flags: <defaults>
</compile_context>

<pallas_src>
import functools

import jax
import jax.numpy as jnp
from jax.experimental import pallas as pl
from jax.experimental.pallas import tpu as pltpu


# ---------------------------------------------------------------------------
# Per-generation sizing helpers
# ---------------------------------------------------------------------------
def _query_vmem_limit():
    """~3/4 of the chip's VMEM, capped < 100 MiB.

    v7x (64 MiB VMEM) -> 48 MiB; v5e/v6e (128 MiB) -> 96 MiB.
    """
    try:
        cap = int(pltpu.get_tpu_info().vmem_capacity_bytes)
    except Exception:
        cap = 64 * 1024 * 1024
    return min((cap * 3) // 4, 100 * 1024 * 1024)


_VMEM_LIMIT = _query_vmem_limit()
_MAX_IMAGES_PER_BLOCK = 8          # unroll cap for the per-image loop


def _pick_batch_block(N, C, HW):
    """Images per grid step: live footprint ~6x the block (dbuf in + dbuf out +
    padded scratch); capped for unroll size; must divide N."""
    per_image = C * HW * 4
    nb = max(1, min(N, _VMEM_LIMIT // (6 * per_image), _MAX_IMAGES_PER_BLOCK))
    while N % nb:
        nb -= 1
    return nb


def _pick_row_block(R, HW):
    """Row block for the lane-dense affine pass (second-minor block dim must be
    a multiple of 8 unless it covers the full extent)."""
    per_row = HW * 4
    rb = max(1, min(R, _VMEM_LIMIT // (6 * per_row)))
    if rb >= R:
        return R
    rb = max(8, (rb // 8) * 8)
    while rb > 0 and R % rb:
        rb -= 8
    return rb if rb > 0 else R


# ---------------------------------------------------------------------------
# Kernels
# ---------------------------------------------------------------------------
def _conv_bn_stage_kernel(x_ref, scale_ref, shift_ref, w_ref, b_ref, mask_ref,
                          y_ref, stats_ref, buf_ref,
                          *, H, W, C, Nb, relu_input, affine_input):
    """Conv3x3 (+ fused previous-stage BN affine / ReLU) + per-block BN stats.

    x_ref    : (Nb, C, H*W)          input activations (spatial on lanes)
    scale_ref: (C, 1)                folded BN scale of the previous stage
    shift_ref: (C, 1)                folded BN shift of the previous stage
    w_ref    : (9, C, C)             conv weight, tap-major (t = ky*3+kx)
    b_ref    : (C, 1)                conv bias
    mask_ref : (2, H*W)              hoisted W-boundary masks (left, right)
    y_ref    : (Nb, C, H*W)          pre-BN conv output
    stats_ref: (1, C, 2)             per-block partial (sum, sum-of-squares)
    buf_ref  : (Nb, C, (H+2)*W + 2)  VMEM scratch: H-padded flat activations
    """
    HW = H * W
    PADW = (H + 2) * W + 2
    mleft = mask_ref[0:1, :]                  # (1, HW): 0.0 where col == 0
    mright = mask_ref[1:2, :]                 # (1, HW): 0.0 where col == W-1

    s_acc = jnp.zeros((C, 1), jnp.float32)
    q_acc = jnp.zeros((C, 1), jnp.float32)

    for i in range(Nb):                       # static unroll (Nb is capped)
        a = x_ref[i]                          # (C, HW)
        if affine_input:
            a = a * scale_ref[...] + shift_ref[...]
        if relu_input:
            a = jnp.maximum(a, 0.0)

        # H-padded flat buffer: zero halo rows + guard lanes (cheap, and keeps
        # the kernel step-independent so the grid axis can be "parallel"),
        # then write the interior rows.
        buf_ref[i, :, 0:1 + W] = jnp.zeros((C, 1 + W), jnp.float32)
        buf_ref[i, :, 1 + (H + 1) * W:PADW] = jnp.zeros((C, W + 1), jnp.float32)
        buf_ref[i, :, 1 + W:1 + W + HW] = a

        # 9 accumulating MXU matmuls over lane-shifted windows of the buffer
        # (no im2col patch buffer); W-boundary taps use the hoisted lane masks.
        acc = jnp.zeros((C, HW), jnp.float32)
        for ky in range(3):
            for kx in range(3):
                s = ky * W + kx
                win = buf_ref[i, :, s:s + HW]           # (C, HW)
                if kx == 0:
                    win = win * mleft
                elif kx == 2:
                    win = win * mright
                acc = acc + jnp.dot(w_ref[ky * 3 + kx], win,
                                    preferred_element_type=jnp.float32)
        y = acc + b_ref[...]
        y_ref[i] = y

        # Per-channel partial batch statistics for this block.
        s_acc = s_acc + jnp.sum(y, axis=1, keepdims=True)
        q_acc = q_acc + jnp.sum(y * y, axis=1, keepdims=True)

    stats_ref[0, :, 0:1] = s_acc
    stats_ref[0, :, 1:2] = q_acc


def _affine_kernel(y_ref, scale_ref, shift_ref, out_ref):
    """Final BatchNorm affine (batch stats already folded into scale/shift)."""
    out_ref[...] = y_ref[...] * scale_ref[...] + shift_ref[...]


# ---------------------------------------------------------------------------
# Wrappers
# ---------------------------------------------------------------------------
def _conv_bn_stage(x_flat, scale, shift, w9, bias, masks, *, H, W, nb,
                   relu_input, affine_input):
    N, C, HW = x_flat.shape
    n_blocks = N // nb
    kernel = functools.partial(_conv_bn_stage_kernel, H=H, W=W, C=C, Nb=nb,
                               relu_input=relu_input, affine_input=affine_input)
    grid_spec = pltpu.PrefetchScalarGridSpec(
        num_scalar_prefetch=0,
        grid=(n_blocks,),
        in_specs=[
            pl.BlockSpec((nb, C, HW), lambda n: (n, 0, 0)),
            pl.BlockSpec((C, 1), lambda n: (0, 0)),
            pl.BlockSpec((C, 1), lambda n: (0, 0)),
            pl.BlockSpec((9, C, C), lambda n: (0, 0, 0)),
            pl.BlockSpec((C, 1), lambda n: (0, 0)),
            pl.BlockSpec((2, HW), lambda n: (0, 0)),
        ],
        out_specs=[
            pl.BlockSpec((nb, C, HW), lambda n: (n, 0, 0)),
            pl.BlockSpec((1, C, 2), lambda n: (n, 0, 0)),
        ],
        scratch_shapes=[
            pltpu.VMEM((nb, C, (H + 2) * W + 2), jnp.float32),
        ],
    )
    return pl.pallas_call(
        kernel,
        out_shape=(jax.ShapeDtypeStruct((N, C, HW), jnp.float32),
                   jax.ShapeDtypeStruct((n_blocks, C, 2), jnp.float32)),
        grid_spec=grid_spec,
        compiler_params=pltpu.CompilerParams(
            dimension_semantics=("parallel",),     # step-independent -> v7x megacore
            vmem_limit_bytes=_VMEM_LIMIT),
    )(x_flat, scale, shift, w9, bias, masks)


def _affine(y2d, scale_rows, shift_rows, *, rb):
    R, HW = y2d.shape
    grid_spec = pltpu.PrefetchScalarGridSpec(
        num_scalar_prefetch=0,
        grid=(R // rb,),
        in_specs=[
            pl.BlockSpec((rb, HW), lambda r: (r, 0)),
            pl.BlockSpec((rb, 1), lambda r: (r, 0)),
            pl.BlockSpec((rb, 1), lambda r: (r, 0)),
        ],
        out_specs=pl.BlockSpec((rb, HW), lambda r: (r, 0)),
    )
    return pl.pallas_call(
        _affine_kernel,
        out_shape=jax.ShapeDtypeStruct((R, HW), jnp.float32),
        grid_spec=grid_spec,
        input_output_aliases={0: 0},               # write in place over y2
        compiler_params=pltpu.CompilerParams(
            dimension_semantics=("parallel",),
            vmem_limit_bytes=_VMEM_LIMIT),
    )(y2d, scale_rows, shift_rows)


def _bn_scale_shift(stats, gamma, beta, count, eps):
    """Combine per-block partial sums into one per-channel scale/shift."""
    total = jnp.sum(stats.astype(jnp.float32), axis=0)     # (C, 2)
    mean = total[:, 0] / count
    var = total[:, 1] / count - mean * mean                # biased var (training BN)
    scale = gamma * jax.lax.rsqrt(var + eps)
    shift = beta - mean * scale
    return scale.reshape(-1, 1), shift.reshape(-1, 1)


def _trans_block_forward_impl(x_nchw, params):
    """x_nchw: (N, C, H, W) float32. Returns (N, C, H, W) float32."""
    eps = 1e-5
    N, C, H, W = x_nchw.shape
    HW = H * W
    # Free, contiguous reshape -- no NCHW<->NHWC transposes anywhere.
    x_flat = x_nchw.reshape(N, C, HW).astype(jnp.float32)

    def conv_w9(w):   # (Cout, Cin, 3, 3) -> (9, Cout, Cin), tap-major
        return jnp.transpose(w, (2, 3, 0, 1)).reshape(9, C, C).astype(jnp.float32)

    w1 = conv_w9(params["w1"])
    w2 = conv_w9(params["w2"])
    b1 = params["b1"].reshape(C, 1).astype(jnp.float32)
    b2 = params["b2"].reshape(C, 1).astype(jnp.float32)

    # Hoisted W-boundary masks (1.0 = keep), shared by both conv stages.
    col = jnp.arange(HW, dtype=jnp.int32) % W
    masks = jnp.stack([(col != 0), (col != W - 1)], axis=0).astype(jnp.float32)

    ident = jnp.ones((C, 1), jnp.float32)
    zeros = jnp.zeros((C, 1), jnp.float32)
    count = float(N * HW)
    nb = _pick_batch_block(N, C, HW)

    # Stage 1: conv1 (+ per-block partial stats for BN1)
    y1, st1 = _conv_bn_stage(x_flat, ident, zeros, w1, b1, masks, H=H, W=W,
                             nb=nb, relu_input=False, affine_input=False)
    scale1, shift1 = _bn_scale_shift(st1, params["bn1_w"], params["bn1_b"],
                                     count, eps)

    # Stage 2: fused BN1 affine + ReLU + conv2 (+ partial stats for BN2)
    y2, st2 = _conv_bn_stage(y1, scale1, shift1, w2, b2, masks, H=H, W=W,
                             nb=nb, relu_input=True, affine_input=True)
    scale2, shift2 = _bn_scale_shift(st2, params["bn2_w"], params["bn2_b"],
                                     count, eps)

    # Stage 3: BN2 affine on a lane/row-dense (N*C, HW) view with big blocks.
    y2_2d = y2.reshape(N * C, HW)
    scale_rows = jnp.tile(scale2, (N, 1))
    shift_rows = jnp.tile(shift2, (N, 1))
    rb = _pick_row_block(N * C, HW)
    out2d = _affine(y2_2d, scale_rows, shift_rows, rb=rb)
    return out2d.reshape(N, C, H, W)


trans_block_forward = jax.jit(_trans_block_forward_impl)


# ---------------------------------------------------------------------------
# Pure-JAX reference & params (for the self-check)
# ---------------------------------------------------------------------------
def _reference_forward(x_nchw, params, eps=1e-5):
    def conv(x, w, b):
        y = jax.lax.conv_general_dilated(
            x, w, window_strides=(1, 1), padding="SAME",
            dimension_numbers=("NCHW", "OIHW", "NCHW"))
        return y + b.reshape(1, -1, 1, 1)

    def bn(x, g, b):
        mean = jnp.mean(x, axis=(0, 2, 3), keepdims=True)
        var = jnp.mean((x - mean) ** 2, axis=(0, 2, 3), keepdims=True)
        return (x - mean) * jax.lax.rsqrt(var + eps) * g.reshape(1, -1, 1, 1) \
            + b.reshape(1, -1, 1, 1)

    y = conv(x_nchw, params["w1"], params["b1"])
    y = bn(y, params["bn1_w"], params["bn1_b"])
    y = jnp.maximum(y, 0.0)
    y = conv(y, params["w2"], params["b2"])
    y = bn(y, params["bn2_w"], params["bn2_b"])
    return y


def init_params(key, size):
    k1, k2, k3, k4 = jax.random.split(key, 4)
    fan_in = size * 3 * 3
    bound = 1.0 / (fan_in ** 0.5)
    return {
        "w1": jax.random.uniform(k1, (size, size, 3, 3), jnp.float32, -bound, bound),
        "b1": jax.random.uniform(k2, (size,), jnp.float32, -bound, bound),
        "w2": jax.random.uniform(k3, (size, size, 3, 3), jnp.float32, -bound, bound),
        "b2": jax.random.uniform(k4, (size,), jnp.float32, -bound, bound),
        "bn1_w": jnp.ones((size,), jnp.float32),
        "bn1_b": jnp.zeros((size,), jnp.float32),
        "bn2_w": jnp.ones((size,), jnp.float32),
        "bn2_b": jnp.zeros((size,), jnp.float32),
    }


if __name__ == "__main__":
    N, C, H, W = 2, 4, 16, 16  # TransBlock(size=4) on a small batch

    key = jax.random.PRNGKey(0)
    kx, kp = jax.random.split(key)
    x = jax.random.normal(kx, (N, C, H, W), jnp.float32)
    params = init_params(kp, C)

    out = trans_block_forward(x, params)
    out = jax.block_until_ready(out)

    ref = _reference_forward(x, params)
    assert out.shape == (N, C, H, W)
    max_err = float(jnp.max(jnp.abs(out - ref)))
    assert jnp.allclose(out, ref, atol=1e-4, rtol=1e-4), max_err

    print("KERNEL_OK")
</pallas_src>

<mosaic_0001>
module attributes {stable_mosaic.version = 11 : i64} {
  func.func @_conv_bn_stage_kernel(%arg0: i32, %arg1: memref<2x4x256xf32, #tpu.memory_space<vmem>>, %arg2: memref<4x1xf32, #tpu.memory_space<vmem>>, %arg3: memref<4x1xf32, #tpu.memory_space<vmem>>, %arg4: memref<9x4x4xf32, #tpu.memory_space<vmem>>, %arg5: memref<4x1xf32, #tpu.memory_space<vmem>>, %arg6: memref<2x256xf32, #tpu.memory_space<vmem>>, %arg7: memref<2x4x256xf32, #tpu.memory_space<vmem>>, %arg8: memref<1x4x2xf32, #tpu.memory_space<vmem>>, %arg9: memref<2x4x290xf32, #tpu.memory_space<vmem>>) attributes {dimension_semantics = [#tpu.dimension_semantics<parallel>], iteration_bounds = array<i64: 1>, scalar_prefetch = 0 : i64, scratch_operands = 1 : i64, tpu.core_type = #tpu.core_type<tc>, window_params = [{transform_indices = @transform_0, window_bounds = array<i64: 2, 4, 256>}, {pipeline_mode = #tpu.pipeline_mode<synchronous>, transform_indices = @transform_1, window_bounds = array<i64: 4, 1>}, {pipeline_mode = #tpu.pipeline_mode<synchronous>, transform_indices = @transform_2, window_bounds = array<i64: 4, 1>}, {pipeline_mode = #tpu.pipeline_mode<synchronous>, transform_indices = @transform_3, window_bounds = array<i64: 9, 4, 4>}, {pipeline_mode = #tpu.pipeline_mode<synchronous>, transform_indices = @transform_4, window_bounds = array<i64: 4, 1>}, {pipeline_mode = #tpu.pipeline_mode<synchronous>, transform_indices = @transform_5, window_bounds = array<i64: 2, 256>}, {transform_indices = @transform_6, window_bounds = array<i64: 2, 4, 256>}, {transform_indices = @transform_7, window_bounds = array<i64: 1, 4, 2>}]} {
    %c0 = arith.constant 0 : index
    %c0_0 = arith.constant 0 : index
    %0 = vector.load %arg6[%c0, %c0_0] : memref<2x256xf32, #tpu.memory_space<vmem>>, vector<1x256xf32>
    %c1 = arith.constant 1 : index
    %c0_1 = arith.constant 0 : index
    %1 = vector.load %arg6[%c1, %c0_1] : memref<2x256xf32, #tpu.memory_space<vmem>>, vector<1x256xf32>
    %cst = arith.constant 0.000000e+00 : f32
    %2 = vector.broadcast %cst : f32 to vector<4x1xf32>
    %cst_2 = arith.constant 0.000000e+00 : f32
    %3 = vector.broadcast %cst_2 : f32 to vector<4x1xf32>
    %c0_3 = arith.constant 0 : index
    %c0_4 = arith.constant 0 : index
    %c0_5 = arith.constant 0 : index
    %4 = vector.load %arg1[%c0_3, %c0_4, %c0_5] : memref<2x4x256xf32, #tpu.memory_space<vmem>>, vector<1x4x256xf32>
    %5 = vector.shape_cast %4 : vector<1x4x256xf32> to vector<4x256xf32>
    %c0_6 = arith.constant 0 : index
    %c0_7 = arith.constant 0 : index
    %6 = vector.load %arg2[%c0_6, %c0_7] : memref<4x1xf32, #tpu.memory_space<vmem>>, vector<4x1xf32>
    %7 = vector.broadcast %6 : vector<4x1xf32> to vector<4x256xf32>
    %8 = arith.mulf %5, %7 : vector<4x256xf32>
    %c0_8 = arith.constant 0 : index
    %c0_9 = arith.constant 0 : index
    %9 = vector.load %arg3[%c0_8, %c0_9] : memref<4x1xf32, #tpu.memory_space<vmem>>, vector<4x1xf32>
    %10 = vector.broadcast %9 : vector<4x1xf32> to vector<4x256xf32>
    %11 = arith.addf %8, %10 : vector<4x256xf32>
    %cst_10 = arith.constant 0.000000e+00 : f32
    %12 = vector.broadcast %cst_10 : f32 to vector<4x256xf32>
    %13 = arith.maximumf %11, %12 : vector<4x256xf32>
    %cst_11 = arith.constant 0.000000e+00 : f32
    %14 = vector.broadcast %cst_11 : f32 to vector<4x17xf32>
    %c0_12 = arith.constant 0 : index
    %c0_13 = arith.constant 0 : index
    %c0_14 = arith.constant 0 : index
    %15 = vector.load %arg9[%c0_12, %c0_13, %c0_14] : memref<2x4x290xf32, #tpu.memory_space<vmem>>, vector<1x4x17xf32>
    %16 = vector.shape_cast %15 : vector<1x4x17xf32> to vector<4x17xf32>
    %17 = vector.shape_cast %14 : vector<4x17xf32> to vector<1x4x17xf32>
    tpu.vector_store %arg9[%c0_12, %c0_13, %c0_14], %17 {strides = array<i32>} : memref<2x4x290xf32, #tpu.memory_space<vmem>>, vector<1x4x17xf32>,
    %cst_15 = arith.constant 0.000000e+00 : f32
    %18 = vector.broadcast %cst_15 : f32 to vector<4x17xf32>
    %c0_16 = arith.constant 0 : index
    %c0_17 = arith.constant 0 : index
    %c273 = arith.constant 273 : index
    %19 = vector.load %arg9[%c0_16, %c0_17, %c273] : memref<2x4x290xf32, #tpu.memory_space<vmem>>, vector<1x4x17xf32>
    %20 = vector.shape_cast %19 : vector<1x4x17xf32> to vector<4x17xf32>
    %21 = vector.shape_cast %18 : vector<4x17xf32> to vector<1x4x17xf32>
    tpu.vector_store %arg9[%c0_16, %c0_17, %c273], %21 {strides = array<i32>} : memref<2x4x290xf32, #tpu.memory_space<vmem>>, vector<1x4x17xf32>,
    %c0_18 = arith.constant 0 : index
    %c0_19 = arith.constant 0 : index
    %c17 = arith.constant 17 : index
    %22 = vector.load %arg9[%c0_18, %c0_19, %c17] : memref<2x4x290xf32, #tpu.memory_space<vmem>>, vector<1x4x256xf32>
    %23 = vector.shape_cast %22 : vector<1x4x256xf32> to vector<4x256xf32>
    %24 = vector.shape_cast %13 : vector<4x256xf32> to vector<1x4x256xf32>
    tpu.vector_store %arg9[%c0_18, %c0_19, %c17], %24 {strides = array<i32>} : memref<2x4x290xf32, #tpu.memory_space<vmem>>, vector<1x4x256xf32>,
    %cst_20 = arith.constant 0.000000e+00 : f32
    %25 = vector.broadcast %cst_20 : f32 to vector<4x256xf32>
    %c0_21 = arith.constant 0 : index
    %c0_22 = arith.constant 0 : index
    %c0_23 = arith.constant 0 : index
    %26 = vector.load %arg9[%c0_21, %c0_22, %c0_23] : memref<2x4x290xf32, #tpu.memory_space<vmem>>, vector<1x4x256xf32>
    %27 = vector.shape_cast %26 : vector<1x4x256xf32> to vector<4x256xf32>
    %28 = vector.broadcast %0 : vector<1x256xf32> to vector<4x256xf32>
    %29 = arith.mulf %27, %28 : vector<4x256xf32>
    %c0_24 = arith.constant 0 : index
    %c0_25 = arith.constant 0 : index
    %c0_26 = arith.constant 0 : index
    %30 = vector.load %arg4[%c0_24, %c0_25, %c0_26] : memref<9x4x4xf32, #tpu.memory_space<vmem>>, vector<1x4x4xf32>
    %31 = vector.shape_cast %30 : vector<1x4x4xf32> to vector<4x4xf32>
    %cst_27 = arith.constant dense<0.000000e+00> : vector<4x256xf32>
    %32 = tpu.matmul %31, %29, %cst_27 {dimension_numbers = #tpu.dot_dimension_numbers<[1], [0], [0], [1], [0, 0, 1, 1], [], []>} : vector<4x4xf32>, vector<4x256xf32>, vector<4x256xf32> -> vector<4x256xf32>
    %33 = arith.addf %25, %32 : vector<4x256xf32>
    %c0_28 = arith.constant 0 : index
    %c0_29 = arith.constant 0 : index
    %c1_30 = arith.constant 1 : index
    %34 = vector.load %arg9[%c0_28, %c0_29, %c1_30] : memref<2x4x290xf32, #tpu.memory_space<vmem>>, vector<1x4x256xf32>
    %35 = vector.shape_cast %34 : vector<1x4x256xf32> to vector<4x256xf32>
    %c1_31 = arith.constant 1 : index
    %c0_32 = arith.constant 0 : index
    %c0_33 = arith.constant 0 : index
    %36 = vector.load %arg4[%c1_31, %c0_32, %c0_33] : memref<9x4x4xf32, #tpu.memory_space<vmem>>, vector<1x4x4xf32>
    %37 = vector.shape_cast %36 : vector<1x4x4xf32> to vector<4x4xf32>
    %cst_34 = arith.constant dense<0.000000e+00> : vector<4x256xf32>
    %38 = tpu.matmul %37, %35, %cst_34 {dimension_numbers = #tpu.dot_dimension_numbers<[1], [0], [0], [1], [0, 0, 1, 1], [], []>} : vector<4x4xf32>, vector<4x256xf32>, vector<4x256xf32> -> vector<4x256xf32>
    %39 = arith.addf %33, %38 : vector<4x256xf32>
    %c0_35 = arith.constant 0 : index
    %c0_36 = arith.constant 0 : index
    %c2 = arith.constant 2 : index
    %40 = vector.load %arg9[%c0_35, %c0_36, %c2] : memref<2x4x290xf32, #tpu.memory_space<vmem>>, vector<1x4x256xf32>
    %41 = vector.shape_cast %40 : vector<1x4x256xf32> to vector<4x256xf32>
    %42 = vector.broadcast %1 : vector<1x256xf32> to vector<4x256xf32>
    %43 = arith.mulf %41, %42 : vector<4x256xf32>
    %c2_37 = arith.constant 2 : index
    %c0_38 = arith.constant 0 : index
    %c0_39 = arith.constant 0 : index
    %44 = vector.load %arg4[%c2_37, %c0_38, %c0_39] : memref<9x4x4xf32, #tpu.memory_space<vmem>>, vector<1x4x4xf32>
    %45 = vector.shape_cast %44 : vector<1x4x4xf32> to vector<4x4xf32>
    %cst_40 = arith.constant dense<0.000000e+00> : vector<4x256xf32>
    %46 = tpu.matmul %45, %43, %cst_40 {dimension_numbers = #tpu.dot_dimension_numbers<[1], [0], [0], [1], [0, 0, 1, 1], [], []>} : vector<4x4xf32>, vector<4x256xf32>, vector<4x256xf32> -> vector<4x256xf32>
    %47 = arith.addf %39, %46 : vector<4x256xf32>
    %c0_41 = arith.constant 0 : index
    %c0_42 = arith.constant 0 : index
    %c16 = arith.constant 16 : index
    %48 = vector.load %arg9[%c0_41, %c0_42, %c16] : memref<2x4x290xf32, #tpu.memory_space<vmem>>, vector<1x4x256xf32>
    %49 = vector.shape_cast %48 : vector<1x4x256xf32> to vector<4x256xf32>
    %50 = vector.broadcast %0 : vector<1x256xf32> to vector<4x256xf32>
    %51 = arith.mulf %49, %50 : vector<4x256xf32>
    %c3 = arith.constant 3 : index
    %c0_43 = arith.constant 0 : index
    %c0_44 = arith.constant 0 : index
    %52 = vector.load %arg4[%c3, %c0_43, %c0_44] : memref<9x4x4xf32, #tpu.memory_space<vmem>>, vector<1x4x4xf32>
    %53 = vector.shape_cast %52 : vector<1x4x4xf32> to vector<4x4xf32>
    %cst_45 = arith.constant dense<0.000000e+00> : vector<4x256xf32>
    %54 = tpu.matmul %53, %51, %cst_45 {dimension_numbers = #tpu.dot_dimension_numbers<[1], [0], [0], [1], [0, 0, 1, 1], [], []>} : vector<4x4xf32>, vector<4x256xf32>, vector<4x256xf32> -> vector<4x256xf32>
    %55 = arith.addf %47, %54 : vector<4x256xf32>
    %c0_46 = arith.constant 0 : index
    %c0_47 = arith.constant 0 : index
    %c17_48 = arith.constant 17 : index
    %56 = vector.load %arg9[%c0_46, %c0_47, %c17_48] : memref<2x4x290xf32, #tpu.memory_space<vmem>>, vector<1x4x256xf32>
    %57 = vector.shape_cast %56 : vector<1x4x256xf32> to vector<4x256xf32>
    %c4 = arith.constant 4 : index
    %c0_49 = arith.constant 0 : index
    %c0_50 = arith.constant 0 : index
    %58 = vector.load %arg4[%c4, %c0_49, %c0_50] : memref<9x4x4xf32, #tpu.memory_space<vmem>>, vector<1x4x4xf32>
    %59 = vector.shape_cast %58 : vector<1x4x4xf32> to vector<4x4xf32>
    %cst_51 = arith.constant dense<0.000000e+00> : vector<4x256xf32>
    %60 = tpu.matmul %59, %57, %cst_51 {dimension_numbers = #tpu.dot_dimension_numbers<[1], [0], [0], [1], [0, 0, 1, 1], [], []>} : vector<4x4xf32>, vector<4x256xf32>, vector<4x256xf32> -> vector<4x256xf32>
    %61 = arith.addf %55, %60 : vector<4x256xf32>
    %c0_52 = arith.constant 0 : index
    %c0_53 = arith.constant 0 : index
    %c18 = arith.constant 18 : index
    %62 = vector.load %arg9[%c0_52, %c0_53, %c18] : memref<2x4x290xf32, #tpu.memory_space<vmem>>, vector<1x4x256xf32>
    %63 = vector.shape_cast %62 : vector<1x4x256xf32> to vector<4x256xf32>
    %64 = vector.broadcast %1 : vector<1x256xf32> to vector<4x256xf32>
    %65 = arith.mulf %63, %64 : vector<4x256xf32>
    %c5 = arith.constant 5 : index
    %c0_54 = arith.constant 0 : index
    %c0_55 = arith.constant 0 : index
    %66 = vector.load %arg4[%c5, %c0_54, %c0_55] : memref<9x4x4xf32, #tpu.memory_space<vmem>>, vector<1x4x4xf32>
    %67 = vector.shape_cast %66 : vector<1x4x4xf32> to vector<4x4xf32>
    %cst_56 = arith.constant dense<0.000000e+00> : vector<4x256xf32>
    %68 = tpu.matmul %67, %65, %cst_56 {dimension_numbers = #tpu.dot_dimension_numbers<[1], [0], [0], [1], [0, 0, 1, 1], [], []>} : vector<4x4xf32>, vector<4x256xf32>, vector<4x256xf32> -> vector<4x256xf32>
    %69 = arith.addf %61, %68 : vector<4x256xf32>
    %c0_57 = arith.constant 0 : index
    %c0_58 = arith.constant 0 : index
    %c32 = arith.constant 32 : index
    %70 = vector.load %arg9[%c0_57, %c0_58, %c32] : memref<2x4x290xf32, #tpu.memory_space<vmem>>, vector<1x4x256xf32>
    %71 = vector.shape_cast %70 : vector<1x4x256xf32> to vector<4x256xf32>
    %72 = vector.broadcast %0 : vector<1x256xf32> to vector<4x256xf32>
    %73 = arith.mulf %71, %72 : vector<4x256xf32>
    %c6 = arith.constant 6 : index
    %c0_59 = arith.constant 0 : index
    %c0_60 = arith.constant 0 : index
    %74 = vector.load %arg4[%c6, %c0_59, %c0_60] : memref<9x4x4xf32, #tpu.memory_space<vmem>>, vector<1x4x4xf32>
    %75 = vector.shape_cast %74 : vector<1x4x4xf32> to vector<4x4xf32>
    %cst_61 = arith.constant dense<0.000000e+00> : vector<4x256xf32>
    %76 = tpu.matmul %75, %73, %cst_61 {dimension_numbers = #tpu.dot_dimension_numbers<[1], [0], [0], [1], [0, 0, 1, 1], [], []>} : vector<4x4xf32>, vector<4x256xf32>, vector<4x256xf32> -> vector<4x256xf32>
    %77 = arith.addf %69, %76 : vector<4x256xf32>
    %c0_62 = arith.constant 0 : index
    %c0_63 = arith.constant 0 : index
    %c33 = arith.constant 33 : index
    %78 = vector.load %arg9[%c0_62, %c0_63, %c33] : memref<2x4x290xf32, #tpu.memory_space<vmem>>, vector<1x4x256xf32>
    %79 = vector.shape_cast %78 : vector<1x4x256xf32> to vector<4x256xf32>
    %c7 = arith.constant 7 : index
    %c0_64 = arith.constant 0 : index
    %c0_65 = arith.constant 0 : index
    %80 = vector.load %arg4[%c7, %c0_64, %c0_65] : memref<9x4x4xf32, #tpu.memory_space<vmem>>, vector<1x4x4xf32>
    %81 = vector.shape_cast %80 : vector<1x4x4xf32> to vector<4x4xf32>
    %cst_66 = arith.constant dense<0.000000e+00> : vector<4x256xf32>
    %82 = tpu.matmul %81, %79, %cst_66 {dimension_numbers = #tpu.dot_dimension_numbers<[1], [0], [0], [1], [0, 0, 1, 1], [], []>} : vector<4x4xf32>, vector<4x256xf32>, vector<4x256xf32> -> vector<4x256xf32>
    %83 = arith.addf %77, %82 : vector<4x256xf32>
    %c0_67 = arith.constant 0 : index
    %c0_68 = arith.constant 0 : index
    %c34 = arith.constant 34 : index
    %84 = vector.load %arg9[%c0_67, %c0_68, %c34] : memref<2x4x290xf32, #tpu.memory_space<vmem>>, vector<1x4x256xf32>
    %85 = vector.shape_cast %84 : vector<1x4x256xf32> to vector<4x256xf32>
    %86 = vector.broadcast %1 : vector<1x256xf32> to vector<4x256xf32>
    %87 = arith.mulf %85, %86 : vector<4x256xf32>
    %c8 = arith.constant 8 : index
    %c0_69 = arith.constant 0 : index
    %c0_70 = arith.constant 0 : index
    %88 = vector.load %arg4[%c8, %c0_69, %c0_70] : memref<9x4x4xf32, #tpu.memory_space<vmem>>, vector<1x4x4xf32>
    %89 = vector.shape_cast %88 : vector<1x4x4xf32> to vector<4x4xf32>
    %cst_71 = arith.constant dense<0.000000e+00> : vector<4x256xf32>
    %90 = tpu.matmul %89, %87, %cst_71 {dimension_numbers = #tpu.dot_dimension_numbers<[1], [0], [0], [1], [0, 0, 1, 1], [], []>} : vector<4x4xf32>, vector<4x256xf32>, vector<4x256xf32> -> vector<4x256xf32>
    %91 = arith.addf %83, %90 : vector<4x256xf32>
    %c0_72 = arith.constant 0 : index
    %c0_73 = arith.constant 0 : index
    %92 = vector.load %arg5[%c0_72, %c0_73] : memref<4x1xf32, #tpu.memory_space<vmem>>, vector<4x1xf32>
    %93 = vector.broadcast %92 : vector<4x1xf32> to vector<4x256xf32>
    %94 = arith.addf %91, %93 : vector<4x256xf32>
    %c0_74 = arith.constant 0 : index
    %c0_75 = arith.constant 0 : index
    %c0_76 = arith.constant 0 : index
    %95 = vector.load %arg7[%c0_74, %c0_75, %c0_76] : memref<2x4x256xf32, #tpu.memory_space<vmem>>, vector<1x4x256xf32>
    %96 = vector.shape_cast %95 : vector<1x4x256xf32> to vector<4x256xf32>
    %97 = vector.shape_cast %94 : vector<4x256xf32> to vector<1x4x256xf32>
    tpu.vector_store %arg7[%c0_74, %c0_75, %c0_76], %97 {strides = array<i32>} : memref<2x4x256xf32, #tpu.memory_space<vmem>>, vector<1x4x256xf32>,
    %cst_77 = arith.constant dense<0.000000e+00> : vector<4xf32>
    %98 = vector.multi_reduction <add>, %94, %cst_77 [1] : vector<4x256xf32> to vector<4xf32>
    %99 = vector.shape_cast %98 : vector<4xf32> to vector<4x1xf32>
    %100 = arith.addf %2, %99 : vector<4x1xf32>
    %101 = arith.mulf %94, %94 : vector<4x256xf32>
    %cst_78 = arith.constant dense<0.000000e+00> : vector<4xf32>
    %102 = vector.multi_reduction <add>, %101, %cst_78 [1] : vector<4x256xf32> to vector<4xf32>
    %103 = vector.shape_cast %102 : vector<4xf32> to vector<4x1xf32>
    %104 = arith.addf %3, %103 : vector<4x1xf32>
    %c1_79 = arith.constant 1 : index
    %c0_80 = arith.constant 0 : index
    %c0_81 = arith.constant 0 : index
    %105 = vector.load %arg1[%c1_79, %c0_80, %c0_81] : memref<2x4x256xf32, #tpu.memory_space<vmem>>, vector<1x4x256xf32>
    %106 = vector.shape_cast %105 : vector<1x4x256xf32> to vector<4x256xf32>
    %c0_82 = arith.constant 0 : index
    %c0_83 = arith.constant 0 : index
    %107 = vector.load %arg2[%c0_82, %c0_83] : memref<4x1xf32, #tpu.memory_space<vmem>>, vector<4x1xf32>
    %108 = vector.broadcast %107 : vector<4x1xf32> to vector<4x256xf32>
    %109 = arith.mulf %106, %108 : vector<4x256xf32>
    %c0_84 = arith.constant 0 : index
    %c0_85 = arith.constant 0 : index
    %110 = vector.load %arg3[%c0_84, %c0_85] : memref<4x1xf32, #tpu.memory_space<vmem>>, vector<4x1xf32>
    %111 = vector.broadcast %110 : vector<4x1xf32> to vector<4x256xf32>
    %112 = arith.addf %109, %111 : vector<4x256xf32>
    %cst_86 = arith.constant 0.000000e+00 : f32
    %113 = vector.broadcast %cst_86 : f32 to vector<4x256xf32>
    %114 = arith.maximumf %112, %113 : vector<4x256xf32>
    %cst_87 = arith.constant 0.000000e+00 : f32
    %115 = vector.broadcast %cst_87 : f32 to vector<4x17xf32>
    %c1_88 = arith.constant 1 : index
    %c0_89 = arith.constant 0 : index
    %c0_90 = arith.constant 0 : index
    %116 = vector.load %arg9[%c1_88, %c0_89, %c0_90] : memref<2x4x290xf32, #tpu.memory_space<vmem>>, vector<1x4x17xf32>
    %117 = vector.shape_cast %116 : vector<1x4x17xf32> to vector<4x17xf32>
    %118 = vector.shape_cast %115 : vector<4x17xf32> to vector<1x4x17xf32>
    tpu.vector_store %arg9[%c1_88, %c0_89, %c0_90], %118 {strides = array<i32>} : memref<2x4x290xf32, #tpu.memory_space<vmem>>, vector<1x4x17xf32>,
    %cst_91 = arith.constant 0.000000e+00 : f32
    %119 = vector.broadcast %cst_91 : f32 to vector<4x17xf32>
    %c1_92 = arith.constant 1 : index
    %c0_93 = arith.constant 0 : index
    %c273_94 = arith.constant 273 : index
    %120 = vector.load %arg9[%c1_92, %c0_93, %c273_94] : memref<2x4x290xf32, #tpu.memory_space<vmem>>, vector<1x4x17xf32>
    %121 = vector.shape_cast %120 : vector<1x4x17xf32> to vector<4x17xf32>
    %122 = vector.shape_cast %119 : vector<4x17xf32> to vector<1x4x17xf32>
    tpu.vector_store %arg9[%c1_92, %c0_93, %c273_94], %122 {strides = array<i32>} : memref<2x4x290xf32, #tpu.memory_space<vmem>>, vector<1x4x17xf32>,
    %c1_95 = arith.constant 1 : index
    %c0_96 = arith.constant 0 : index
    %c17_97 = arith.constant 17 : index
    %123 = vector.load %arg9[%c1_95, %c0_96, %c17_97] : memref<2x4x290xf32, #tpu.memory_space<vmem>>, vector<1x4x256xf32>
    %124 = vector.shape_cast %123 : vector<1x4x256xf32> to vector<4x256xf32>
    %125 = vector.shape_cast %114 : vector<4x256xf32> to vector<1x4x256xf32>
    tpu.vector_store %arg9[%c1_95, %c0_96, %c17_97], %125 {strides = array<i32>} : memref<2x4x290xf32, #tpu.memory_space<vmem>>, vector<1x4x256xf32>,
    %cst_98 = arith.constant 0.000000e+00 : f32
    %126 = vector.broadcast %cst_98 : f32 to vector<4x256xf32>
    %c1_99 = arith.constant 1 : index
    %c0_100 = arith.constant 0 : index
    %c0_101 = arith.constant 0 : index
    %127 = vector.load %arg9[%c1_99, %c0_100, %c0_101] : memref<2x4x290xf32, #tpu.memory_space<vmem>>, vector<1x4x256xf32>
    %128 = vector.shape_cast %127 : vector<1x4x256xf32> to vector<4x256xf32>
    %129 = vector.broadcast %0 : vector<1x256xf32> to vector<4x256xf32>
    %130 = arith.mulf %128, %129 : vector<4x256xf32>
    %c0_102 = arith.constant 0 : index
    %c0_103 = arith.constant 0 : index
    %c0_104 = arith.constant 0 : index
    %131 = vector.load %arg4[%c0_102, %c0_103, %c0_104] : memref<9x4x4xf32, #tpu.memory_space<vmem>>, vector<1x4x4xf32>
    %132 = vector.shape_cast %131 : vector<1x4x4xf32> to vector<4x4xf32>
    %cst_105 = arith.constant dense<0.000000e+00> : vector<4x256xf32>
    %133 = tpu.matmul %132, %130, %cst_105 {dimension_numbers = #tpu.dot_dimension_numbers<[1], [0], [0], [1], [0, 0, 1, 1], [], []>} : vector<4x4xf32>, vector<4x256xf32>, vector<4x256xf32> -> vector<4x256xf32>
    %134 = arith.addf %126, %133 : vector<4x256xf32>
    %c1_106 = arith.constant 1 : index
    %c0_107 = arith.constant 0 : index
    %c1_108 = arith.constant 1 : index
    %135 = vector.load %arg9[%c1_106, %c0_107, %c1_108] : memref<2x4x290xf32, #tpu.memory_space<vmem>>, vector<1x4x256xf32>
    %136 = vector.shape_cast %135 : vector<1x4x256xf32> to vector<4x256xf32>
    %c1_109 = arith.constant 1 : index
    %c0_110 = arith.constant 0 : index
    %c0_111 = arith.constant 0 : index
    %137 = vector.load %arg4[%c1_109, %c0_110, %c0_111] : memref<9x4x4xf32, #tpu.memory_space<vmem>>, vector<1x4x4xf32>
    %138 = vector.shape_cast %137 : vector<1x4x4xf32> to vector<4x4xf32>
    %cst_112 = arith.constant dense<0.000000e+00> : vector<4x256xf32>
    %139 = tpu.matmul %138, %136, %cst_112 {dimension_numbers = #tpu.dot_dimension_numbers<[1], [0], [0], [1], [0, 0, 1, 1], [], []>} : vector<4x4xf32>, vector<4x256xf32>, vector<4x256xf32> -> vector<4x256xf32>
    %140 = arith.addf %134, %139 : vector<4x256xf32>
    %c1_113 = arith.constant 1 : index
    %c0_114 = arith.constant 0 : index
    %c2_115 = arith.constant 2 : index
    %141 = vector.load %arg9[%c1_113, %c0_114, %c2_115] : memref<2x4x290xf32, #tpu.memory_space<vmem>>, vector<1x4x256xf32>
    %142 = vector.shape_cast %141 : vector<1x4x256xf32> to vector<4x256xf32>
    %143 = vector.broadcast %1 : vector<1x256xf32> to vector<4x256xf32>
    %144 = arith.mulf %142, %143 : vector<4x256xf32>
    %c2_116 = arith.constant 2 : index
    %c0_117 = arith.constant 0 : index
    %c0_118 = arith.constant 0 : index
    %145 = vector.load %arg4[%c2_116, %c0_117, %c0_118] : memref<9x4x4xf32, #tpu.memory_space<vmem>>, vector<1x4x4xf32>
    %146 = vector.shape_cast %145 : vector<1x4x4xf32> to vector<4x4xf32>
    %cst_119 = arith.constant dense<0.000000e+00> : vector<4x256xf32>
    %147 = tpu.matmul %146, %144, %cst_119 {dimension_numbers = #tpu.dot_dimension_numbers<[1], [0], [0], [1], [0, 0, 1, 1], [], []>} : vector<4x4xf32>, vector<4x256xf32>, vector<4x256xf32> -> vector<4x256xf32>
    %148 = arith.addf %140, %147 : vector<4x256xf32>
    %c1_120 = arith.constant 1 : index
    %c0_121 = arith.constant 0 : index
    %c16_122 = arith.constant 16 : index
    %149 = vector.load %arg9[%c1_120, %c0_121, %c16_122] : memref<2x4x290xf32, #tpu.memory_space<vmem>>, vector<1x4x256xf32>
    %150 = vector.shape_cast %149 : vector<1x4x256xf32> to vector<4x256xf32>
    %151 = vector.broadcast %0 : vector<1x256xf32> to vector<4x256xf32>
    %152 = arith.mulf %150, %151 : vector<4x256xf32>
    %c3_123 = arith.constant 3 : index
    %c0_124 = arith.constant 0 : index
    %c0_125 = arith.constant 0 : index
    %153 = vector.load %arg4[%c3_123, %c0_124, %c0_125] : memref<9x4x4xf32, #tpu.memory_space<vmem>>, vector<1x4x4xf32>
    %154 = vector.shape_cast %153 : vector<1x4x4xf32> to vector<4x4xf32>
    %cst_126 = arith.constant dense<0.000000e+00> : vector<4x256xf32>
    %155 = tpu.matmul %154, %152, %cst_126 {dimension_numbers = #tpu.dot_dimension_numbers<[1], [0], [0], [1], [0, 0, 1, 1], [], []>} : vector<4x4xf32>, vector<4x256xf32>, vector<4x256xf32> -> vector<4x256xf32>
    %156 = arith.addf %148, %155 : vector<4x256xf32>
    %c1_127 = arith.constant 1 : index
    %c0_128 = arith.constant 0 : index
    %c17_129 = arith.constant 17 : index
    %157 = vector.load %arg9[%c1_127, %c0_128, %c17_129] : memref<2x4x290xf32, #tpu.memory_space<vmem>>, vector<1x4x256xf32>
    %158 = vector.shape_cast %157 : vector<1x4x256xf32> to vector<4x256xf32>
    %c4_130 = arith.constant 4 : index
    %c0_131 = arith.constant 0 : index
    %c0_132 = arith.constant 0 : index
    %159 = vector.load %arg4[%c4_130, %c0_131, %c0_132] : memref<9x4x4xf32, #tpu.memory_space<vmem>>, vector<1x4x4xf32>
    %160 = vector.shape_cast %159 : vector<1x4x4xf32> to vector<4x4xf32>
    %cst_133 = arith.constant dense<0.000000e+00> : vector<4x256xf32>
    %161 = tpu.matmul %160, %158, %cst_133 {dimension_numbers = #tpu.dot_dimension_numbers<[1], [0], [0], [1], [0, 0, 1, 1], [], []>} : vector<4x4xf32>, vector<4x256xf32>, vector<4x256xf32> -> vector<4x256xf32>
    %162 = arith.addf %156, %161 : vector<4x256xf32>
    %c1_134 = arith.constant 1 : index
    %c0_135 = arith.constant 0 : index
    %c18_136 = arith.constant 18 : index
    %163 = vector.load %arg9[%c1_134, %c0_135, %c18_136] : memref<2x4x290xf32, #tpu.memory_space<vmem>>, vector<1x4x256xf32>
    %164 = vector.shape_cast %163 : vector<1x4x256xf32> to vector<4x256xf32>
    %165 = vector.broadcast %1 : vector<1x256xf32> to vector<4x256xf32>
    %166 = arith.mulf %164, %165 : vector<4x256xf32>
    %c5_137 = arith.constant 5 : index
    %c0_138 = arith.constant 0 : index
    %c0_139 = arith.constant 0 : index
    %167 = vector.load %arg4[%c5_137, %c0_138, %c0_139] : memref<9x4x4xf32, #tpu.memory_space<vmem>>, vector<1x4x4xf32>
    %168 = vector.shape_cast %167 : vector<1x4x4xf32> to vector<4x4xf32>
    %cst_140 = arith.constant dense<0.000000e+00> : vector<4x256xf32>
    %169 = tpu.matmul %168, %166, %cst_140 {dimension_numbers = #tpu.dot_dimension_numbers<[1], [0], [0], [1], [0, 0, 1, 1], [], []>} : vector<4x4xf32>, vector<4x256xf32>, vector<4x256xf32> -> vector<4x256xf32>
    %170 = arith.addf %162, %169 : vector<4x256xf32>
    %c1_141 = arith.constant 1 : index
    %c0_142 = arith.constant 0 : index
    %c32_143 = arith.constant 32 : index
    %171 = vector.load %arg9[%c1_141, %c0_142, %c32_143] : memref<2x4x290xf32, #tpu.memory_space<vmem>>, vector<1x4x256xf32>
    %172 = vector.shape_cast %171 : vector<1x4x256xf32> to vector<4x256xf32>
    %173 = vector.broadcast %0 : vector<1x256xf32> to vector<4x256xf32>
    %174 = arith.mulf %172, %173 : vector<4x256xf32>
    %c6_144 = arith.constant 6 : index
    %c0_145 = arith.constant 0 : index
    %c0_146 = arith.constant 0 : index
    %175 = vector.load %arg4[%c6_144, %c0_145, %c0_146] : memref<9x4x4xf32, #tpu.memory_space<vmem>>, vector<1x4x4xf32>
    %176 = vector.shape_cast %175 : vector<1x4x4xf32> to vector<4x4xf32>
    %cst_147 = arith.constant dense<0.000000e+00> : vector<4x256xf32>
    %177 = tpu.matmul %176, %174, %cst_147 {dimension_numbers = #tpu.dot_dimension_numbers<[1], [0], [0], [1], [0, 0, 1, 1], [], []>} : vector<4x4xf32>, vector<4x256xf32>, vector<4x256xf32> -> vector<4x256xf32>
    %178 = arith.addf %170, %177 : vector<4x256xf32>
    %c1_148 = arith.constant 1 : index
    %c0_149 = arith.constant 0 : index
    %c33_150 = arith.constant 33 : index
    %179 = vector.load %arg9[%c1_148, %c0_149, %c33_150] : memref<2x4x290xf32, #tpu.memory_space<vmem>>, vector<1x4x256xf32>
    %180 = vector.shape_cast %179 : vector<1x4x256xf32> to vector<4x256xf32>
    %c7_151 = arith.constant 7 : index
    %c0_152 = arith.constant 0 : index
    %c0_153 = arith.constant 0 : index
    %181 = vector.load %arg4[%c7_151, %c0_152, %c0_153] : memref<9x4x4xf32, #tpu.memory_space<vmem>>, vector<1x4x4xf32>
    %182 = vector.shape_cast %181 : vector<1x4x4xf32> to vector<4x4xf32>
    %cst_154 = arith.constant dense<0.000000e+00> : vector<4x256xf32>
    %183 = tpu.matmul %182, %180, %cst_154 {dimension_numbers = #tpu.dot_dimension_numbers<[1], [0], [0], [1], [0, 0, 1, 1], [], []>} : vector<4x4xf32>, vector<4x256xf32>, vector<4x256xf32> -> vector<4x256xf32>
    %184 = arith.addf %178, %183 : vector<4x256xf32>
    %c1_155 = arith.constant 1 : index
    %c0_156 = arith.constant 0 : index
    %c34_157 = arith.constant 34 : index
    %185 = vector.load %arg9[%c1_155, %c0_156, %c34_157] : memref<2x4x290xf32, #tpu.memory_space<vmem>>, vector<1x4x256xf32>
    %186 = vector.shape_cast %185 : vector<1x4x256xf32> to vector<4x256xf32>
    %187 = vector.broadcast %1 : vector<1x256xf32> to vector<4x256xf32>
    %188 = arith.mulf %186, %187 : vector<4x256xf32>
    %c8_158 = arith.constant 8 : index
    %c0_159 = arith.constant 0 : index
    %c0_160 = arith.constant 0 : index
    %189 = vector.load %arg4[%c8_158, %c0_159, %c0_160] : memref<9x4x4xf32, #tpu.memory_space<vmem>>, vector<1x4x4xf32>
    %190 = vector.shape_cast %189 : vector<1x4x4xf32> to vector<4x4xf32>
    %cst_161 = arith.constant dense<0.000000e+00> : vector<4x256xf32>
    %191 = tpu.matmul %190, %188, %cst_161 {dimension_numbers = #tpu.dot_dimension_numbers<[1], [0], [0], [1], [0, 0, 1, 1], [], []>} : vector<4x4xf32>, vector<4x256xf32>, vector<4x256xf32> -> vector<4x256xf32>
    %192 = arith.addf %184, %191 : vector<4x256xf32>
    %c0_162 = arith.constant 0 : index
    %c0_163 = arith.constant 0 : index
    %193 = vector.load %arg5[%c0_162, %c0_163] : memref<4x1xf32, #tpu.memory_space<vmem>>, vector<4x1xf32>
    %194 = vector.broadcast %193 : vector<4x1xf32> to vector<4x256xf32>
    %195 = arith.addf %192, %194 : vector<4x256xf32>
    %c1_164 = arith.constant 1 : index
    %c0_165 = arith.constant 0 : index
    %c0_166 = arith.constant 0 : index
    %196 = vector.load %arg7[%c1_164, %c0_165, %c0_166] : memref<2x4x256xf32, #tpu.memory_space<vmem>>, vector<1x4x256xf32>
    %197 = vector.shape_cast %196 : vector<1x4x256xf32> to vector<4x256xf32>
    %198 = vector.shape_cast %195 : vector<4x256xf32> to vector<1x4x256xf32>
    tpu.vector_store %arg7[%c1_164, %c0_165, %c0_166], %198 {strides = array<i32>} : memref<2x4x256xf32, #tpu.memory_space<vmem>>, vector<1x4x256xf32>,
    %cst_167 = arith.constant dense<0.000000e+00> : vector<4xf32>
    %199 = vector.multi_reduction <add>, %195, %cst_167 [1] : vector<4x256xf32> to vector<4xf32>
    %200 = vector.shape_cast %199 : vector<4xf32> to vector<4x1xf32>
    %201 = arith.addf %100, %200 : vector<4x1xf32>
    %202 = arith.mulf %195, %195 : vector<4x256xf32>
    %cst_168 = arith.constant dense<0.000000e+00> : vector<4xf32>
    %203 = vector.multi_reduction <add>, %202, %cst_168 [1] : vector<4x256xf32> to vector<4xf32>
    %204 = vector.shape_cast %203 : vector<4xf32> to vector<4x1xf32>
    %205 = arith.addf %104, %204 : vector<4x1xf32>
    %c0_169 = arith.constant 0 : index
    %c0_170 = arith.constant 0 : index
    %c0_171 = arith.constant 0 : index
    %206 = vector.load %arg8[%c0_169, %c0_170, %c0_171] : memref<1x4x2xf32, #tpu.memory_space<vmem>>, vector<1x4x1xf32>
    %207 = vector.shape_cast %206 : vector<1x4x1xf32> to vector<4x1xf32>
    %208 = vector.shape_cast %201 : vector<4x1xf32> to vector<1x4x1xf32>
    tpu.vector_store %arg8[%c0_169, %c0_170, %c0_171], %208 {strides = array<i32>} : memref<1x4x2xf32, #tpu.memory_space<vmem>>, vector<1x4x1xf32>,
    %c0_172 = arith.constant 0 : index
    %c0_173 = arith.constant 0 : index
    %c1_174 = arith.constant 1 : index
    %209 = vector.load %arg8[%c0_172, %c0_173, %c1_174] : memref<1x4x2xf32, #tpu.memory_space<vmem>>, vector<1x4x1xf32>
    %210 = vector.shape_cast %209 : vector<1x4x1xf32> to vector<4x1xf32>
    %211 = vector.shape_cast %205 : vector<4x1xf32> to vector<1x4x1xf32>
    tpu.vector_store %arg8[%c0_172, %c0_173, %c1_174], %211 {strides = array<i32>} : memref<1x4x2xf32, #tpu.memory_space<vmem>>, vector<1x4x1xf32>,
    return
  }
  func.func @transform_0(%arg0: i32) -> (i32, i32, i32) {
    %c0_i32 = arith.constant 0 : i32
    %c0_i32_0 = arith.constant 0 : i32
    %c0_i32_1 = arith.constant 0 : i32
    return %arg0, %c0_i32, %c0_i32_0 : i32, i32, i32
  }
  func.func @transform_1(%arg0: i32) -> (i32, i32) {
    %c0_i32 = arith.constant 0 : i32
    %c0_i32_0 = arith.constant 0 : i32
    %c0_i32_1 = arith.constant 0 : i32
    return %c0_i32, %c0_i32_0 : i32, i32
  }
  func.func @transform_2(%arg0: i32) -> (i32, i32) {
    %c0_i32 = arith.constant 0 : i32
    %c0_i32_0 = arith.constant 0 : i32
    %c0_i32_1 = arith.constant 0 : i32
    return %c0_i32, %c0_i32_0 : i32, i32
  }
  func.func @transform_3(%arg0: i32) -> (i32, i32, i32) {
    %c0_i32 = arith.constant 0 : i32
    %c0_i32_0 = arith.constant 0 : i32
    %c0_i32_1 = arith.constant 0 : i32
    %c0_i32_2 = arith.constant 0 : i32
    return %c0_i32, %c0_i32_0, %c0_i32_1 : i32, i32, i32
  }
  func.func @transform_4(%arg0: i32) -> (i32, i32) {
    %c0_i32 = arith.constant 0 : i32
    %c0_i32_0 = arith.constant 0 : i32
    %c0_i32_1 = arith.constant 0 : i32
    return %c0_i32, %c0_i32_0 : i32, i32
  }
  func.func @transform_5(%arg0: i32) -> (i32, i32) {
    %c0_i32 = arith.constant 0 : i32
    %c0_i32_0 = arith.constant 0 : i32
    %c0_i32_1 = arith.constant 0 : i32
    return %c0_i32, %c0_i32_0 : i32, i32
  }
  func.func @transform_6(%arg0: i32) -> (i32, i32, i32) {
    %c0_i32 = arith.constant 0 : i32
    %c0_i32_0 = arith.constant 0 : i32
    %c0_i32_1 = arith.constant 0 : i32
    return %arg0, %c0_i32, %c0_i32_0 : i32, i32, i32
  }
  func.func @transform_7(%arg0: i32) -> (i32, i32, i32) {
    %c0_i32 = arith.constant 0 : i32
    %c0_i32_0 = arith.constant 0 : i32
    %c0_i32_1 = arith.constant 0 : i32
    return %arg0, %c0_i32, %c0_i32_0 : i32, i32, i32
  }
}

module attributes {stable_mosaic.version = 11 : i64} {
  func.func @_conv_bn_stage_kernel(%arg0: i32, %arg1: memref<2x4x256xf32, #tpu.memory_space<vmem>>, %arg2: memref<4x1xf32, #tpu.memory_space<vmem>>, %arg3: memref<4x1xf32, #tpu.memory_space<vmem>>, %arg4: memref<9x4x4xf32, #tpu.memory_space<vmem>>, %arg5: memref<4x1xf32, #tpu.memory_space<vmem>>, %arg6: memref<2x256xf32, #tpu.memory_space<vmem>>, %arg7: memref<2x4x256xf32, #tpu.memory_space<vmem>>, %arg8: memref<1x4x2xf32, #tpu.memory_space<vmem>>, %arg9: memref<2x4x290xf32, #tpu.memory_space<vmem>>) attributes {dimension_semantics = [#tpu.dimension_semantics<parallel>], iteration_bounds = array<i64: 1>, scalar_prefetch = 0 : i64, scratch_operands = 1 : i64, tpu.core_type = #tpu.core_type<tc>, window_params = [{transform_indices = @transform_0, window_bounds = array<i64: 2, 4, 256>}, {pipeline_mode = #tpu.pipeline_mode<synchronous>, transform_indices = @transform_1, window_bounds = array<i64: 4, 1>}, {pipeline_mode = #tpu.pipeline_mode<synchronous>, transform_indices = @transform_2, window_bounds = array<i64: 4, 1>}, {pipeline_mode = #tpu.pipeline_mode<synchronous>, transform_indices = @transform_3, window_bounds = array<i64: 9, 4, 4>}, {pipeline_mode = #tpu.pipeline_mode<synchronous>, transform_indices = @transform_4, window_bounds = array<i64: 4, 1>}, {pipeline_mode = #tpu.pipeline_mode<synchronous>, transform_indices = @transform_5, window_bounds = array<i64: 2, 256>}, {transform_indices = @transform_6, window_bounds = array<i64: 2, 4, 256>}, {transform_indices = @transform_7, window_bounds = array<i64: 1, 4, 2>}]} {
    %c0 = arith.constant 0 : index
    %c0_0 = arith.constant 0 : index
    %0 = vector.load %arg6[%c0, %c0_0] : memref<2x256xf32, #tpu.memory_space<vmem>>, vector<1x256xf32>
    %c1 = arith.constant 1 : index
    %c0_1 = arith.constant 0 : index
    %1 = vector.load %arg6[%c1, %c0_1] : memref<2x256xf32, #tpu.memory_space<vmem>>, vector<1x256xf32>
    %cst = arith.constant 0.000000e+00 : f32
    %2 = vector.broadcast %cst : f32 to vector<4x1xf32>
    %cst_2 = arith.constant 0.000000e+00 : f32
    %3 = vector.broadcast %cst_2 : f32 to vector<4x1xf32>
    %c0_3 = arith.constant 0 : index
    %c0_4 = arith.constant 0 : index
    %c0_5 = arith.constant 0 : index
    %4 = vector.load %arg1[%c0_3, %c0_4, %c0_5] : memref<2x4x256xf32, #tpu.memory_space<vmem>>, vector<1x4x256xf32>
    %5 = vector.shape_cast %4 : vector<1x4x256xf32> to vector<4x256xf32>
    %cst_6 = arith.constant 0.000000e+00 : f32
    %6 = vector.broadcast %cst_6 : f32 to vector<4x17xf32>
    %c0_7 = arith.constant 0 : index
    %c0_8 = arith.constant 0 : index
    %c0_9 = arith.constant 0 : index
    %7 = vector.load %arg9[%c0_7, %c0_8, %c0_9] : memref<2x4x290xf32, #tpu.memory_space<vmem>>, vector<1x4x17xf32>
    %8 = vector.shape_cast %7 : vector<1x4x17xf32> to vector<4x17xf32>
    %9 = vector.shape_cast %6 : vector<4x17xf32> to vector<1x4x17xf32>
    tpu.vector_store %arg9[%c0_7, %c0_8, %c0_9], %9 {strides = array<i32>} : memref<2x4x290xf32, #tpu.memory_space<vmem>>, vector<1x4x17xf32>,
    %cst_10 = arith.constant 0.000000e+00 : f32
    %10 = vector.broadcast %cst_10 : f32 to vector<4x17xf32>
    %c0_11 = arith.constant 0 : index
    %c0_12 = arith.constant 0 : index
    %c273 = arith.constant 273 : index
    %11 = vector.load %arg9[%c0_11, %c0_12, %c273] : memref<2x4x290xf32, #tpu.memory_space<vmem>>, vector<1x4x17xf32>
    %12 = vector.shape_cast %11 : vector<1x4x17xf32> to vector<4x17xf32>
    %13 = vector.shape_cast %10 : vector<4x17xf32> to vector<1x4x17xf32>
    tpu.vector_store %arg9[%c0_11, %c0_12, %c273], %13 {strides = array<i32>} : memref<2x4x290xf32, #tpu.memory_space<vmem>>, vector<1x4x17xf32>,
    %c0_13 = arith.constant 0 : index
    %c0_14 = arith.constant 0 : index
    %c17 = arith.constant 17 : index
    %14 = vector.load %arg9[%c0_13, %c0_14, %c17] : memref<2x4x290xf32, #tpu.memory_space<vmem>>, vector<1x4x256xf32>
    %15 = vector.shape_cast %14 : vector<1x4x256xf32> to vector<4x256xf32>
    %16 = vector.shape_cast %5 : vector<4x256xf32> to vector<1x4x256xf32>
    tpu.vector_store %arg9[%c0_13, %c0_14, %c17], %16 {strides = array<i32>} : memref<2x4x290xf32, #tpu.memory_space<vmem>>, vector<1x4x256xf32>,
    %cst_15 = arith.constant 0.000000e+00 : f32
    %17 = vector.broadcast %cst_15 : f32 to vector<4x256xf32>
    %c0_16 = arith.constant 0 : index
    %c0_17 = arith.constant 0 : index
    %c0_18 = arith.constant 0 : index
    %18 = vector.load %arg9[%c0_16, %c0_17, %c0_18] : memref<2x4x290xf32, #tpu.memory_space<vmem>>, vector<1x4x256xf32>
    %19 = vector.shape_cast %18 : vector<1x4x256xf32> to vector<4x256xf32>
    %20 = vector.broadcast %0 : vector<1x256xf32> to vector<4x256xf32>
    %21 = arith.mulf %19, %20 : vector<4x256xf32>
    %c0_19 = arith.constant 0 : index
    %c0_20 = arith.constant 0 : index
    %c0_21 = arith.constant 0 : index
    %22 = vector.load %arg4[%c0_19, %c0_20, %c0_21] : memref<9x4x4xf32, #tpu.memory_space<vmem>>, vector<1x4x4xf32>
    %23 = vector.shape_cast %22 : vector<1x4x4xf32> to vector<4x4xf32>
    %cst_22 = arith.constant dense<0.000000e+00> : vector<4x256xf32>
    %24 = tpu.matmul %23, %21, %cst_22 {dimension_numbers = #tpu.dot_dimension_numbers<[1], [0], [0], [1], [0, 0, 1, 1], [], []>} : vector<4x4xf32>, vector<4x256xf32>, vector<4x256xf32> -> vector<4x256xf32>
    %25 = arith.addf %17, %24 : vector<4x256xf32>
    %c0_23 = arith.constant 0 : index
    %c0_24 = arith.constant 0 : index
    %c1_25 = arith.constant 1 : index
    %26 = vector.load %arg9[%c0_23, %c0_24, %c1_25] : memref<2x4x290xf32, #tpu.memory_space<vmem>>, vector<1x4x256xf32>
    %27 = vector.shape_cast %26 : vector<1x4x256xf32> to vector<4x256xf32>
    %c1_26 = arith.constant 1 : index
    %c0_27 = arith.constant 0 : index
    %c0_28 = arith.constant 0 : index
    %28 = vector.load %arg4[%c1_26, %c0_27, %c0_28] : memref<9x4x4xf32, #tpu.memory_space<vmem>>, vector<1x4x4xf32>
    %29 = vector.shape_cast %28 : vector<1x4x4xf32> to vector<4x4xf32>
    %cst_29 = arith.constant dense<0.000000e+00> : vector<4x256xf32>
    %30 = tpu.matmul %29, %27, %cst_29 {dimension_numbers = #tpu.dot_dimension_numbers<[1], [0], [0], [1], [0, 0, 1, 1], [], []>} : vector<4x4xf32>, vector<4x256xf32>, vector<4x256xf32> -> vector<4x256xf32>
    %31 = arith.addf %25, %30 : vector<4x256xf32>
    %c0_30 = arith.constant 0 : index
    %c0_31 = arith.constant 0 : index
    %c2 = arith.constant 2 : index
    %32 = vector.load %arg9[%c0_30, %c0_31, %c2] : memref<2x4x290xf32, #tpu.memory_space<vmem>>, vector<1x4x256xf32>
    %33 = vector.shape_cast %32 : vector<1x4x256xf32> to vector<4x256xf32>
    %34 = vector.broadcast %1 : vector<1x256xf32> to vector<4x256xf32>
    %35 = arith.mulf %33, %34 : vector<4x256xf32>
    %c2_32 = arith.constant 2 : index
    %c0_33 = arith.constant 0 : index
    %c0_34 = arith.constant 0 : index
    %36 = vector.load %arg4[%c2_32, %c0_33, %c0_34] : memref<9x4x4xf32, #tpu.memory_space<vmem>>, vector<1x4x4xf32>
    %37 = vector.shape_cast %36 : vector<1x4x4xf32> to vector<4x4xf32>
    %cst_35 = arith.constant dense<0.000000e+00> : vector<4x256xf32>
    %38 = tpu.matmul %37, %35, %cst_35 {dimension_numbers = #tpu.dot_dimension_numbers<[1], [0], [0], [1], [0, 0, 1, 1], [], []>} : vector<4x4xf32>, vector<4x256xf32>, vector<4x256xf32> -> vector<4x256xf32>
    %39 = arith.addf %31, %38 : vector<4x256xf32>
    %c0_36 = arith.constant 0 : index
    %c0_37 = arith.constant 0 : index
    %c16 = arith.constant 16 : index
    %40 = vector.load %arg9[%c0_36, %c0_37, %c16] : memref<2x4x290xf32, #tpu.memory_space<vmem>>, vector<1x4x256xf32>
    %41 = vector.shape_cast %40 : vector<1x4x256xf32> to vector<4x256xf32>
    %42 = vector.broadcast %0 : vector<1x256xf32> to vector<4x256xf32>
    %43 = arith.mulf %41, %42 : vector<4x256xf32>
    %c3 = arith.constant 3 : index
    %c0_38 = arith.constant 0 : index
    %c0_39 = arith.constant 0 : index
    %44 = vector.load %arg4[%c3, %c0_38, %c0_39] : memref<9x4x4xf32, #tpu.memory_space<vmem>>, vector<1x4x4xf32>
    %45 = vector.shape_cast %44 : vector<1x4x4xf32> to vector<4x4xf32>
    %cst_40 = arith.constant dense<0.000000e+00> : vector<4x256xf32>
    %46 = tpu.matmul %45, %43, %cst_40 {dimension_numbers = #tpu.dot_dimension_numbers<[1], [0], [0], [1], [0, 0, 1, 1], [], []>} : vector<4x4xf32>, vector<4x256xf32>, vector<4x256xf32> -> vector<4x256xf32>
    %47 = arith.addf %39, %46 : vector<4x256xf32>
    %c0_41 = arith.constant 0 : index
    %c0_42 = arith.constant 0 : index
    %c17_43 = arith.constant 17 : index
    %48 = vector.load %arg9[%c0_41, %c0_42, %c17_43] : memref<2x4x290xf32, #tpu.memory_space<vmem>>, vector<1x4x256xf32>
    %49 = vector.shape_cast %48 : vector<1x4x256xf32> to vector<4x256xf32>
    %c4 = arith.constant 4 : index
    %c0_44 = arith.constant 0 : index
    %c0_45 = arith.constant 0 : index
    %50 = vector.load %arg4[%c4, %c0_44, %c0_45] : memref<9x4x4xf32, #tpu.memory_space<vmem>>, vector<1x4x4xf32>
    %51 = vector.shape_cast %50 : vector<1x4x4xf32> to vector<4x4xf32>
    %cst_46 = arith.constant dense<0.000000e+00> : vector<4x256xf32>
    %52 = tpu.matmul %51, %49, %cst_46 {dimension_numbers = #tpu.dot_dimension_numbers<[1], [0], [0], [1], [0, 0, 1, 1], [], []>} : vector<4x4xf32>, vector<4x256xf32>, vector<4x256xf32> -> vector<4x256xf32>
    %53 = arith.addf %47, %52 : vector<4x256xf32>
    %c0_47 = arith.constant 0 : index
    %c0_48 = arith.constant 0 : index
    %c18 = arith.constant 18 : index
    %54 = vector.load %arg9[%c0_47, %c0_48, %c18] : memref<2x4x290xf32, #tpu.memory_space<vmem>>, vector<1x4x256xf32>
    %55 = vector.shape_cast %54 : vector<1x4x256xf32> to vector<4x256xf32>
    %56 = vector.broadcast %1 : vector<1x256xf32> to vector<4x256xf32>
    %57 = arith.mulf %55, %56 : vector<4x256xf32>
    %c5 = arith.constant 5 : index
    %c0_49 = arith.constant 0 : index
    %c0_50 = arith.constant 0 : index
    %58 = vector.load %arg4[%c5, %c0_49, %c0_50] : memref<9x4x4xf32, #tpu.memory_space<vmem>>, vector<1x4x4xf32>
    %59 = vector.shape_cast %58 : vector<1x4x4xf32> to vector<4x4xf32>
    %cst_51 = arith.constant dense<0.000000e+00> : vector<4x256xf32>
    %60 = tpu.matmul %59, %57, %cst_51 {dimension_numbers = #tpu.dot_dimension_numbers<[1], [0], [0], [1], [0, 0, 1, 1], [], []>} : vector<4x4xf32>, vector<4x256xf32>, vector<4x256xf32> -> vector<4x256xf32>
    %61 = arith.addf %53, %60 : vector<4x256xf32>
    %c0_52 = arith.constant 0 : index
    %c0_53 = arith.constant 0 : index
    %c32 = arith.constant 32 : index
    %62 = vector.load %arg9[%c0_52, %c0_53, %c32] : memref<2x4x290xf32, #tpu.memory_space<vmem>>, vector<1x4x256xf32>
    %63 = vector.shape_cast %62 : vector<1x4x256xf32> to vector<4x256xf32>
    %64 = vector.broadcast %0 : vector<1x256xf32> to vector<4x256xf32>
    %65 = arith.mulf %63, %64 : vector<4x256xf32>
    %c6 = arith.constant 6 : index
    %c0_54 = arith.constant 0 : index
    %c0_55 = arith.constant 0 : index
    %66 = vector.load %arg4[%c6, %c0_54, %c0_55] : memref<9x4x4xf32, #tpu.memory_space<vmem>>, vector<1x4x4xf32>
    %67 = vector.shape_cast %66 : vector<1x4x4xf32> to vector<4x4xf32>
    %cst_56 = arith.constant dense<0.000000e+00> : vector<4x256xf32>
    %68 = tpu.matmul %67, %65, %cst_56 {dimension_numbers = #tpu.dot_dimension_numbers<[1], [0], [0], [1], [0, 0, 1, 1], [], []>} : vector<4x4xf32>, vector<4x256xf32>, vector<4x256xf32> -> vector<4x256xf32>
    %69 = arith.addf %61, %68 : vector<4x256xf32>
    %c0_57 = arith.constant 0 : index
    %c0_58 = arith.constant 0 : index
    %c33 = arith.constant 33 : index
    %70 = vector.load %arg9[%c0_57, %c0_58, %c33] : memref<2x4x290xf32, #tpu.memory_space<vmem>>, vector<1x4x256xf32>
    %71 = vector.shape_cast %70 : vector<1x4x256xf32> to vector<4x256xf32>
    %c7 = arith.constant 7 : index
    %c0_59 = arith.constant 0 : index
    %c0_60 = arith.constant 0 : index
    %72 = vector.load %arg4[%c7, %c0_59, %c0_60] : memref<9x4x4xf32, #tpu.memory_space<vmem>>, vector<1x4x4xf32>
    %73 = vector.shape_cast %72 : vector<1x4x4xf32> to vector<4x4xf32>
    %cst_61 = arith.constant dense<0.000000e+00> : vector<4x256xf32>
    %74 = tpu.matmul %73, %71, %cst_61 {dimension_numbers = #tpu.dot_dimension_numbers<[1], [0], [0], [1], [0, 0, 1, 1], [], []>} : vector<4x4xf32>, vector<4x256xf32>, vector<4x256xf32> -> vector<4x256xf32>
    %75 = arith.addf %69, %74 : vector<4x256xf32>
    %c0_62 = arith.constant 0 : index
    %c0_63 = arith.constant 0 : index
    %c34 = arith.constant 34 : index
    %76 = vector.load %arg9[%c0_62, %c0_63, %c34] : memref<2x4x290xf32, #tpu.memory_space<vmem>>, vector<1x4x256xf32>
    %77 = vector.shape_cast %76 : vector<1x4x256xf32> to vector<4x256xf32>
    %78 = vector.broadcast %1 : vector<1x256xf32> to vector<4x256xf32>
    %79 = arith.mulf %77, %78 : vector<4x256xf32>
    %c8 = arith.constant 8 : index
    %c0_64 = arith.constant 0 : index
    %c0_65 = arith.constant 0 : index
    %80 = vector.load %arg4[%c8, %c0_64, %c0_65] : memref<9x4x4xf32, #tpu.memory_space<vmem>>, vector<1x4x4xf32>
    %81 = vector.shape_cast %80 : vector<1x4x4xf32> to vector<4x4xf32>
    %cst_66 = arith.constant dense<0.000000e+00> : vector<4x256xf32>
    %82 = tpu.matmul %81, %79, %cst_66 {dimension_numbers = #tpu.dot_dimension_numbers<[1], [0], [0], [1], [0, 0, 1, 1], [], []>} : vector<4x4xf32>, vector<4x256xf32>, vector<4x256xf32> -> vector<4x256xf32>
    %83 = arith.addf %75, %82 : vector<4x256xf32>
    %c0_67 = arith.constant 0 : index
    %c0_68 = arith.constant 0 : index
    %84 = vector.load %arg5[%c0_67, %c0_68] : memref<4x1xf32, #tpu.memory_space<vmem>>, vector<4x1xf32>
    %85 = vector.broadcast %84 : vector<4x1xf32> to vector<4x256xf32>
    %86 = arith.addf %83, %85 : vector<4x256xf32>
    %c0_69 = arith.constant 0 : index
    %c0_70 = arith.constant 0 : index
    %c0_71 = arith.constant 0 : index
    %87 = vector.load %arg7[%c0_69, %c0_70, %c0_71] : memref<2x4x256xf32, #tpu.memory_space<vmem>>, vector<1x4x256xf32>
    %88 = vector.shape_cast %87 : vector<1x4x256xf32> to vector<4x256xf32>
    %89 = vector.shape_cast %86 : vector<4x256xf32> to vector<1x4x256xf32>
    tpu.vector_store %arg7[%c0_69, %c0_70, %c0_71], %89 {strides = array<i32>} : memref<2x4x256xf32, #tpu.memory_space<vmem>>, vector<1x4x256xf32>,
    %cst_72 = arith.constant dense<0.000000e+00> : vector<4xf32>
    %90 = vector.multi_reduction <add>, %86, %cst_72 [1] : vector<4x256xf32> to vector<4xf32>
    %91 = vector.shape_cast %90 : vector<4xf32> to vector<4x1xf32>
    %92 = arith.addf %2, %91 : vector<4x1xf32>
    %93 = arith.mulf %86, %86 : vector<4x256xf32>
    %cst_73 = arith.constant dense<0.000000e+00> : vector<4xf32>
    %94 = vector.multi_reduction <add>, %93, %cst_73 [1] : vector<4x256xf32> to vector<4xf32>
    %95 = vector.shape_cast %94 : vector<4xf32> to vector<4x1xf32>
    %96 = arith.addf %3, %95 : vector<4x1xf32>
    %c1_74 = arith.constant 1 : index
    %c0_75 = arith.constant 0 : index
    %c0_76 = arith.constant 0 : index
    %97 = vector.load %arg1[%c1_74, %c0_75, %c0_76] : memref<2x4x256xf32, #tpu.memory_space<vmem>>, vector<1x4x256xf32>
    %98 = vector.shape_cast %97 : vector<1x4x256xf32> to vector<4x256xf32>
    %cst_77 = arith.constant 0.000000e+00 : f32
    %99 = vector.broadcast %cst_77 : f32 to vector<4x17xf32>
    %c1_78 = arith.constant 1 : index
    %c0_79 = arith.constant 0 : index
    %c0_80 = arith.constant 0 : index
    %100 = vector.load %arg9[%c1_78, %c0_79, %c0_80] : memref<2x4x290xf32, #tpu.memory_space<vmem>>, vector<1x4x17xf32>
    %101 = vector.shape_cast %100 : vector<1x4x17xf32> to vector<4x17xf32>
    %102 = vector.shape_cast %99 : vector<4x17xf32> to vector<1x4x17xf32>
    tpu.vector_store %arg9[%c1_78, %c0_79, %c0_80], %102 {strides = array<i32>} : memref<2x4x290xf32, #tpu.memory_space<vmem>>, vector<1x4x17xf32>,
    %cst_81 = arith.constant 0.000000e+00 : f32
    %103 = vector.broadcast %cst_81 : f32 to vector<4x17xf32>
    %c1_82 = arith.constant 1 : index
    %c0_83 = arith.constant 0 : index
    %c273_84 = arith.constant 273 : index
    %104 = vector.load %arg9[%c1_82, %c0_83, %c273_84] : memref<2x4x290xf32, #tpu.memory_space<vmem>>, vector<1x4x17xf32>
    %105 = vector.shape_cast %104 : vector<1x4x17xf32> to vector<4x17xf32>
    %106 = vector.shape_cast %103 : vector<4x17xf32> to vector<1x4x17xf32>
    tpu.vector_store %arg9[%c1_82, %c0_83, %c273_84], %106 {strides = array<i32>} : memref<2x4x290xf32, #tpu.memory_space<vmem>>, vector<1x4x17xf32>,
    %c1_85 = arith.constant 1 : index
    %c0_86 = arith.constant 0 : index
    %c17_87 = arith.constant 17 : index
    %107 = vector.load %arg9[%c1_85, %c0_86, %c17_87] : memref<2x4x290xf32, #tpu.memory_space<vmem>>, vector<1x4x256xf32>
    %108 = vector.shape_cast %107 : vector<1x4x256xf32> to vector<4x256xf32>
    %109 = vector.shape_cast %98 : vector<4x256xf32> to vector<1x4x256xf32>
    tpu.vector_store %arg9[%c1_85, %c0_86, %c17_87], %109 {strides = array<i32>} : memref<2x4x290xf32, #tpu.memory_space<vmem>>, vector<1x4x256xf32>,
    %cst_88 = arith.constant 0.000000e+00 : f32
    %110 = vector.broadcast %cst_88 : f32 to vector<4x256xf32>
    %c1_89 = arith.constant 1 : index
    %c0_90 = arith.constant 0 : index
    %c0_91 = arith.constant 0 : index
    %111 = vector.load %arg9[%c1_89, %c0_90, %c0_91] : memref<2x4x290xf32, #tpu.memory_space<vmem>>, vector<1x4x256xf32>
    %112 = vector.shape_cast %111 : vector<1x4x256xf32> to vector<4x256xf32>
    %113 = vector.broadcast %0 : vector<1x256xf32> to vector<4x256xf32>
    %114 = arith.mulf %112, %113 : vector<4x256xf32>
    %c0_92 = arith.constant 0 : index
    %c0_93 = arith.constant 0 : index
    %c0_94 = arith.constant 0 : index
    %115 = vector.load %arg4[%c0_92, %c0_93, %c0_94] : memref<9x4x4xf32, #tpu.memory_space<vmem>>, vector<1x4x4xf32>
    %116 = vector.shape_cast %115 : vector<1x4x4xf32> to vector<4x4xf32>
    %cst_95 = arith.constant dense<0.000000e+00> : vector<4x256xf32>
    %117 = tpu.matmul %116, %114, %cst_95 {dimension_numbers = #tpu.dot_dimension_numbers<[1], [0], [0], [1], [0, 0, 1, 1], [], []>} : vector<4x4xf32>, vector<4x256xf32>, vector<4x256xf32> -> vector<4x256xf32>
    %118 = arith.addf %110, %117 : vector<4x256xf32>
    %c1_96 = arith.constant 1 : index
    %c0_97 = arith.constant 0 : index
    %c1_98 = arith.constant 1 : index
    %119 = vector.load %arg9[%c1_96, %c0_97, %c1_98] : memref<2x4x290xf32, #tpu.memory_space<vmem>>, vector<1x4x256xf32>
    %120 = vector.shape_cast %119 : vector<1x4x256xf32> to vector<4x256xf32>
    %c1_99 = arith.constant 1 : index
    %c0_100 = arith.constant 0 : index
    %c0_101 = arith.constant 0 : index
    %121 = vector.load %arg4[%c1_99, %c0_100, %c0_101] : memref<9x4x4xf32, #tpu.memory_space<vmem>>, vector<1x4x4xf32>
    %122 = vector.shape_cast %121 : vector<1x4x4xf32> to vector<4x4xf32>
    %cst_102 = arith.constant dense<0.000000e+00> : vector<4x256xf32>
    %123 = tpu.matmul %122, %120, %cst_102 {dimension_numbers = #tpu.dot_dimension_numbers<[1], [0], [0], [1], [0, 0, 1, 1], [], []>} : vector<4x4xf32>, vector<4x256xf32>, vector<4x256xf32> -> vector<4x256xf32>
    %124 = arith.addf %118, %123 : vector<4x256xf32>
    %c1_103 = arith.constant 1 : index
    %c0_104 = arith.constant 0 : index
    %c2_105 = arith.constant 2 : index
    %125 = vector.load %arg9[%c1_103, %c0_104, %c2_105] : memref<2x4x290xf32, #tpu.memory_space<vmem>>, vector<1x4x256xf32>
    %126 = vector.shape_cast %125 : vector<1x4x256xf32> to vector<4x256xf32>
    %127 = vector.broadcast %1 : vector<1x256xf32> to vector<4x256xf32>
    %128 = arith.mulf %126, %127 : vector<4x256xf32>
    %c2_106 = arith.constant 2 : index
    %c0_107 = arith.constant 0 : index
    %c0_108 = arith.constant 0 : index
    %129 = vector.load %arg4[%c2_106, %c0_107, %c0_108] : memref<9x4x4xf32, #tpu.memory_space<vmem>>, vector<1x4x4xf32>
    %130 = vector.shape_cast %129 : vector<1x4x4xf32> to vector<4x4xf32>
    %cst_109 = arith.constant dense<0.000000e+00> : vector<4x256xf32>
    %131 = tpu.matmul %130, %128, %cst_109 {dimension_numbers = #tpu.dot_dimension_numbers<[1], [0], [0], [1], [0, 0, 1, 1], [], []>} : vector<4x4xf32>, vector<4x256xf32>, vector<4x256xf32> -> vector<4x256xf32>
    %132 = arith.addf %124, %131 : vector<4x256xf32>
    %c1_110 = arith.constant 1 : index
    %c0_111 = arith.constant 0 : index
    %c16_112 = arith.constant 16 : index
    %133 = vector.load %arg9[%c1_110, %c0_111, %c16_112] : memref<2x4x290xf32, #tpu.memory_space<vmem>>, vector<1x4x256xf32>
    %134 = vector.shape_cast %133 : vector<1x4x256xf32> to vector<4x256xf32>
    %135 = vector.broadcast %0 : vector<1x256xf32> to vector<4x256xf32>
    %136 = arith.mulf %134, %135 : vector<4x256xf32>
    %c3_113 = arith.constant 3 : index
    %c0_114 = arith.constant 0 : index
    %c0_115 = arith.constant 0 : index
    %137 = vector.load %arg4[%c3_113, %c0_114, %c0_115] : memref<9x4x4xf32, #tpu.memory_space<vmem>>, vector<1x4x4xf32>
    %138 = vector.shape_cast %137 : vector<1x4x4xf32> to vector<4x4xf32>
    %cst_116 = arith.constant dense<0.000000e+00> : vector<4x256xf32>
    %139 = tpu.matmul %138, %136, %cst_116 {dimension_numbers = #tpu.dot_dimension_numbers<[1], [0], [0], [1], [0, 0, 1, 1], [], []>} : vector<4x4xf32>, vector<4x256xf32>, vector<4x256xf32> -> vector<4x256xf32>
    %140 = arith.addf %132, %139 : vector<4x256xf32>
    %c1_117 = arith.constant 1 : index
    %c0_118 = arith.constant 0 : index
    %c17_119 = arith.constant 17 : index
    %141 = vector.load %arg9[%c1_117, %c0_118, %c17_119] : memref<2x4x290xf32, #tpu.memory_space<vmem>>, vector<1x4x256xf32>
    %142 = vector.shape_cast %141 : vector<1x4x256xf32> to vector<4x256xf32>
    %c4_120 = arith.constant 4 : index
    %c0_121 = arith.constant 0 : index
    %c0_122 = arith.constant 0 : index
    %143 = vector.load %arg4[%c4_120, %c0_121, %c0_122] : memref<9x4x4xf32, #tpu.memory_space<vmem>>, vector<1x4x4xf32>
    %144 = vector.shape_cast %143 : vector<1x4x4xf32> to vector<4x4xf32>
    %cst_123 = arith.constant dense<0.000000e+00> : vector<4x256xf32>
    %145 = tpu.matmul %144, %142, %cst_123 {dimension_numbers = #tpu.dot_dimension_numbers<[1], [0], [0], [1], [0, 0, 1, 1], [], []>} : vector<4x4xf32>, vector<4x256xf32>, vector<4x256xf32> -> vector<4x256xf32>
    %146 = arith.addf %140, %145 : vector<4x256xf32>
    %c1_124 = arith.constant 1 : index
    %c0_125 = arith.constant 0 : index
    %c18_126 = arith.constant 18 : index
    %147 = vector.load %arg9[%c1_124, %c0_125, %c18_126] : memref<2x4x290xf32, #tpu.memory_space<vmem>>, vector<1x4x256xf32>
    %148 = vector.shape_cast %147 : vector<1x4x256xf32> to vector<4x256xf32>
    %149 = vector.broadcast %1 : vector<1x256xf32> to vector<4x256xf32>
    %150 = arith.mulf %148, %149 : vector<4x256xf32>
    %c5_127 = arith.constant 5 : index
    %c0_128 = arith.constant 0 : index
    %c0_129 = arith.constant 0 : index
    %151 = vector.load %arg4[%c5_127, %c0_128, %c0_129] : memref<9x4x4xf32, #tpu.memory_space<vmem>>, vector<1x4x4xf32>
    %152 = vector.shape_cast %151 : vector<1x4x4xf32> to vector<4x4xf32>
    %cst_130 = arith.constant dense<0.000000e+00> : vector<4x256xf32>
    %153 = tpu.matmul %152, %150, %cst_130 {dimension_numbers = #tpu.dot_dimension_numbers<[1], [0], [0], [1], [0, 0, 1, 1], [], []>} : vector<4x4xf32>, vector<4x256xf32>, vector<4x256xf32> -> vector<4x256xf32>
    %154 = arith.addf %146, %153 : vector<4x256xf32>
    %c1_131 = arith.constant 1 : index
    %c0_132 = arith.constant 0 : index
    %c32_133 = arith.constant 32 : index
    %155 = vector.load %arg9[%c1_131, %c0_132, %c32_133] : memref<2x4x290xf32, #tpu.memory_space<vmem>>, vector<1x4x256xf32>
    %156 = vector.shape_cast %155 : vector<1x4x256xf32> to vector<4x256xf32>
    %157 = vector.broadcast %0 : vector<1x256xf32> to vector<4x256xf32>
    %158 = arith.mulf %156, %157 : vector<4x256xf32>
    %c6_134 = arith.constant 6 : index
    %c0_135 = arith.constant 0 : index
    %c0_136 = arith.constant 0 : index
    %159 = vector.load %arg4[%c6_134, %c0_135, %c0_136] : memref<9x4x4xf32, #tpu.memory_space<vmem>>, vector<1x4x4xf32>
    %160 = vector.shape_cast %159 : vector<1x4x4xf32> to vector<4x4xf32>
    %cst_137 = arith.constant dense<0.000000e+00> : vector<4x256xf32>
    %161 = tpu.matmul %160, %158, %cst_137 {dimension_numbers = #tpu.dot_dimension_numbers<[1], [0], [0], [1], [0, 0, 1, 1], [], []>} : vector<4x4xf32>, vector<4x256xf32>, vector<4x256xf32> -> vector<4x256xf32>
    %162 = arith.addf %154, %161 : vector<4x256xf32>
    %c1_138 = arith.constant 1 : index
    %c0_139 = arith.constant 0 : index
    %c33_140 = arith.constant 33 : index
    %163 = vector.load %arg9[%c1_138, %c0_139, %c33_140] : memref<2x4x290xf32, #tpu.memory_space<vmem>>, vector<1x4x256xf32>
    %164 = vector.shape_cast %163 : vector<1x4x256xf32> to vector<4x256xf32>
    %c7_141 = arith.constant 7 : index
    %c0_142 = arith.constant 0 : index
    %c0_143 = arith.constant 0 : index
    %165 = vector.load %arg4[%c7_141, %c0_142, %c0_143] : memref<9x4x4xf32, #tpu.memory_space<vmem>>, vector<1x4x4xf32>
    %166 = vector.shape_cast %165 : vector<1x4x4xf32> to vector<4x4xf32>
    %cst_144 = arith.constant dense<0.000000e+00> : vector<4x256xf32>
    %167 = tpu.matmul %166, %164, %cst_144 {dimension_numbers = #tpu.dot_dimension_numbers<[1], [0], [0], [1], [0, 0, 1, 1], [], []>} : vector<4x4xf32>, vector<4x256xf32>, vector<4x256xf32> -> vector<4x256xf32>
    %168 = arith.addf %162, %167 : vector<4x256xf32>
    %c1_145 = arith.constant 1 : index
    %c0_146 = arith.constant 0 : index
    %c34_147 = arith.constant 34 : index
    %169 = vector.load %arg9[%c1_145, %c0_146, %c34_147] : memref<2x4x290xf32, #tpu.memory_space<vmem>>, vector<1x4x256xf32>
    %170 = vector.shape_cast %169 : vector<1x4x256xf32> to vector<4x256xf32>
    %171 = vector.broadcast %1 : vector<1x256xf32> to vector<4x256xf32>
    %172 = arith.mulf %170, %171 : vector<4x256xf32>
    %c8_148 = arith.constant 8 : index
    %c0_149 = arith.constant 0 : index
    %c0_150 = arith.constant 0 : index
    %173 = vector.load %arg4[%c8_148, %c0_149, %c0_150] : memref<9x4x4xf32, #tpu.memory_space<vmem>>, vector<1x4x4xf32>
    %174 = vector.shape_cast %173 : vector<1x4x4xf32> to vector<4x4xf32>
    %cst_151 = arith.constant dense<0.000000e+00> : vector<4x256xf32>
    %175 = tpu.matmul %174, %172, %cst_151 {dimension_numbers = #tpu.dot_dimension_numbers<[1], [0], [0], [1], [0, 0, 1, 1], [], []>} : vector<4x4xf32>, vector<4x256xf32>, vector<4x256xf32> -> vector<4x256xf32>
    %176 = arith.addf %168, %175 : vector<4x256xf32>
    %c0_152 = arith.constant 0 : index
    %c0_153 = arith.constant 0 : index
    %177 = vector.load %arg5[%c0_152, %c0_153] : memref<4x1xf32, #tpu.memory_space<vmem>>, vector<4x1xf32>
    %178 = vector.broadcast %177 : vector<4x1xf32> to vector<4x256xf32>
    %179 = arith.addf %176, %178 : vector<4x256xf32>
    %c1_154 = arith.constant 1 : index
    %c0_155 = arith.constant 0 : index
    %c0_156 = arith.constant 0 : index
    %180 = vector.load %arg7[%c1_154, %c0_155, %c0_156] : memref<2x4x256xf32, #tpu.memory_space<vmem>>, vector<1x4x256xf32>
    %181 = vector.shape_cast %180 : vector<1x4x256xf32> to vector<4x256xf32>
    %182 = vector.shape_cast %179 : vector<4x256xf32> to vector<1x4x256xf32>
    tpu.vector_store %arg7[%c1_154, %c0_155, %c0_156], %182 {strides = array<i32>} : memref<2x4x256xf32, #tpu.memory_space<vmem>>, vector<1x4x256xf32>,
    %cst_157 = arith.constant dense<0.000000e+00> : vector<4xf32>
    %183 = vector.multi_reduction <add>, %179, %cst_157 [1] : vector<4x256xf32> to vector<4xf32>
    %184 = vector.shape_cast %183 : vector<4xf32> to vector<4x1xf32>
    %185 = arith.addf %92, %184 : vector<4x1xf32>
    %186 = arith.mulf %179, %179 : vector<4x256xf32>
    %cst_158 = arith.constant dense<0.000000e+00> : vector<4xf32>
    %187 = vector.multi_reduction <add>, %186, %cst_158 [1] : vector<4x256xf32> to vector<4xf32>
    %188 = vector.shape_cast %187 : vector<4xf32> to vector<4x1xf32>
    %189 = arith.addf %96, %188 : vector<4x1xf32>
    %c0_159 = arith.constant 0 : index
    %c0_160 = arith.constant 0 : index
    %c0_161 = arith.constant 0 : index
    %190 = vector.load %arg8[%c0_159, %c0_160, %c0_161] : memref<1x4x2xf32, #tpu.memory_space<vmem>>, vector<1x4x1xf32>
    %191 = vector.shape_cast %190 : vector<1x4x1xf32> to vector<4x1xf32>
    %192 = vector.shape_cast %185 : vector<4x1xf32> to vector<1x4x1xf32>
    tpu.vector_store %arg8[%c0_159, %c0_160, %c0_161], %192 {strides = array<i32>} : memref<1x4x2xf32, #tpu.memory_space<vmem>>, vector<1x4x1xf32>,
    %c0_162 = arith.constant 0 : index
    %c0_163 = arith.constant 0 : index
    %c1_164 = arith.constant 1 : index
    %193 = vector.load %arg8[%c0_162, %c0_163, %c1_164] : memref<1x4x2xf32, #tpu.memory_space<vmem>>, vector<1x4x1xf32>
    %194 = vector.shape_cast %193 : vector<1x4x1xf32> to vector<4x1xf32>
    %195 = vector.shape_cast %189 : vector<4x1xf32> to vector<1x4x1xf32>
    tpu.vector_store %arg8[%c0_162, %c0_163, %c1_164], %195 {strides = array<i32>} : memref<1x4x2xf32, #tpu.memory_space<vmem>>, vector<1x4x1xf32>,
    return
  }
  func.func @transform_0(%arg0: i32) -> (i32, i32, i32) {
    %c0_i32 = arith.constant 0 : i32
    %c0_i32_0 = arith.constant 0 : i32
    %c0_i32_1 = arith.constant 0 : i32
    return %arg0, %c0_i32, %c0_i32_0 : i32, i32, i32
  }
  func.func @transform_1(%arg0: i32) -> (i32, i32) {
    %c0_i32 = arith.constant 0 : i32
    %c0_i32_0 = arith.constant 0 : i32
    %c0_i32_1 = arith.constant 0 : i32
    return %c0_i32, %c0_i32_0 : i32, i32
  }
  func.func @transform_2(%arg0: i32) -> (i32, i32) {
    %c0_i32 = arith.constant 0 : i32
    %c0_i32_0 = arith.constant 0 : i32
    %c0_i32_1 = arith.constant 0 : i32
    return %c0_i32, %c0_i32_0 : i32, i32
  }
  func.func @transform_3(%arg0: i32) -> (i32, i32, i32) {
    %c0_i32 = arith.constant 0 : i32
    %c0_i32_0 = arith.constant 0 : i32
    %c0_i32_1 = arith.constant 0 : i32
    %c0_i32_2 = arith.constant 0 : i32
    return %c0_i32, %c0_i32_0, %c0_i32_1 : i32, i32, i32
  }
  func.func @transform_4(%arg0: i32) -> (i32, i32) {
    %c0_i32 = arith.constant 0 : i32
    %c0_i32_0 = arith.constant 0 : i32
    %c0_i32_1 = arith.constant 0 : i32
    return %c0_i32, %c0_i32_0 : i32, i32
  }
  func.func @transform_5(%arg0: i32) -> (i32, i32) {
    %c0_i32 = arith.constant 0 : i32
    %c0_i32_0 = arith.constant 0 : i32
    %c0_i32_1 = arith.constant 0 : i32
    return %c0_i32, %c0_i32_0 : i32, i32
  }
  func.func @transform_6(%arg0: i32) -> (i32, i32, i32) {
    %c0_i32 = arith.constant 0 : i32
    %c0_i32_0 = arith.constant 0 : i32
    %c0_i32_1 = arith.constant 0 : i32
    return %arg0, %c0_i32, %c0_i32_0 : i32, i32, i32
  }
  func.func @transform_7(%arg0: i32) -> (i32, i32, i32) {
    %c0_i32 = arith.constant 0 : i32
    %c0_i32_0 = arith.constant 0 : i32
    %c0_i32_1 = arith.constant 0 : i32
    return %arg0, %c0_i32, %c0_i32_0 : i32, i32, i32
  }
}

module attributes {stable_mosaic.version = 11 : i64} {
  func.func @_affine_kernel(%arg0: i32, %arg1: memref<8x256xf32, #tpu.memory_space<vmem>>, %arg2: memref<8x1xf32, #tpu.memory_space<vmem>>, %arg3: memref<8x1xf32, #tpu.memory_space<vmem>>, %arg4: memref<8x256xf32, #tpu.memory_space<vmem>>) attributes {dimension_semantics = [#tpu.dimension_semantics<parallel>], iteration_bounds = array<i64: 1>, scalar_prefetch = 0 : i64, scratch_operands = 0 : i64, tpu.core_type = #tpu.core_type<tc>, window_params = [{transform_indices = @transform_0, window_bounds = array<i64: 8, 256>}, {transform_indices = @transform_1, window_bounds = array<i64: 8, 1>}, {transform_indices = @transform_2, window_bounds = array<i64: 8, 1>}, {transform_indices = @transform_3, window_bounds = array<i64: 8, 256>}]} {
    %c0 = arith.constant 0 : index
    %c0_0 = arith.constant 0 : index
    %0 = vector.load %arg1[%c0, %c0_0] : memref<8x256xf32, #tpu.memory_space<vmem>>, vector<8x256xf32>
    %c0_1 = arith.constant 0 : index
    %c0_2 = arith.constant 0 : index
    %1 = vector.load %arg2[%c0_1, %c0_2] : memref<8x1xf32, #tpu.memory_space<vmem>>, vector<8x1xf32>
    %2 = vector.broadcast %1 : vector<8x1xf32> to vector<8x256xf32>
    %3 = arith.mulf %0, %2 : vector<8x256xf32>
    %c0_3 = arith.constant 0 : index
    %c0_4 = arith.constant 0 : index
    %4 = vector.load %arg3[%c0_3, %c0_4] : memref<8x1xf32, #tpu.memory_space<vmem>>, vector<8x1xf32>
    %5 = vector.broadcast %4 : vector<8x1xf32> to vector<8x256xf32>
    %6 = arith.addf %3, %5 : vector<8x256xf32>
    %c0_5 = arith.constant 0 : index
    %c0_6 = arith.constant 0 : index
    %7 = vector.load %arg4[%c0_5, %c0_6] : memref<8x256xf32, #tpu.memory_space<vmem>>, vector<8x256xf32>
    tpu.vector_store %arg4[%c0_5, %c0_6], %6 {strides = array<i32>} : memref<8x256xf32, #tpu.memory_space<vmem>>, vector<8x256xf32>,
    return
  }
  func.func @transform_0(%arg0: i32) -> (i32, i32) {
    %c0_i32 = arith.constant 0 : i32
    %c0_i32_0 = arith.constant 0 : i32
    return %arg0, %c0_i32 : i32, i32
  }
  func.func @transform_1(%arg0: i32) -> (i32, i32) {
    %c0_i32 = arith.constant 0 : i32
    %c0_i32_0 = arith.constant 0 : i32
    return %arg0, %c0_i32 : i32, i32
  }
  func.func @transform_2(%arg0: i32) -> (i32, i32) {
    %c0_i32 = arith.constant 0 : i32
    %c0_i32_0 = arith.constant 0 : i32
    return %arg0, %c0_i32 : i32, i32
  }
  func.func @transform_3(%arg0: i32) -> (i32, i32) {
    %c0_i32 = arith.constant 0 : i32
    %c0_i32_0 = arith.constant 0 : i32
    return %arg0, %c0_i32 : i32, i32
  }
}

</mosaic_0001>

<llo_original>
// kernel: _trans_block_forward_impl.5
$region0: #{_trans_block_forward_impl.5}
  #allocation0 [shape = 'u32[]', space=smem, size = 0x4, offset = 0x4, fixed_abs, tag = 'smem constant byte address 0x4 - core index']
  #allocation1 [shape = 'u32[144,128]{1,0:T(1,128)}', space=vmem, size = 0x12000, scoped, tag = 'internal scratch']
  %s0 = inlined_call_operand.vmem [shape: f32[8,256], index: 0, kind: input, shape index: {}, may-alias: {0,3}]
  %s1 = inlined_call_operand.vmem [shape: f32[8,1], index: 1, kind: input, shape index: {}]
  %s2 = inlined_call_operand.vmem [shape: f32[8,1], index: 2, kind: input, shape index: {}]
  %s3 = inlined_call_operand.vmem [shape: f32[8,256], index: 3, kind: output, shape index: {}, may-alias: {0,3}]
  %s4 = sld [smem:[#allocation0]]
  $region22: #{_trans_block_forward_impl.5} parent=0
    _
  %s6 = ssub.s32 1, %s4
  %s7 = scalar_select 0, %s6, %s4
  // Predicated region
  $region2: #{_trans_block_forward_impl.5} parent=0 // pred_check
    _
  $region3: #{_trans_block_forward_impl.5} parent=0 // pred_check_branch
    %9 = sbr.rel (0) target = $region5
  $region4: #{_trans_block_forward_impl.5} parent=0 // pred_region
    _
  $region5: #{_trans_block_forward_impl.5} parent=0 // pred_fallthru
    _
  // Predicated region
  $region6: #{_trans_block_forward_impl.5} parent=0 // pred_check
    _
  $region7: #{_trans_block_forward_impl.5} parent=0 // pred_check_branch
    %11 = sbr.rel (0) target = $region9
  $region8: #{_trans_block_forward_impl.5} parent=0 // pred_region
    _
  $region9: #{_trans_block_forward_impl.5} parent=0 // pred_fallthru
    _
  // Predicated region
  $region10: #{_trans_block_forward_impl.5} parent=0 // pred_check
    _
  $region11: #{_trans_block_forward_impl.5} parent=0 // pred_check_branch
    %13 = sbr.rel (0) target = $region13
  $region12: #{_trans_block_forward_impl.5} parent=0 // pred_region
    _
  $region13: #{_trans_block_forward_impl.5} parent=0 // pred_fallthru
    _
  %v14 = vld [vmem:[%s0] sm:$0xff]
  %v15 = vld [vmem:[%s0 + $0x8] sm:$0xff]
  %v16 = vld [vmem:[%s1] sm:$0xff]
  %18 = vset.pattern.permute.xlu0 0
  %19 = vperm.xlu0 %18, %v16
  %v20 = vpop.permute.xlu0 %19
  %v22 = vmul.f32 %v14, %v20
  %v23 = vmul.f32 %v15, %v20
  %v24 = vld [vmem:[%s2] sm:$0xff]
  %26 = vset.pattern.permute.xlu0 0
  %27 = vperm.xlu0 %26, %v24
  %v28 = vpop.permute.xlu0 %27
  %v30 = vadd.f32 %v22, %v28
  %v31 = vadd.f32 %v23, %v28
  %32 = vst [vmem:[%s3] sm:$0xff] %v30
  %33 = vst [vmem:[%s3 + $0x8] sm:$0xff] %v31
  // Predicated region
  $region14: #{_trans_block_forward_impl.5} parent=0 // pred_check
    _
  $region15: #{_trans_block_forward_impl.5} parent=0 // pred_check_branch
    %35 = sbr.rel (0) target = $region17
  $region16: #{_trans_block_forward_impl.5} parent=0 // pred_region
    _
  $region17: #{_trans_block_forward_impl.5} parent=0 // pred_fallthru
    _
  // Predicated region
  $region18: #{_trans_block_forward_impl.5} parent=0 // pred_check
    _
  $region19: #{_trans_block_forward_impl.5} parent=0 // pred_check_branch
    %37 = sbr.rel (0) target = $region21
  $region20: #{_trans_block_forward_impl.5} parent=0 // pred_region
    _
  $region21: #{_trans_block_forward_impl.5} parent=0 // pred_fallthru
    _

// kernel: _trans_block_forward_impl.3
$region0: #{_trans_block_forward_impl.3}
  #allocation0 [shape = 'u32[]', space=smem, size = 0x4, offset = 0x4, fixed_abs, tag = 'smem constant byte address 0x4 - core index']
  #allocation1 [shape = 'u32[144,128]{1,0:T(1,128)}', space=vmem, size = 0x12000, scoped, tag = 'internal scratch']
  #allocation2 [shape = 'f32[2,4,290]{2,1,0:T(4,128)}', space=vmem, size = 0x3000, scoped, tag = 'scratch operand']
  %s0 = inlined_call_operand.vmem [shape: f32[2,4,256], index: 0, kind: input, shape index: {}]
  %s1 = inlined_call_operand.vmem [shape: f32[4,1], index: 1, kind: input, shape index: {}]
  %s2 = inlined_call_operand.vmem [shape: f32[4,1], index: 2, kind: input, shape index: {}]
  %s3 = inlined_call_operand.vmem [shape: f32[9,4,4], index: 3, kind: input, shape index: {}]
  %s4 = inlined_call_operand.vmem [shape: f32[4,1], index: 4, kind: input, shape index: {}]
  %s5 = inlined_call_operand.vmem [shape: f32[2,256], index: 5, kind: input, shape index: {}]
  %s6 = inlined_call_operand.vmem [shape: f32[2,4,256], index: 6, kind: output, shape index: {0}]
  %s7 = inlined_call_operand.vmem [shape: f32[1,4,2], index: 7, kind: output, shape index: {1}]
  %8 = xla_tuple %s6, %s7
  %s9 = sld [smem:[#allocation0]]
  $region42: #{_trans_block_forward_impl.3} parent=0
    _
  %s11 = ssub.s32 1, %s9
  %s12 = scalar_select 0, %s11, %s9
  // Predicated region
  $region2: #{_trans_block_forward_impl.3} parent=0 // pred_check
    _
  $region3: #{_trans_block_forward_impl.3} parent=0 // pred_check_branch
    %14 = sbr.rel (0) target = $region5
  $region4: #{_trans_block_forward_impl.3} parent=0 // pred_region
    _
  $region5: #{_trans_block_forward_impl.3} parent=0 // pred_fallthru
    _
  // Predicated region
  $region6: #{_trans_block_forward_impl.3} parent=0 // pred_check
    _
  $region7: #{_trans_block_forward_impl.3} parent=0 // pred_check_branch
    %16 = sbr.rel (0) target = $region9
  $region8: #{_trans_block_forward_impl.3} parent=0 // pred_region
    _
  $region9: #{_trans_block_forward_impl.3} parent=0 // pred_fallthru
    _
  // Predicated region
  $region10: #{_trans_block_forward_impl.3} parent=0 // pred_check
    _
  $region11: #{_trans_block_forward_impl.3} parent=0 // pred_check_branch
    %18 = sbr.rel (0) target = $region13
  $region12: #{_trans_block_forward_impl.3} parent=0 // pred_region
    _
  $region13: #{_trans_block_forward_impl.3} parent=0 // pred_fallthru
    _
  // Predicated region
  $region14: #{_trans_block_forward_impl.3} parent=0 // pred_check
    _
  $region15: #{_trans_block_forward_impl.3} parent=0 // pred_check_branch
    %20 = sbr.rel (0) target = $region17
  $region16: #{_trans_block_forward_impl.3} parent=0 // pred_region
    _
  $region17: #{_trans_block_forward_impl.3} parent=0 // pred_fallthru
    _
  // Predicated region
  $region18: #{_trans_block_forward_impl.3} parent=0 // pred_check
    _
  $region19: #{_trans_block_forward_impl.3} parent=0 // pred_check_branch
    %22 = sbr.rel (0) target = $region21
  $region20: #{_trans_block_forward_impl.3} parent=0 // pred_region
    _
  $region21: #{_trans_block_forward_impl.3} parent=0 // pred_fallthru
    _
  // Predicated region
  $region22: #{_trans_block_forward_impl.3} parent=0 // pred_check
    _
  $region23: #{_trans_block_forward_impl.3} parent=0 // pred_check_branch
    %24 = sbr.rel (0) target = $region25
  $region24: #{_trans_block_forward_impl.3} parent=0 // pred_region
    _
  $region25: #{_trans_block_forward_impl.3} parent=0 // pred_fallthru
    _
  %v25 = vld [vmem:[%s5] ss:$2 sm:$0x3]
  %s26 = scalar_lea.vmem %s5, 1
  %v27 = vld [vmem:[%s26] ss:$2 sm:$0x3]
  %v28 = vld [vmem:[%s0] sm:$0xff]
  %vm29 = vcmask 134144
  %30 = vst.msk [vmem:[#allocation2] sm:$0xf] %vm29, 0.0
  %vm31 = vcmask 273544
  %32 = vst.msk [vmem:[#allocation2 + $0x8] sm:$0xf] %vm31, 0.0
  %34 = vrot.lane.b32.xlu0 %v28, 17
  %v35 = vpop.permute.xlu0 %34
  %v36 = vrot.slane %v35, 4
  %vm37 = vcmask 138240
  %v38 = vsel %vm37, %v36, %v35
  %vm41 = vcmask 1043592
  %vm42 = vcmask 1047556
  %vm43 = vmor %vm42, %vm41
  %44 = vst.msk [vmem:[#allocation2] sm:$0xff] %vm43, %v38
  %45 = vst.msk [vmem:[#allocation2 + $0x8] sm:$0xf] %vm29, %v36
  %v46 = vld [vmem:[#allocation2] sm:$0xff]
  %v48 = vlaneseq
  %v49 = vshrl.u32 %v48, 7
  %v50 = vsub.s32 0, %v49
  %v51 = vrot.slane %v25, %v50
  %v52 = vlaneseq
  %v53 = vshrl.u32 %v52, 7
  %v54 = vsub.s32 1, %v53
  %v55 = vrot.slane %v25, %v54
  %v56 = vcombine.low %v51, %v55
  %v58 = vmul.f32 %v46, %v56
  %v59 = vld [vmem:[%s3] sm:$0xf]
  %v60 = vld [vmem:[#allocation2 + $0x8] sm:$0xf]
  %s61 = scalar_lea.vmem %s3, 4
  %v62 = vld [vmem:[%s61] sm:$0xf]
  %v65 = vcombine.high %v46, %v46
  %66 = vrot.lane.b32.xlu0 %v46, 127
  %v67 = vpop.permute.xlu0 %66
  %68 = vrot.lane.b32.xlu0 %v65, 127
  %v69 = vpop.permute.xlu0 %68
  %70 = vrot.lane.b32.xlu0 %v60, 127
  %v71 = vpop.permute.xlu0 %70
  %vm72 = vcmask 1039360
  %v73 = vsel %vm72, %v67, %v69
  %v74 = vsel %vm72, %v69, %v71
  %vm75 = vcmask 31744
  %v77 = vsel %vm75, %v62, 0
  %vm79 = vcmask 1043456
  %v80 = vsel %vm79, %v73, 0
  %v82 = vsel %vm79, %v74, 0
  %84 = vmatprep.subr.mxu0 %v82
  %85 = vmatpush1.msra.mxu0 %v80
  %86 = vmatprep.subr.mxu0 0.0
  %87 = vmatpush1.msra.mxu0 0.0
  %88 = vmatprep.subr.mxu0 0.0
  %89 = vmatpush1.msra.mxu0 0.0
  %90 = vmatprep.subr.mxu0 0.0
  %91 = vmatpush1.msra.mxu0 0.0
  %92 = vmatprep.subr.mxu0 0.0
  %93 = vmatpush1.msra.mxu0 0.0
  %94 = vmatprep.subr.mxu0 0.0
  %95 = vmatpush1.msra.mxu0 0.0
  %96 = vmatprep.subr.mxu0 0.0
  %97 = vmatpush1.msra.mxu0 0.0
  %98 = vmatprep.subr.mxu0 0.0
  %99 = vmatpush1.msra.mxu0 0.0
  %100 = vmatprep.subr.mxu0 0.0
  %101 = vmatpush1.msra.mxu0 0.0
  %102 = vmatprep.subr.mxu0 0.0
  %103 = vmatpush1.msra.mxu0 0.0
  %104 = vmatprep.subr.mxu0 0.0
  %105 = vmatpush1.msra.mxu0 0.0
  %106 = vmatprep.subr.mxu0 0.0
  %107 = vmatpush1.msra.mxu0 0.0
  %108 = vmatprep.subr.mxu0 0.0
  %109 = vmatpush1.msra.mxu0 0.0
  %110 = vmatprep.subr.mxu0 0.0
  %111 = vmatpush1.msra.mxu0 0.0
  %112 = vmatprep.subr.mxu0 0.0
  %113 = vmatpush1.msra.mxu0 0.0
  %114 = vmatprep.subr.mxu0 0.0
  %115 = vmatpush1.msra.mxu0 0.0
  %116 = vmatprep.subr.mxu0 0.0
  %117 = vmatpush1.msra.mxu0 0.0
  %118 = vmatprep.subr.mxu0 0.0
  %119 = vmatpush1.msra.mxu0 0.0
  %120 = vmatprep.subr.mxu0 0.0
  %121 = vmatpush1.msra.mxu0 0.0
  %122 = vmatprep.subr.mxu0 0.0
  %123 = vmatpush1.msra.mxu0 0.0
  %124 = vmatprep.subr.mxu0 0.0
  %125 = vmatpush1.msra.mxu0 0.0
  %126 = vmatprep.subr.mxu0 0.0
  %127 = vmatpush1.msra.mxu0 0.0
  %128 = vmatprep.subr.mxu0 0.0
  %129 = vmatpush1.msra.mxu0 0.0
  %130 = vmatprep.subr.mxu0 0.0
  %131 = vmatpush1.msra.mxu0 0.0
  %132 = vmatprep.subr.mxu0 0.0
  %133 = vmatpush1.msra.mxu0 0.0
  %134 = vmatprep.subr.mxu0 0.0
  %135 = vmatpush1.msra.mxu0 0.0
  %136 = vmatprep.subr.mxu0 0.0
  %137 = vmatpush1.msra.mxu0 0.0
  %138 = vmatprep.subr.mxu0 0.0
  %139 = vmatpush1.msra.mxu0 0.0
  %140 = vmatprep.subr.mxu0 0.0
  %141 = vmatpush1.msra.mxu0 0.0
  %142 = vmatprep.subr.mxu0 0.0
  %143 = vmatpush1.msra.mxu0 0.0
  %144 = vmatprep.subr.mxu0 0.0
  %145 = vmatpush1.msra.mxu0 0.0
  %146 = vmatprep.subr.mxu0 0.0
  %147 = vmatpush1.msra.mxu0 0.0
  %148 = vmatprep.mubr.f32.mxu0 0.0
  %149 = vmatmul.mubr.f32.gmra.mrb[0].mxu0 %v77
  %v150 = vpop.f32.mrb[0].mxu0
  %v151 = vadd.f32 0.0, %v150
  %v152 = vpop.f32.mrb[0].mxu0
  %v153 = vadd.f32 0.0, %v152
  %154 = vdwg.mxu0
  %v156 = vcombine.high %v58, %v58
  %v158 = vsel %vm75, %v59, 0
  %v160 = vsel %vm79, %v58, 0
  %v162 = vsel %vm79, %v156, 0
  %164 = vmatprep.subr.mxu0 %v162
  %165 = vmatpush1.msra.mxu0 %v160
  %166 = vmatprep.subr.mxu0 0.0
  %167 = vmatpush1.msra.mxu0 0.0
  %168 = vmatprep.subr.mxu0 0.0
  %169 = vmatpush1.msra.mxu0 0.0
  %170 = vmatprep.subr.mxu0 0.0
  %171 = vmatpush1.msra.mxu0 0.0
  %172 = vmatprep.subr.mxu0 0.0
  %173 = vmatpush1.msra.mxu0 0.0
  %174 = vmatprep.subr.mxu0 0.0
  %175 = vmatpush1.msra.mxu0 0.0
  %176 = vmatprep.subr.mxu0 0.0
  %177 = vmatpush1.msra.mxu0 0.0
  %178 = vmatprep.subr.mxu0 0.0
  %179 = vmatpush1.msra.mxu0 0.0
  %180 = vmatprep.subr.mxu0 0.0
  %181 = vmatpush1.msra.mxu0 0.0
  %182 = vmatprep.subr.mxu0 0.0
  %183 = vmatpush1.msra.mxu0 0.0
  %184 = vmatprep.subr.mxu0 0.0
  %185 = vmatpush1.msra.mxu0 0.0
  %186 = vmatprep.subr.mxu0 0.0
  %187 = vmatpush1.msra.mxu0 0.0
  %188 = vmatprep.subr.mxu0 0.0
  %189 = vmatpush1.msra.mxu0 0.0
  %190 = vmatprep.subr.mxu0 0.0
  %191 = vmatpush1.msra.mxu0 0.0
  %192 = vmatprep.subr.mxu0 0.0
  %193 = vmatpush1.msra.mxu0 0.0
  %194 = vmatprep.subr.mxu0 0.0
  %195 = vmatpush1.msra.mxu0 0.0
  %196 = vmatprep.subr.mxu0 0.0
  %197 = vmatpush1.msra.mxu0 0.0
  %198 = vmatprep.subr.mxu0 0.0
  %199 = vmatpush1.msra.mxu0 0.0
  %200 = vmatprep.subr.mxu0 0.0
  %201 = vmatpush1.msra.mxu0 0.0
  %202 = vmatprep.subr.mxu0 0.0
  %203 = vmatpush1.msra.mxu0 0.0
  %204 = vmatprep.subr.mxu0 0.0
  %205 = vmatpush1.msra.mxu0 0.0
  %206 = vmatprep.subr.mxu0 0.0
  %207 = vmatpush1.msra.mxu0 0.0
  %208 = vmatprep.subr.mxu0 0.0
  %209 = vmatpush1.msra.mxu0 0.0
  %210 = vmatprep.subr.mxu0 0.0
  %211 = vmatpush1.msra.mxu0 0.0
  %212 = vmatprep.subr.mxu0 0.0
  %213 = vmatpush1.msra.mxu0 0.0
  %214 = vmatprep.subr.mxu0 0.0
  %215 = vmatpush1.msra.mxu0 0.0
  %216 = vmatprep.subr.mxu0 0.0
  %217 = vmatpush1.msra.mxu0 0.0
  %218 = vmatprep.subr.mxu0 0.0
  %219 = vmatpush1.msra.mxu0 0.0
  %220 = vmatprep.subr.mxu0 0.0
  %221 = vmatpush1.msra.mxu0 0.0
  %222 = vmatprep.subr.mxu0 0.0
  %223 = vmatpush1.msra.mxu0 0.0
  %224 = vmatprep.subr.mxu0 0.0
  %225 = vmatpush1.msra.mxu0 0.0
  %226 = vmatprep.subr.mxu0 0.0
  %227 = vmatpush1.msra.mxu0 0.0
  %228 = vmatprep.mubr.f32.mxu0 0.0
  %229 = vmatmul.mubr.f32.gmra.mrb[0].mxu0 %v158
  %v230 = vpop.f32.mrb[0].mxu0
  %v231 = vadd.f32 %v151, %v230
  %v232 = vpop.f32.mrb[0].mxu0
  %v233 = vadd.f32 %v153, %v232
  %234 = vdwg.mxu0
  %v235 = vld [vmem:[#allocation2] sm:$0xff]
  %v236 = vld [vmem:[#allocation2 + $0x8] sm:$0xf]
  %v238 = vlaneseq
  %v239 = vshrl.u32 %v238, 7
  %v240 = vsub.s32 0, %v239
  %v241 = vrot.slane %v27, %v240
  %v242 = vlaneseq
  %v243 = vshrl.u32 %v242, 7
  %v244 = vsub.s32 1, %v243
  %v245 = vrot.slane %v27, %v244
  %v246 = vcombine.low %v241, %v245
  %247 = vrot.lane.b32.xlu0 %v246, 2
  %v248 = vpop.permute.xlu0 %247
  %v249 = vrot.slane %v248, 4
  %vm250 = vcmask 15360
  %v251 = vsel %vm250, %v249, %v248
  %v254 = vmul.f32 %v235, %v251
  %v255 = vmul.f32 %v236, %v249
  %s256 = scalar_lea.vmem %s3, 8
  %v257 = vld [vmem:[%s256] sm:$0xf]
  %v260 = vcombine.high %v254, %v254
  %261 = vrot.lane.b32.xlu0 %v254, 126
  %v262 = vpop.permute.xlu0 %261
  %263 = vrot.lane.b32.xlu0 %v260, 126
  %v264 = vpop.permute.xlu0 %263
  %265 = vrot.lane.b32.xlu0 %v255, 126
  %v266 = vpop.permute.xlu0 %265
  %vm267 = vcmask 1031168
  %v268 = vsel %vm267, %v262, %v264
  %v269 = vsel %vm267, %v264, %v266
  %v271 = vsel %vm75, %v257, 0
  %v273 = vsel %vm79, %v268, 0
  %v275 = vsel %vm79, %v269, 0
  %277 = vmatprep.subr.mxu0 %v275
  %278 = vmatpush1.msra.mxu0 %v273
  %279 = vmatprep.subr.mxu0 0.0
  %280 = vmatpush1.msra.mxu0 0.0
  %281 = vmatprep.subr.mxu0 0.0
  %282 = vmatpush1.msra.mxu0 0.0
  %283 = vmatprep.subr.mxu0 0.0
  %284 = vmatpush1.msra.mxu0 0.0
  %285 = vmatprep.subr.mxu0 0.0
  %286 = vmatpush1.msra.mxu0 0.0
  %287 = vmatprep.subr.mxu0 0.0
  %288 = vmatpush1.msra.mxu0 0.0
  %289 = vmatprep.subr.mxu0 0.0
  %290 = vmatpush1.msra.mxu0 0.0
  %291 = vmatprep.subr.mxu0 0.0
  %292 = vmatpush1.msra.mxu0 0.0
  %293 = vmatprep.subr.mxu0 0.0
  %294 = vmatpush1.msra.mxu0 0.0
  %295 = vmatprep.subr.mxu0 0.0
  %296 = vmatpush1.msra.mxu0 0.0
  %297 = vmatprep.subr.mxu0 0.0
  %298 = vmatpush1.msra.mxu0 0.0
  %299 = vmatprep.subr.mxu0 0.0
  %300 = vmatpush1.msra.mxu0 0.0
  %301 = vmatprep.subr.mxu0 0.0
  %302 = vmatpush1.msra.mxu0 0.0
  %303 = vmatprep.subr.mxu0 0.0
  %304 = vmatpush1.msra.mxu0 0.0
  %305 = vmatprep.subr.mxu0 0.0
  %306 = vmatpush1.msra.mxu0 0.0
  %307 = vmatprep.subr.mxu0 0.0
  %308 = vmatpush1.msra.mxu0 0.0
  %309 = vmatprep.subr.mxu0 0.0
  %310 = vmatpush1.msra.mxu0 0.0
  %311 = vmatprep.subr.mxu0 0.0
  %312 = vmatpush1.msra.mxu0 0.0
  %313 = vmatprep.subr.mxu0 0.0
  %314 = vmatpush1.msra.mxu0 0.0
  %315 = vmatprep.subr.mxu0 0.0
  %316 = vmatpush1.msra.mxu0 0.0
  %317 = vmatprep.subr.mxu0 0.0
  %318 = vmatpush1.msra.mxu0 0.0
  %319 = vmatprep.subr.mxu0 0.0
  %320 = vmatpush1.msra.mxu0 0.0
  %321 = vmatprep.subr.mxu0 0.0
  %322 = vmatpush1.msra.mxu0 0.0
  %323 = vmatprep.subr.mxu0 0.0
  %324 = vmatpush1.msra.mxu0 0.0
  %325 = vmatprep.subr.mxu0 0.0
  %326 = vmatpush1.msra.mxu0 0.0
  %327 = vmatprep.subr.mxu0 0.0
  %328 = vmatpush1.msra.mxu0 0.0
  %329 = vmatprep.subr.mxu0 0.0
  %330 = vmatpush1.msra.mxu0 0.0
  %331 = vmatprep.subr.mxu0 0.0
  %332 = vmatpush1.msra.mxu0 0.0
  %333 = vmatprep.subr.mxu0 0.0
  %334 = vmatpush1.msra.mxu0 0.0
  %335 = vmatprep.subr.mxu0 0.0
  %336 = vmatpush1.msra.mxu0 0.0
  %337 = vmatprep.subr.mxu0 0.0
  %338 = vmatpush1.msra.mxu0 0.0
  %339 = vmatprep.subr.mxu0 0.0
  %340 = vmatpush1.msra.mxu0 0.0
  %341 = vmatprep.mubr.f32.mxu0 0.0
  %342 = vmatmul.mubr.f32.gmra.mrb[0].mxu0 %v271
  %v343 = vpop.f32.mrb[0].mxu0
  %v344 = vadd.f32 0.0, %v343
  %v345 = vpop.f32.mrb[0].mxu0
  %v346 = vadd.f32 0.0, %v345
  %347 = vdwg.mxu0
  %v348 = vadd.f32 %v231, %v344
  %v349 = vadd.f32 %v233, %v346
  %v350 = vld [vmem:[#allocation2] sm:$0xff]
  %v351 = vld [vmem:[#allocation2 + $0x8] sm:$0xf]
  %352 = vrot.lane.b32.xlu0 %v56, 16
  %v353 = vpop.permute.xlu0 %352
  %v354 = vrot.slane %v353, 4
  %vm355 = vcmask 130048
  %v356 = vsel %vm355, %v354, %v353
  %v359 = vmul.f32 %v350, %v356
  %v360 = vmul.f32 %v351, %v354
  %s361 = scalar_lea.vmem %s3, 12
  %v362 = vld [vmem:[%s361] sm:$0xf]
  %v365 = vcombine.high %v359, %v359
  %366 = vrot.lane.b32.xlu0 %v359, 112
  %v367 = vpop.permute.xlu0 %366
  %368 = vrot.lane.b32.xlu0 %v365, 112
  %v369 = vpop.permute.xlu0 %368
  %370 = vrot.lane.b32.xlu0 %v360, 112
  %v371 = vpop.permute.xlu0 %370
  %vm372 = vcmask 916480
  %v373 = vsel %vm372, %v367, %v369
  %v374 = vsel %vm372, %v369, %v371
  %v376 = vsel %vm75, %v362, 0
  %v378 = vsel %vm79, %v373, 0
  %v380 = vsel %vm79, %v374, 0
  %382 = vmatprep.subr.mxu0 %v380
  %383 = vmatpush1.msra.mxu0 %v378
  %384 = vmatprep.subr.mxu0 0.0
  %385 = vmatpush1.msra.mxu0 0.0
  %386 = vmatprep.subr.mxu0 0.0
  %387 = vmatpush1.msra.mxu0 0.0
  %388 = vmatprep.subr.mxu0 0.0
  %389 = vmatpush1.msra.mxu0 0.0
  %390 = vmatprep.subr.mxu0 0.0
  %391 = vmatpush1.msra.mxu0 0.0
  %392 = vmatprep.subr.mxu0 0.0
  %393 = vmatpush1.msra.mxu0 0.0
  %394 = vmatprep.subr.mxu0 0.0
  %395 = vmatpush1.msra.mxu0 0.0
  %396 = vmatprep.subr.mxu0 0.0
  %397 = vmatpush1.msra.mxu0 0.0
  %398 = vmatprep.subr.mxu0 0.0
  %399 = vmatpush1.msra.mxu0 0.0
  %400 = vmatprep.subr.mxu0 0.0
  %401 = vmatpush1.msra.mxu0 0.0
  %402 = vmatprep.subr.mxu0 0.0
  %403 = vmatpush1.msra.mxu0 0.0
  %404 = vmatprep.subr.mxu0 0.0
  %405 = vmatpush1.msra.mxu0 0.0
  %406 = vmatprep.subr.mxu0 0.0
  %407 = vmatpush1.msra.mxu0 0.0
  %408 = vmatprep.subr.mxu0 0.0
  %409 = vmatpush1.msra.mxu0 0.0
  %410 = vmatprep.subr.mxu0 0.0
  %411 = vmatpush1.msra.mxu0 0.0
  %412 = vmatprep.subr.mxu0 0.0
  %413 = vmatpush1.msra.mxu0 0.0
  %414 = vmatprep.subr.mxu0 0.0
  %415 = vmatpush1.msra.mxu0 0.0
  %416 = vmatprep.subr.mxu0 0.0
  %417 = vmatpush1.msra.mxu0 0.0
  %418 = vmatprep.subr.mxu0 0.0
  %419 = vmatpush1.msra.mxu0 0.0
  %420 = vmatprep.subr.mxu0 0.0
  %421 = vmatpush1.msra.mxu0 0.0
  %422 = vmatprep.subr.mxu0 0.0
  %423 = vmatpush1.msra.mxu0 0.0
  %424 = vmatprep.subr.mxu0 0.0
  %425 = vmatpush1.msra.mxu0 0.0
  %426 = vmatprep.subr.mxu0 0.0
  %427 = vmatpush1.msra.mxu0 0.0
  %428 = vmatprep.subr.mxu0 0.0
  %429 = vmatpush1.msra.mxu0 0.0
  %430 = vmatprep.subr.mxu0 0.0
  %431 = vmatpush1.msra.mxu0 0.0
  %432 = vmatprep.subr.mxu0 0.0
  %433 = vmatpush1.msra.mxu0 0.0
  %434 = vmatprep.subr.mxu0 0.0
  %435 = vmatpush1.msra.mxu0 0.0
  %436 = vmatprep.subr.mxu0 0.0
  %437 = vmatpush1.msra.mxu0 0.0
  %438 = vmatprep.subr.mxu0 0.0
  %439 = vmatpush1.msra.mxu0 0.0
  %440 = vmatprep.subr.mxu0 0.0
  %441 = vmatpush1.msra.mxu0 0.0
  %442 = vmatprep.subr.mxu0 0.0
  %443 = vmatpush1.msra.mxu0 0.0
  %444 = vmatprep.subr.mxu0 0.0
  %445 = vmatpush1.msra.mxu0 0.0
  %446 = vmatprep.mubr.f32.mxu0 0.0
  %447 = vmatmul.mubr.f32.gmra.mrb[0].mxu0 %v376
  %v448 = vpop.f32.mrb[0].mxu0
  %v449 = vadd.f32 0.0, %v448
  %v450 = vpop.f32.mrb[0].mxu0
  %v451 = vadd.f32 0.0, %v450
  %452 = vdwg.mxu0
  %v453 = vadd.f32 %v348, %v449
  %v454 = vadd.f32 %v349, %v451
  %v455 = vld [vmem:[#allocation2] sm:$0xff]
  %v456 = vld [vmem:[#allocation2 + $0x8] sm:$0xf]
  %s457 = scalar_lea.vmem %s3, 16
  %v458 = vld [vmem:[%s457] sm:$0xf]
  %v461 = vcombine.high %v455, %v455
  %462 = vrot.lane.b32.xlu0 %v455, 111
  %v463 = vpop.permute.xlu0 %462
  %464 = vrot.lane.b32.xlu0 %v461, 111
  %v465 = vpop.permute.xlu0 %464
  %466 = vrot.lane.b32.xlu0 %v456, 111
  %v467 = vpop.permute.xlu0 %466
  %vm468 = vcmask 908288
  %v469 = vsel %vm468, %v463, %v465
  %v470 = vsel %vm468, %v465, %v467
  %v472 = vsel %vm75, %v458, 0
  %v474 = vsel %vm79, %v469, 0
  %v476 = vsel %vm79, %v470, 0
  %478 = vmatprep.subr.mxu0 %v476
  %479 = vmatpush1.msra.mxu0 %v474
  %480 = vmatprep.subr.mxu0 0.0
  %481 = vmatpush1.msra.mxu0 0.0
  %482 = vmatprep.subr.mxu0 0.0
  %483 = vmatpush1.msra.mxu0 0.0
  %484 = vmatprep.subr.mxu0 0.0
  %485 = vmatpush1.msra.mxu0 0.0
  %486 = vmatprep.subr.mxu0 0.0
  %487 = vmatpush1.msra.mxu0 0.0
  %488 = vmatprep.subr.mxu0 0.0
  %489 = vmatpush1.msra.mxu0 0.0
  %490 = vmatprep.subr.mxu0 0.0
  %491 = vmatpush1.msra.mxu0 0.0
  %492 = vmatprep.subr.mxu0 0.0
  %493 = vmatpush1.msra.mxu0 0.0
  %494 = vmatprep.subr.mxu0 0.0
  %495 = vmatpush1.msra.mxu0 0.0
  %496 = vmatprep.subr.mxu0 0.0
  %497 = vmatpush1.msra.mxu0 0.0
  %498 = vmatprep.subr.mxu0 0.0
  %499 = vmatpush1.msra.mxu0 0.0
  %500 = vmatprep.subr.mxu0 0.0
  %501 = vmatpush1.msra.mxu0 0.0
  %502 = vmatprep.subr.mxu0 0.0
  %503 = vmatpush1.msra.mxu0 0.0
  %504 = vmatprep.subr.mxu0 0.0
  %505 = vmatpush1.msra.mxu0 0.0
  %506 = vmatprep.subr.mxu0 0.0
  %507 = vmatpush1.msra.mxu0 0.0
  %508 = vmatprep.subr.mxu0 0.0
  %509 = vmatpush1.msra.mxu0 0.0
  %510 = vmatprep.subr.mxu0 0.0
  %511 = vmatpush1.msra.mxu0 0.0
  %512 = vmatprep.subr.mxu0 0.0
  %513 = vmatpush1.msra.mxu0 0.0
  %514 = vmatprep.subr.mxu0 0.0
  %515 = vmatpush1.msra.mxu0 0.0
  %516 = vmatprep.subr.mxu0 0.0
  %517 = vmatpush1.msra.mxu0 0.0
  %518 = vmatprep.subr.mxu0 0.0
  %519 = vmatpush1.msra.mxu0 0.0
  %520 = vmatprep.subr.mxu0 0.0
  %521 = vmatpush1.msra.mxu0 0.0
  %522 = vmatprep.subr.mxu0 0.0
  %523 = vmatpush1.msra.mxu0 0.0
  %524 = vmatprep.subr.mxu0 0.0
  %525 = vmatpush1.msra.mxu0 0.0
  %526 = vmatprep.subr.mxu0 0.0
  %527 = vmatpush1.msra.mxu0 0.0
  %528 = vmatprep.subr.mxu0 0.0
  %529 = vmatpush1.msra.mxu0 0.0
  %530 = vmatprep.subr.mxu0 0.0
  %531 = vmatpush1.msra.mxu0 0.0
  %532 = vmatprep.subr.mxu0 0.0
  %533 = vmatpush1.msra.mxu0 0.0
  %534 = vmatprep.subr.mxu0 0.0
  %535 = vmatpush1.msra.mxu0 0.0
  %536 = vmatprep.subr.mxu0 0.0
  %537 = vmatpush1.msra.mxu0 0.0
  %538 = vmatprep.subr.mxu0 0.0
  %539 = vmatpush1.msra.mxu0 0.0
  %540 = vmatprep.subr.mxu0 0.0
  %541 = vmatpush1.msra.mxu0 0.0
  %542 = vmatprep.mubr.f32.mxu0 0.0
  %543 = vmatmul.mubr.f32.gmra.mrb[0].mxu0 %v472
  %v544 = vpop.f32.mrb[0].mxu0
  %v545 = vadd.f32 0.0, %v544
  %v546 = vpop.f32.mrb[0].mxu0
  %v547 = vadd.f32 0.0, %v546
  %548 = vdwg.mxu0
  %v549 = vadd.f32 %v453, %v545
  %v550 = vadd.f32 %v454, %v547
  %v551 = vld [vmem:[#allocation2] sm:$0xff]
  %v552 = vld [vmem:[#allocation2 + $0x8] sm:$0xf]
  %553 = vrot.lane.b32.xlu0 %v246, 18
  %v554 = vpop.permute.xlu0 %553
  %v555 = vrot.slane %v554, 4
  %vm556 = vcmask 146432
  %v557 = vsel %vm556, %v555, %v554
  %v560 = vmul.f32 %v551, %v557
  %v561 = vmul.f32 %v552, %v555
  %s562 = scalar_lea.vmem %s3, 20
  %v563 = vld [vmem:[%s562] sm:$0xf]
  %v566 = vcombine.high %v560, %v560
  %567 = vrot.lane.b32.xlu0 %v560, 110
  %v568 = vpop.permute.xlu0 %567
  %569 = vrot.lane.b32.xlu0 %v566, 110
  %v570 = vpop.permute.xlu0 %569
  %571 = vrot.lane.b32.xlu0 %v561, 110
  %v572 = vpop.permute.xlu0 %571
  %vm573 = vcmask 900096
  %v574 = vsel %vm573, %v568, %v570
  %v575 = vsel %vm573, %v570, %v572
  %v577 = vsel %vm75, %v563, 0
  %v579 = vsel %vm79, %v574, 0
  %v581 = vsel %vm79, %v575, 0
  %583 = vmatprep.subr.mxu0 %v581
  %584 = vmatpush1.msra.mxu0 %v579
  %585 = vmatprep.subr.mxu0 0.0
  %586 = vmatpush1.msra.mxu0 0.0
  %587 = vmatprep.subr.mxu0 0.0
  %588 = vmatpush1.msra.mxu0 0.0
  %589 = vmatprep.subr.mxu0 0.0
  %590 = vmatpush1.msra.mxu0 0.0
  %591 = vmatprep.subr.mxu0 0.0
  %592 = vmatpush1.msra.mxu0 0.0
  %593 = vmatprep.subr.mxu0 0.0
  %594 = vmatpush1.msra.mxu0 0.0
  %595 = vmatprep.subr.mxu0 0.0
  %596 = vmatpush1.msra.mxu0 0.0
  %597 = vmatprep.subr.mxu0 0.0
  %598 = vmatpush1.msra.mxu0 0.0
  %599 = vmatprep.subr.mxu0 0.0
  %600 = vmatpush1.msra.mxu0 0.0
  %601 = vmatprep.subr.mxu0 0.0
  %602 = vmatpush1.msra.mxu0 0.0
  %603 = vmatprep.subr.mxu0 0.0
  %604 = vmatpush1.msra.mxu0 0.0
  %605 = vmatprep.subr.mxu0 0.0
  %606 = vmatpush1.msra.mxu0 0.0
  %607 = vmatprep.subr.mxu0 0.0
  %608 = vmatpush1.msra.mxu0 0.0
  %609 = vmatprep.subr.mxu0 0.0
  %610 = vmatpush1.msra.mxu0 0.0
  %611 = vmatprep.subr.mxu0 0.0
  %612 = vmatpush1.msra.mxu0 0.0
  %613 = vmatprep.subr.mxu0 0.0
  %614 = vmatpush1.msra.mxu0 0.0
  %615 = vmatprep.subr.mxu0 0.0
  %616 = vmatpush1.msra.mxu0 0.0
  %617 = vmatprep.subr.mxu0 0.0
  %618 = vmatpush1.msra.mxu0 0.0
  %619 = vmatprep.subr.mxu0 0.0
  %620 = vmatpush1.msra.mxu0 0.0
  %621 = vmatprep.subr.mxu0 0.0
  %622 = vmatpush1.msra.mxu0 0.0
  %623 = vmatprep.subr.mxu0 0.0
  %624 = vmatpush1.msra.mxu0 0.0
  %625 = vmatprep.subr.mxu0 0.0
  %626 = vmatpush1.msra.mxu0 0.0
  %627 = vmatprep.subr.mxu0 0.0
  %628 = vmatpush1.msra.mxu0 0.0
  %629 = vmatprep.subr.mxu0 0.0
  %630 = vmatpush1.msra.mxu0 0.0
  %631 = vmatprep.subr.mxu0 0.0
  %632 = vmatpush1.msra.mxu0 0.0
  %633 = vmatprep.subr.mxu0 0.0
  %634 = vmatpush1.msra.mxu0 0.0
  %635 = vmatprep.subr.mxu0 0.0
  %636 = vmatpush1.msra.mxu0 0.0
  %637 = vmatprep.subr.mxu0 0.0
  %638 = vmatpush1.msra.mxu0 0.0
  %639 = vmatprep.subr.mxu0 0.0
  %640 = vmatpush1.msra.mxu0 0.0
  %641 = vmatprep.subr.mxu0 0.0
  %642 = vmatpush1.msra.mxu0 0.0
  %643 = vmatprep.subr.mxu0 0.0
  %644 = vmatpush1.msra.mxu0 0.0
  %645 = vmatprep.subr.mxu0 0.0
  %646 = vmatpush1.msra.mxu0 0.0
  %647 = vmatprep.mubr.f32.mxu0 0.0
  %648 = vmatmul.mubr.f32.gmra.mrb[0].mxu0 %v577
  %v649 = vpop.f32.mrb[0].mxu0
  %v650 = vadd.f32 0.0, %v649
  %v651 = vpop.f32.mrb[0].mxu0
  %v652 = vadd.f32 0.0, %v651
  %653 = vdwg.mxu0
  %v654 = vadd.f32 %v549, %v650
  %v655 = vadd.f32 %v550, %v652
  %v656 = vld [vmem:[#allocation2] sm:$0xff]
  %v657 = vld [vmem:[#allocation2 + $0x8] sm:$0xf]
  %658 = vrot.lane.b32.xlu0 %v56, 32
  %v659 = vpop.permute.xlu0 %658
  %v660 = vrot.slane %v659, 4
  %vm661 = vcmask 261120
  %v662 = vsel %vm661, %v660, %v659
  %v665 = vmul.f32 %v656, %v662
  %v666 = vmul.f32 %v657, %v660
  %s667 = scalar_lea.vmem %s3, 24
  %v668 = vld [vmem:[%s667] sm:$0xf]
  %v671 = vcombine.high %v665, %v665
  %672 = vrot.lane.b32.xlu0 %v665, 96
  %v673 = vpop.permute.xlu0 %672
  %674 = vrot.lane.b32.xlu0 %v671, 96
  %v675 = vpop.permute.xlu0 %674
  %676 = vrot.lane.b32.xlu0 %v666, 96
  %v677 = vpop.permute.xlu0 %676
  %vm678 = vcmask 785408
  %v679 = vsel %vm678, %v673, %v675
  %v680 = vsel %vm678, %v675, %v677
  %v682 = vsel %vm75, %v668, 0
  %v684 = vsel %vm79, %v679, 0
  %v686 = vsel %vm79, %v680, 0
  %688 = vmatprep.subr.mxu0 %v686
  %689 = vmatpush1.msra.mxu0 %v684
  %690 = vmatprep.subr.mxu0 0.0
  %691 = vmatpush1.msra.mxu0 0.0
  %692 = vmatprep.subr.mxu0 0.0
  %693 = vmatpush1.msra.mxu0 0.0
  %694 = vmatprep.subr.mxu0 0.0
  %695 = vmatpush1.msra.mxu0 0.0
  %696 = vmatprep.subr.mxu0 0.0
  %697 = vmatpush1.msra.mxu0 0.0
  %698 = vmatprep.subr.mxu0 0.0
  %699 = vmatpush1.msra.mxu0 0.0
  %700 = vmatprep.subr.mxu0 0.0
  %701 = vmatpush1.msra.mxu0 0.0
  %702 = vmatprep.subr.mxu0 0.0
  %703 = vmatpush1.msra.mxu0 0.0
  %704 = vmatprep.subr.mxu0 0.0
  %705 = vmatpush1.msra.mxu0 0.0
  %706 = vmatprep.subr.mxu0 0.0
  %707 = vmatpush1.msra.mxu0 0.0
  %708 = vmatprep.subr.mxu0 0.0
  %709 = vmatpush1.msra.mxu0 0.0
  %710 = vmatprep.subr.mxu0 0.0
  %711 = vmatpush1.msra.mxu0 0.0
  %712 = vmatprep.subr.mxu0 0.0
  %713 = vmatpush1.msra.mxu0 0.0
  %714 = vmatprep.subr.mxu0 0.0
  %715 = vmatpush1.msra.mxu0 0.0
  %716 = vmatprep.subr.mxu0 0.0
  %717 = vmatpush1.msra.mxu0 0.0
  %718 = vmatprep.subr.mxu0 0.0
  %719 = vmatpush1.msra.mxu0 0.0
  %720 = vmatprep.subr.mxu0 0.0
  %721 = vmatpush1.msra.mxu0 0.0
  %722 = vmatprep.subr.mxu0 0.0
  %723 = vmatpush1.msra.mxu0 0.0
  %724 = vmatprep.subr.mxu0 0.0
  %725 = vmatpush1.msra.mxu0 0.0
  %726 = vmatprep.subr.mxu0 0.0
  %727 = vmatpush1.msra.mxu0 0.0
  %728 = vmatprep.subr.mxu0 0.0
  %729 = vmatpush1.msra.mxu0 0.0
  %730 = vmatprep.subr.mxu0 0.0
  %731 = vmatpush1.msra.mxu0 0.0
  %732 = vmatprep.subr.mxu0 0.0
  %733 = vmatpush1.msra.mxu0 0.0
  %734 = vmatprep.subr.mxu0 0.0
  %735 = vmatpush1.msra.mxu0 0.0
  %736 = vmatprep.subr.mxu0 0.0
  %737 = vmatpush1.msra.mxu0 0.0
  %738 = vmatprep.subr.mxu0 0.0
  %739 = vmatpush1.msra.mxu0 0.0
  %740 = vmatprep.subr.mxu0 0.0
  %741 = vmatpush1.msra.mxu0 0.0
  %742 = vmatprep.subr.mxu0 0.0
  %743 = vmatpush1.msra.mxu0 0.0
  %744 = vmatprep.subr.mxu0 0.0
  %745 = vmatpush1.msra.mxu0 0.0
  %746 = vmatprep.subr.mxu0 0.0
  %747 = vmatpush1.msra.mxu0 0.0
  %748 = vmatprep.subr.mxu0 0.0
  %749 = vmatpush1.msra.mxu0 0.0
  %750 = vmatprep.subr.mxu0 0.0
  %751 = vmatpush1.msra.mxu0 0.0
  %752 = vmatprep.mubr.f32.mxu0 0.0
  %753 = vmatmul.mubr.f32.gmra.mrb[0].mxu0 %v682
  %v754 = vpop.f32.mrb[0].mxu0
  %v755 = vadd.f32 0.0, %v754
  %v756 = vpop.f32.mrb[0].mxu0
  %v757 = vadd.f32 0.0, %v756
  %758 = vdwg.mxu0
  %v759 = vadd.f32 %v654, %v755
  %v760 = vadd.f32 %v655, %v757
  %v761 = vld [vmem:[#allocation2] sm:$0xff]
  %v762 = vld [vmem:[#allocation2 + $0x8] sm:$0xf]
  %s763 = scalar_lea.vmem %s3, 28
  %v764 = vld [vmem:[%s763] sm:$0xf]
  %v767 = vcombine.high %v761, %v761
  %768 = vrot.lane.b32.xlu0 %v761, 95
  %v769 = vpop.permute.xlu0 %768
  %770 = vrot.lane.b32.xlu0 %v767, 95
  %v771 = vpop.permute.xlu0 %770
  %772 = vrot.lane.b32.xlu0 %v762, 95
  %v773 = vpop.permute.xlu0 %772
  %vm774 = vcmask 777216
  %v775 = vsel %vm774, %v769, %v771
  %v776 = vsel %vm774, %v771, %v773
  %v778 = vsel %vm75, %v764, 0
  %v780 = vsel %vm79, %v775, 0
  %v782 = vsel %vm79, %v776, 0
  %784 = vmatprep.subr.mxu0 %v782
  %785 = vmatpush1.msra.mxu0 %v780
  %786 = vmatprep.subr.mxu0 0.0
  %787 = vmatpush1.msra.mxu0 0.0
  %788 = vmatprep.subr.mxu0 0.0
  %789 = vmatpush1.msra.mxu0 0.0
  %790 = vmatprep.subr.mxu0 0.0
  %791 = vmatpush1.msra.mxu0 0.0
  %792 = vmatprep.subr.mxu0 0.0
  %793 = vmatpush1.msra.mxu0 0.0
  %794 = vmatprep.subr.mxu0 0.0
  %795 = vmatpush1.msra.mxu0 0.0
  %796 = vmatprep.subr.mxu0 0.0
  %797 = vmatpush1.msra.mxu0 0.0
  %798 = vmatprep.subr.mxu0 0.0
  %799 = vmatpush1.msra.mxu0 0.0
  %800 = vmatprep.subr.mxu0 0.0
  %801 = vmatpush1.msra.mxu0 0.0
  %802 = vmatprep.subr.mxu0 0.0
  %803 = vmatpush1.msra.mxu0 0.0
  %804 = vmatprep.subr.mxu0 0.0
  %805 = vmatpush1.msra.mxu0 0.0
  %806 = vmatprep.subr.mxu0 0.0
  %807 = vmatpush1.msra.mxu0 0.0
  %808 = vmatprep.subr.mxu0 0.0
  %809 = vmatpush1.msra.mxu0 0.0
  %810 = vmatprep.subr.mxu0 0.0
  %811 = vmatpush1.msra.mxu0 0.0
  %812 = vmatprep.subr.mxu0 0.0
  %813 = vmatpush1.msra.mxu0 0.0
  %814 = vmatprep.subr.mxu0 0.0
  %815 = vmatpush1.msra.mxu0 0.0
  %816 = vmatprep.subr.mxu0 0.0
  %817 = vmatpush1.msra.mxu0 0.0
  %818 = vmatprep.subr.mxu0 0.0
  %819 = vmatpush1.msra.mxu0 0.0
  %820 = vmatprep.subr.mxu0 0.0
  %821 = vmatpush1.msra.mxu0 0.0
  %822 = vmatprep.subr.mxu0 0.0
  %823 = vmatpush1.msra.mxu0 0.0
  %824 = vmatprep.subr.mxu0 0.0
  %825 = vmatpush1.msra.mxu0 0.0
  %826 = vmatprep.subr.mxu0 0.0
  %827 = vmatpush1.msra.mxu0 0.0
  %828 = vmatprep.subr.mxu0 0.0
  %829 = vmatpush1.msra.mxu0 0.0
  %830 = vmatprep.subr.mxu0 0.0
  %831 = vmatpush1.msra.mxu0 0.0
  %832 = vmatprep.subr.mxu0 0.0
  %833 = vmatpush1.msra.mxu0 0.0
  %834 = vmatprep.subr.mxu0 0.0
  %835 = vmatpush1.msra.mxu0 0.0
  %836 = vmatprep.subr.mxu0 0.0
  %837 = vmatpush1.msra.mxu0 0.0
  %838 = vmatprep.subr.mxu0 0.0
  %839 = vmatpush1.msra.mxu0 0.0
  %840 = vmatprep.subr.mxu0 0.0
  %841 = vmatpush1.msra.mxu0 0.0
  %842 = vmatprep.subr.mxu0 0.0
  %843 = vmatpush1.msra.mxu0 0.0
  %844 = vmatprep.subr.mxu0 0.0
  %845 = vmatpush1.msra.mxu0 0.0
  %846 = vmatprep.subr.mxu0 0.0
  %847 = vmatpush1.msra.mxu0 0.0
  %848 = vmatprep.mubr.f32.mxu0 0.0
  %849 = vmatmul.mubr.f32.gmra.mrb[0].mxu0 %v778
  %v850 = vpop.f32.mrb[0].mxu0
  %v851 = vadd.f32 0.0, %v850
  %v852 = vpop.f32.mrb[0].mxu0
  %v853 = vadd.f32 0.0, %v852
  %854 = vdwg.mxu0
  %v855 = vadd.f32 %v759, %v851
  %v856 = vadd.f32 %v760, %v853
  %v857 = vld [vmem:[#allocation2] sm:$0xff]
  %v858 = vld [vmem:[#allocation2 + $0x8] sm:$0xf]
  %859 = vrot.lane.b32.xlu0 %v246, 34
  %v860 = vpop.permute.xlu0 %859
  %v861 = vrot.slane %v860, 4
  %vm862 = vcmask 277504
  %v863 = vsel %vm862, %v861, %v860
  %v866 = vmul.f32 %v857, %v863
  %v867 = vmul.f32 %v858, %v861
  %s868 = scalar_lea.vmem %s3, 32
  %v869 = vld [vmem:[%s868] sm:$0xf]
  %v872 = vcombine.high %v866, %v866
  %873 = vrot.lane.b32.xlu0 %v866, 94
  %v874 = vpop.permute.xlu0 %873
  %875 = vrot.lane.b32.xlu0 %v872, 94
  %v876 = vpop.permute.xlu0 %875
  %877 = vrot.lane.b32.xlu0 %v867, 94
  %v878 = vpop.permute.xlu0 %877
  %vm879 = vcmask 769024
  %v880 = vsel %vm879, %v874, %v876
  %v881 = vsel %vm879, %v876, %v878
  %v883 = vsel %vm75, %v869, 0
  %v885 = vsel %vm79, %v880, 0
  %v887 = vsel %vm79, %v881, 0
  %889 = vmatprep.subr.mxu0 %v887
  %890 = vmatpush1.msra.mxu0 %v885
  %891 = vmatprep.subr.mxu0 0.0
  %892 = vmatpush1.msra.mxu0 0.0
  %893 = vmatprep.subr.mxu0 0.0
  %894 = vmatpush1.msra.mxu0 0.0
  %895 = vmatprep.subr.mxu0 0.0
  %896 = vmatpush1.msra.mxu0 0.0
  %897 = vmatprep.subr.mxu0 0.0
  %898 = vmatpush1.msra.mxu0 0.0
  %899 = vmatprep.subr.mxu0 0.0
  %900 = vmatpush1.msra.mxu0 0.0
  %901 = vmatprep.subr.mxu0 0.0
  %902 = vmatpush1.msra.mxu0 0.0
  %903 = vmatprep.subr.mxu0 0.0
  %904 = vmatpush1.msra.mxu0 0.0
  %905 = vmatprep.subr.mxu0 0.0
  %906 = vmatpush1.msra.mxu0 0.0
  %907 = vmatprep.subr.mxu0 0.0
  %908 = vmatpush1.msra.mxu0 0.0
  %909 = vmatprep.subr.mxu0 0.0
  %910 = vmatpush1.msra.mxu0 0.0
  %911 = vmatprep.subr.mxu0 0.0
  %912 = vmatpush1.msra.mxu0 0.0
  %913 = vmatprep.subr.mxu0 0.0
  %914 = vmatpush1.msra.mxu0 0.0
  %915 = vmatprep.subr.mxu0 0.0
  %916 = vmatpush1.msra.mxu0 0.0
  %917 = vmatprep.subr.mxu0 0.0
  %918 = vmatpush1.msra.mxu0 0.0
  %919 = vmatprep.subr.mxu0 0.0
  %920 = vmatpush1.msra.mxu0 0.0
  %921 = vmatprep.subr.mxu0 0.0
  %922 = vmatpush1.msra.mxu0 0.0
  %923 = vmatprep.subr.mxu0 0.0
  %924 = vmatpush1.msra.mxu0 0.0
  %925 = vmatprep.subr.mxu0 0.0
  %926 = vmatpush1.msra.mxu0 0.0
  %927 = vmatprep.subr.mxu0 0.0
  %928 = vmatpush1.msra.mxu0 0.0
  %929 = vmatprep.subr.mxu0 0.0
  %930 = vmatpush1.msra.mxu0 0.0
  %931 = vmatprep.subr.mxu0 0.0
  %932 = vmatpush1.msra.mxu0 0.0
  %933 = vmatprep.subr.mxu0 0.0
  %934 = vmatpush1.msra.mxu0 0.0
  %935 = vmatprep.subr.mxu0 0.0
  %936 = vmatpush1.msra.mxu0 0.0
  %937 = vmatprep.subr.mxu0 0.0
  %938 = vmatpush1.msra.mxu0 0.0
  %939 = vmatprep.subr.mxu0 0.0
  %940 = vmatpush1.msra.mxu0 0.0
  %941 = vmatprep.subr.mxu0 0.0
  %942 = vmatpush1.msra.mxu0 0.0
  %943 = vmatprep.subr.mxu0 0.0
  %944 = vmatpush1.msra.mxu0 0.0
  %945 = vmatprep.subr.mxu0 0.0
  %946 = vmatpush1.msra.mxu0 0.0
  %947 = vmatprep.subr.mxu0 0.0
  %948 = vmatpush1.msra.mxu0 0.0
  %949 = vmatprep.subr.mxu0 0.0
  %950 = vmatpush1.msra.mxu0 0.0
  %951 = vmatprep.subr.mxu0 0.0
  %952 = vmatpush1.msra.mxu0 0.0
  %953 = vmatprep.mubr.f32.mxu0 0.0
  %954 = vmatmul.mubr.f32.gmra.mrb[0].mxu0 %v883
  %v955 = vpop.f32.mrb[0].mxu0
  %v956 = vadd.f32 0.0, %v955
  %v957 = vpop.f32.mrb[0].mxu0
  %v958 = vadd.f32 0.0, %v957
  %959 = vdwg.mxu0
  %v960 = vadd.f32 %v855, %v956
  %v961 = vadd.f32 %v856, %v958
  %v962 = vld [vmem:[%s4] sm:$0xf]
  %964 = vset.pattern.permute.xlu0 0
  %965 = vperm.xlu0 %964, %v962
  %v966 = vpop.permute.xlu0 %965
  %v968 = vadd.f32 %v960, %v966
  %v969 = vadd.f32 %v961, %v966
  %v972 = vcombine.low %v968, %v969
  %974 = vst [vmem:[%s6] sm:$0xff] %v972
  %v975 = vsel %vm79, %v968, 0.0
  %v976 = vsel %vm79, %v969, 0.0
  %v977 = vadd.f32 %v975, %v976
  %978 = vadd.xlane.f32.xlu0 %v977
  %v979 = vpop.xlane.xlu0 %978
  %v980 = vadd.f32 %v979, 0.0
  %v981 = vmul.f32 %v968, %v968
  %v982 = vmul.f32 %v969, %v969
  %v983 = vsel %vm79, %v981, 0.0
  %v984 = vsel %vm79, %v982, 0.0
  %v985 = vadd.f32 %v983, %v984
  %986 = vadd.xlane.f32.xlu0 %v985
  %v987 = vpop.xlane.xlu0 %986
  %v988 = vadd.f32 %v987, 0.0
  %s989 = scalar_lea.vmem %s0, 8
  %v990 = vld [vmem:[%s989] sm:$0xff]
  %s991 = scalar_lea.vmem [#allocation2], 12
  %992 = vst.msk [vmem:[%s991] sm:$0xf] %vm29, 0.0
  %993 = vst.msk [vmem:[%s991 + $0x8] sm:$0xf] %vm31, 0.0
  %995 = vrot.lane.b32.xlu0 %v990, 17
  %v996 = vpop.permute.xlu0 %995
  %v997 = vrot.slane %v996, 4
  %v998 = vsel %vm37, %v997, %v996
  %1001 = vst.msk [vmem:[%s991] sm:$0xff] %vm43, %v998
  %1002 = vst.msk [vmem:[%s991 + $0x8] sm:$0xf] %vm29, %v997
  %v1003 = vld [vmem:[%s991] sm:$0xff]
  %v1004 = vmul.f32 %v1003, %v56
  %v1005 = vld [vmem:[%s3] sm:$0xf]
  %v1006 = vld [vmem:[%s991 + $0x8] sm:$0xf]
  %v1007 = vld [vmem:[%s61] sm:$0xf]
  %v1010 = vcombine.high %v1003, %v1003
  %1011 = vrot.lane.b32.xlu0 %v1003, 127
  %v1012 = vpop.permute.xlu0 %1011
  %1013 = vrot.lane.b32.xlu0 %v1010, 127
  %v1014 = vpop.permute.xlu0 %1013
  %1015 = vrot.lane.b32.xlu0 %v1006, 127
  %v1016 = vpop.permute.xlu0 %1015
  %v1017 = vsel %vm72, %v1012, %v1014
  %v1018 = vsel %vm72, %v1014, %v1016
  %v1020 = vsel %vm75, %v1007, 0
  %v1022 = vsel %vm79, %v1017, 0
  %v1024 = vsel %vm79, %v1018, 0
  %1026 = vmatprep.subr.mxu0 %v1024
  %1027 = vmatpush1.msra.mxu0 %v1022
  %1028 = vmatprep.subr.mxu0 0.0
  %1029 = vmatpush1.msra.mxu0 0.0
  %1030 = vmatprep.subr.mxu0 0.0
  %1031 = vmatpush1.msra.mxu0 0.0
  %1032 = vmatprep.subr.mxu0 0.0
  %1033 = vmatpush1.msra.mxu0 0.0
  %1034 = vmatprep.subr.mxu0 0.0
  %1035 = vmatpush1.msra.mxu0 0.0
  %1036 = vmatprep.subr.mxu0 0.0
  %1037 = vmatpush1.msra.mxu0 0.0
  %1038 = vmatprep.subr.mxu0 0.0
  %1039 = vmatpush1.msra.mxu0 0.0
  %1040 = vmatprep.subr.mxu0 0.0
  %1041 = vmatpush1.msra.mxu0 0.0
  %1042 = vmatprep.subr.mxu0 0.0
  %1043 = vmatpush1.msra.mxu0 0.0
  %1044 = vmatprep.subr.mxu0 0.0
  %1045 = vmatpush1.msra.mxu0 0.0
  %1046 = vmatprep.subr.mxu0 0.0
  %1047 = vmatpush1.msra.mxu0 0.0
  %1048 = vmatprep.subr.mxu0 0.0
  %1049 = vmatpush1.msra.mxu0 0.0
  %1050 = vmatprep.subr.mxu0 0.0
  %1051 = vmatpush1.msra.mxu0 0.0
  %1052 = vmatprep.subr.mxu0 0.0
  %1053 = vmatpush1.msra.mxu0 0.0
  %1054 = vmatprep.subr.mxu0 0.0
  %1055 = vmatpush1.msra.mxu0 0.0
  %1056 = vmatprep.subr.mxu0 0.0
  %1057 = vmatpush1.msra.mxu0 0.0
  %1058 = vmatprep.subr.mxu0 0.0
  %1059 = vmatpush1.msra.mxu0 0.0
  %1060 = vmatprep.subr.mxu0 0.0
  %1061 = vmatpush1.msra.mxu0 0.0
  %1062 = vmatprep.subr.mxu0 0.0
  %1063 = vmatpush1.msra.mxu0 0.0
  %1064 = vmatprep.subr.mxu0 0.0
  %1065 = vmatpush1.msra.mxu0 0.0
  %1066 = vmatprep.subr.mxu0 0.0
  %1067 = vmatpush1.msra.mxu0 0.0
  %1068 = vmatprep.subr.mxu0 0.0
  %1069 = vmatpush1.msra.mxu0 0.0
  %1070 = vmatprep.subr.mxu0 0.0
  %1071 = vmatpush1.msra.mxu0 0.0
  %1072 = vmatprep.subr.mxu0 0.0
  %1073 = vmatpush1.msra.mxu0 0.0
  %1074 = vmatprep.subr.mxu0 0.0
  %1075 = vmatpush1.msra.mxu0 0.0
  %1076 = vmatprep.subr.mxu0 0.0
  %1077 = vmatpush1.msra.mxu0 0.0
  %1078 = vmatprep.subr.mxu0 0.0
  %1079 = vmatpush1.msra.mxu0 0.0
  %1080 = vmatprep.subr.mxu0 0.0
  %1081 = vmatpush1.msra.mxu0 0.0
  %1082 = vmatprep.subr.mxu0 0.0
  %1083 = vmatpush1.msra.mxu0 0.0
  %1084 = vmatprep.subr.mxu0 0.0
  %1085 = vmatpush1.msra.mxu0 0.0
  %1086 = vmatprep.subr.mxu0 0.0
  %1087 = vmatpush1.msra.mxu0 0.0
  %1088 = vmatprep.subr.mxu0 0.0
  %1089 = vmatpush1.msra.mxu0 0.0
  %1090 = vmatprep.mubr.f32.mxu0 0.0
  %1091 = vmatmul.mubr.f32.gmra.mrb[0].mxu0 %v1020
  %v1092 = vpop.f32.mrb[0].mxu0
  %v1093 = vadd.f32 0.0, %v1092
  %v1094 = vpop.f32.mrb[0].mxu0
  %v1095 = vadd.f32 0.0, %v1094
  %1096 = vdwg.mxu0
  %v1098 = vcombine.high %v1004, %v1004
  %v1100 = vsel %vm75, %v1005, 0
  %v1102 = vsel %vm79, %v1004, 0
  %v1104 = vsel %vm79, %v1098, 0
  %1106 = vmatprep.subr.mxu0 %v1104
  %1107 = vmatpush1.msra.mxu0 %v1102
  %1108 = vmatprep.subr.mxu0 0.0
  %1109 = vmatpush1.msra.mxu0 0.0
  %1110 = vmatprep.subr.mxu0 0.0
  %1111 = vmatpush1.msra.mxu0 0.0
  %1112 = vmatprep.subr.mxu0 0.0
  %1113 = vmatpush1.msra.mxu0 0.0
  %1114 = vmatprep.subr.mxu0 0.0
  %1115 = vmatpush1.msra.mxu0 0.0
  %1116 = vmatprep.subr.mxu0 0.0
  %1117 = vmatpush1.msra.mxu0 0.0
  %1118 = vmatprep.subr.mxu0 0.0
  %1119 = vmatpush1.msra.mxu0 0.0
  %1120 = vmatprep.subr.mxu0 0.0
  %1121 = vmatpush1.msra.mxu0 0.0
  %1122 = vmatprep.subr.mxu0 0.0
  %1123 = vmatpush1.msra.mxu0 0.0
  %1124 = vmatprep.subr.mxu0 0.0
  %1125 = vmatpush1.msra.mxu0 0.0
  %1126 = vmatprep.subr.mxu0 0.0
  %1127 = vmatpush1.msra.mxu0 0.0
  %1128 = vmatprep.subr.mxu0 0.0
  %1129 = vmatpush1.msra.mxu0 0.0
  %1130 = vmatprep.subr.mxu0 0.0
  %1131 = vmatpush1.msra.mxu0 0.0
  %1132 = vmatprep.subr.mxu0 0.0
  %1133 = vmatpush1.msra.mxu0 0.0
  %1134 = vmatprep.subr.mxu0 0.0
  %1135 = vmatpush1.msra.mxu0 0.0
  %1136 = vmatprep.subr.mxu0 0.0
  %1137 = vmatpush1.msra.mxu0 0.0
  %1138 = vmatprep.subr.mxu0 0.0
  %1139 = vmatpush1.msra.mxu0 0.0
  %1140 = vmatprep.subr.mxu0 0.0
  %1141 = vmatpush1.msra.mxu0 0.0
  %1142 = vmatprep.subr.mxu0 0.0
  %1143 = vmatpush1.msra.mxu0 0.0
  %1144 = vmatprep.subr.mxu0 0.0
  %1145 = vmatpush1.msra.mxu0 0.0
  %1146 = vmatprep.subr.mxu0 0.0
  %1147 = vmatpush1.msra.mxu0 0.0
  %1148 = vmatprep.subr.mxu0 0.0
  %1149 = vmatpush1.msra.mxu0 0.0
  %1150 = vmatprep.subr.mxu0 0.0
  %1151 = vmatpush1.msra.mxu0 0.0
  %1152 = vmatprep.subr.mxu0 0.0
  %1153 = vmatpush1.msra.mxu0 0.0
  %1154 = vmatprep.subr.mxu0 0.0
  %1155 = vmatpush1.msra.mxu0 0.0
  %1156 = vmatprep.subr.mxu0 0.0
  %1157 = vmatpush1.msra.mxu0 0.0
  %1158 = vmatprep.subr.mxu0 0.0
  %1159 = vmatpush1.msra.mxu0 0.0
  %1160 = vmatprep.subr.mxu0 0.0
  %1161 = vmatpush1.msra.mxu0 0.0
  %1162 = vmatprep.subr.mxu0 0.0
  %1163 = vmatpush1.msra.mxu0 0.0
  %1164 = vmatprep.subr.mxu0 0.0
  %1165 = vmatpush1.msra.mxu0 0.0
  %1166 = vmatprep.subr.mxu0 0.0
  %1167 = vmatpush1.msra.mxu0 0.0
  %1168 = vmatprep.subr.mxu0 0.0
  %1169 = vmatpush1.msra.mxu0 0.0
  %1170 = vmatprep.mubr.f32.mxu0 0.0
  %1171 = vmatmul.mubr.f32.gmra.mrb[0].mxu0 %v1100
  %v1172 = vpop.f32.mrb[0].mxu0
  %v1173 = vadd.f32 %v1093, %v1172
  %v1174 = vpop.f32.mrb[0].mxu0
  %v1175 = vadd.f32 %v1095, %v1174
  %1176 = vdwg.mxu0
  %v1177 = vld [vmem:[%s991] sm:$0xff]
  %v1178 = vld [vmem:[%s991 + $0x8] sm:$0xf]
  %v1179 = vmul.f32 %v1177, %v251
  %v1180 = vmul.f32 %v1178, %v249
  %v1181 = vld [vmem:[%s256] sm:$0xf]
  %v1184 = vcombine.high %v1179, %v1179
  %1185 = vrot.lane.b32.xlu0 %v1179, 126
  %v1186 = vpop.permute.xlu0 %1185
  %1187 = vrot.lane.b32.xlu0 %v1184, 126
  %v1188 = vpop.permute.xlu0 %1187
  %1189 = vrot.lane.b32.xlu0 %v1180, 126
  %v1190 = vpop.permute.xlu0 %1189
  %v1191 = vsel %vm267, %v1186, %v1188
  %v1192 = vsel %vm267, %v1188, %v1190
  %v1194 = vsel %vm75, %v1181, 0
  %v1196 = vsel %vm79, %v1191, 0
  %v1198 = vsel %vm79, %v1192, 0
  %1200 = vmatprep.subr.mxu0 %v1198
  %1201 = vmatpush1.msra.mxu0 %v1196
  %1202 = vmatprep.subr.mxu0 0.0
  %1203 = vmatpush1.msra.mxu0 0.0
  %1204 = vmatprep.subr.mxu0 0.0
  %1205 = vmatpush1.msra.mxu0 0.0
  %1206 = vmatprep.subr.mxu0 0.0
  %1207 = vmatpush1.msra.mxu0 0.0
  %1208 = vmatprep.subr.mxu0 0.0
  %1209 = vmatpush1.msra.mxu0 0.0
  %1210 = vmatprep.subr.mxu0 0.0
  %1211 = vmatpush1.msra.mxu0 0.0
  %1212 = vmatprep.subr.mxu0 0.0
  %1213 = vmatpush1.msra.mxu0 0.0
  %1214 = vmatprep.subr.mxu0 0.0
  %1215 = vmatpush1.msra.mxu0 0.0
  %1216 = vmatprep.subr.mxu0 0.0
  %1217 = vmatpush1.msra.mxu0 0.0
  %1218 = vmatprep.subr.mxu0 0.0
  %1219 = vmatpush1.msra.mxu0 0.0
  %1220 = vmatprep.subr.mxu0 0.0
  %1221 = vmatpush1.msra.mxu0 0.0
  %1222 = vmatprep.subr.mxu0 0.0
  %1223 = vmatpush1.msra.mxu0 0.0
  %1224 = vmatprep.subr.mxu0 0.0
  %1225 = vmatpush1.msra.mxu0 0.0
  %1226 = vmatprep.subr.mxu0 0.0
  %1227 = vmatpush1.msra.mxu0 0.0
  %1228 = vmatprep.subr.mxu0 0.0
  %1229 = vmatpush1.msra.mxu0 0.0
  %1230 = vmatprep.subr.mxu0 0.0
  %1231 = vmatpush1.msra.mxu0 0.0
  %1232 = vmatprep.subr.mxu0 0.0
  %1233 = vmatpush1.msra.mxu0 0.0
  %1234 = vmatprep.subr.mxu0 0.0
  %1235 = vmatpush1.msra.mxu0 0.0
  %1236 = vmatprep.subr.mxu0 0.0
  %1237 = vmatpush1.msra.mxu0 0.0
  %1238 = vmatprep.subr.mxu0 0.0
  %1239 = vmatpush1.msra.mxu0 0.0
  %1240 = vmatprep.subr.mxu0 0.0
  %1241 = vmatpush1.msra.mxu0 0.0
  %1242 = vmatprep.subr.mxu0 0.0
  %1243 = vmatpush1.msra.mxu0 0.0
  %1244 = vmatprep.subr.mxu0 0.0
  %1245 = vmatpush1.msra.mxu0 0.0
  %1246 = vmatprep.subr.mxu0 0.0
  %1247 = vmatpush1.msra.mxu0 0.0
  %1248 = vmatprep.subr.mxu0 0.0
  %1249 = vmatpush1.msra.mxu0 0.0
  %1250 = vmatprep.subr.mxu0 0.0
  %1251 = vmatpush1.msra.mxu0 0.0
  %1252 = vmatprep.subr.mxu0 0.0
  %1253 = vmatpush1.msra.mxu0 0.0
  %1254 = vmatprep.subr.mxu0 0.0
  %1255 = vmatpush1.msra.mxu0 0.0
  %1256 = vmatprep.subr.mxu0 0.0
  %1257 = vmatpush1.msra.mxu0 0.0
  %1258 = vmatprep.subr.mxu0 0.0
  %1259 = vmatpush1.msra.mxu0 0.0
  %1260 = vmatprep.subr.mxu0 0.0
  %1261 = vmatpush1.msra.mxu0 0.0
  %1262 = vmatprep.subr.mxu0 0.0
  %1263 = vmatpush1.msra.mxu0 0.0
  %1264 = vmatprep.mubr.f32.mxu0 0.0
  %1265 = vmatmul.mubr.f32.gmra.mrb[0].mxu0 %v1194
  %v1266 = vpop.f32.mrb[0].mxu0
  %v1267 = vadd.f32 0.0, %v1266
  %v1268 = vpop.f32.mrb[0].mxu0
  %v1269 = vadd.f32 0.0, %v1268
  %1270 = vdwg.mxu0
  %v1271 = vadd.f32 %v1173, %v1267
  %v1272 = vadd.f32 %v1175, %v1269
  %v1273 = vld [vmem:[%s991] sm:$0xff]
  %v1274 = vld [vmem:[%s991 + $0x8] sm:$0xf]
  %v1275 = vmul.f32 %v1273, %v356
  %v1276 = vmul.f32 %v1274, %v354
  %v1277 = vld [vmem:[%s361] sm:$0xf]
  %v1280 = vcombine.high %v1275, %v1275
  %1281 = vrot.lane.b32.xlu0 %v1275, 112
  %v1282 = vpop.permute.xlu0 %1281
  %1283 = vrot.lane.b32.xlu0 %v1280, 112
  %v1284 = vpop.permute.xlu0 %1283
  %1285 = vrot.lane.b32.xlu0 %v1276, 112
  %v1286 = vpop.permute.xlu0 %1285
  %v1287 = vsel %vm372, %v1282, %v1284
  %v1288 = vsel %vm372, %v1284, %v1286
  %v1290 = vsel %vm75, %v1277, 0
  %v1292 = vsel %vm79, %v1287, 0
  %v1294 = vsel %vm79, %v1288, 0
  %1296 = vmatprep.subr.mxu0 %v1294
  %1297 = vmatpush1.msra.mxu0 %v1292
  %1298 = vmatprep.subr.mxu0 0.0
  %1299 = vmatpush1.msra.mxu0 0.0
  %1300 = vmatprep.subr.mxu0 0.0
  %1301 = vmatpush1.msra.mxu0 0.0
  %1302 = vmatprep.subr.mxu0 0.0
  %1303 = vmatpush1.msra.mxu0 0.0
  %1304 = vmatprep.subr.mxu0 0.0
  %1305 = vmatpush1.msra.mxu0 0.0
  %1306 = vmatprep.subr.mxu0 0.0
  %1307 = vmatpush1.msra.mxu0 0.0
  %1308 = vmatprep.subr.mxu0 0.0
  %1309 = vmatpush1.msra.mxu0 0.0
  %1310 = vmatprep.subr.mxu0 0.0
  %1311 = vmatpush1.msra.mxu0 0.0
  %1312 = vmatprep.subr.mxu0 0.0
  %1313 = vmatpush1.msra.mxu0 0.0
  %1314 = vmatprep.subr.mxu0 0.0
  %1315 = vmatpush1.msra.mxu0 0.0
  %1316 = vmatprep.subr.mxu0 0.0
  %1317 = vmatpush1.msra.mxu0 0.0
  %1318 = vmatprep.subr.mxu0 0.0
  %1319 = vmatpush1.msra.mxu0 0.0
  %1320 = vmatprep.subr.mxu0 0.0
  %1321 = vmatpush1.msra.mxu0 0.0
  %1322 = vmatprep.subr.mxu0 0.0
  %1323 = vmatpush1.msra.mxu0 0.0
  %1324 = vmatprep.subr.mxu0 0.0
  %1325 = vmatpush1.msra.mxu0 0.0
  %1326 = vmatprep.subr.mxu0 0.0
  %1327 = vmatpush1.msra.mxu0 0.0
  %1328 = vmatprep.subr.mxu0 0.0
  %1329 = vmatpush1.msra.mxu0 0.0
  %1330 = vmatprep.subr.mxu0 0.0
  %1331 = vmatpush1.msra.mxu0 0.0
  %1332 = vmatprep.subr.mxu0 0.0
  %1333 = vmatpush1.msra.mxu0 0.0
  %1334 = vmatprep.subr.mxu0 0.0
  %1335 = vmatpush1.msra.mxu0 0.0
  %1336 = vmatprep.subr.mxu0 0.0
  %1337 = vmatpush1.msra.mxu0 0.0
  %1338 = vmatprep.subr.mxu0 0.0
  %1339 = vmatpush1.msra.mxu0 0.0
  %1340 = vmatprep.subr.mxu0 0.0
  %1341 = vmatpush1.msra.mxu0 0.0
  %1342 = vmatprep.subr.mxu0 0.0
  %1343 = vmatpush1.msra.mxu0 0.0
  %1344 = vmatprep.subr.mxu0 0.0
  %1345 = vmatpush1.msra.mxu0 0.0
  %1346 = vmatprep.subr.mxu0 0.0
  %1347 = vmatpush1.msra.mxu0 0.0
  %1348 = vmatprep.subr.mxu0 0.0
  %1349 = vmatpush1.msra.mxu0 0.0
  %1350 = vmatprep.subr.mxu0 0.0
  %1351 = vmatpush1.msra.mxu0 0.0
  %1352 = vmatprep.subr.mxu0 0.0
  %1353 = vmatpush1.msra.mxu0 0.0
  %1354 = vmatprep.subr.mxu0 0.0
  %1355 = vmatpush1.msra.mxu0 0.0
  %1356 = vmatprep.subr.mxu0 0.0
  %1357 = vmatpush1.msra.mxu0 0.0
  %1358 = vmatprep.subr.mxu0 0.0
  %1359 = vmatpush1.msra.mxu0 0.0
  %1360 = vmatprep.mubr.f32.mxu0 0.0
  %1361 = vmatmul.mubr.f32.gmra.mrb[0].mxu0 %v1290
  %v1362 = vpop.f32.mrb[0].mxu0
  %v1363 = vadd.f32 0.0, %v1362
  %v1364 = vpop.f32.mrb[0].mxu0
  %v1365 = vadd.f32 0.0, %v1364
  %1366 = vdwg.mxu0
  %v1367 = vadd.f32 %v1271, %v1363
  %v1368 = vadd.f32 %v1272, %v1365
  %v1369 = vld [vmem:[%s991] sm:$0xff]
  %v1370 = vld [vmem:[%s991 + $0x8] sm:$0xf]
  %v1371 = vld [vmem:[%s457] sm:$0xf]
  %v1374 = vcombine.high %v1369, %v1369
  %1375 = vrot.lane.b32.xlu0 %v1369, 111
  %v1376 = vpop.permute.xlu0 %1375
  %1377 = vrot.lane.b32.xlu0 %v1374, 111
  %v1378 = vpop.permute.xlu0 %1377
  %1379 = vrot.lane.b32.xlu0 %v1370, 111
  %v1380 = vpop.permute.xlu0 %1379
  %v1381 = vsel %vm468, %v1376, %v1378
  %v1382 = vsel %vm468, %v1378, %v1380
  %v1384 = vsel %vm75, %v1371, 0
  %v1386 = vsel %vm79, %v1381, 0
  %v1388 = vsel %vm79, %v1382, 0
  %1390 = vmatprep.subr.mxu0 %v1388
  %1391 = vmatpush1.msra.mxu0 %v1386
  %1392 = vmatprep.subr.mxu0 0.0
  %1393 = vmatpush1.msra.mxu0 0.0
  %1394 = vmatprep.subr.mxu0 0.0
  %1395 = vmatpush1.msra.mxu0 0.0
  %1396 = vmatprep.subr.mxu0 0.0
  %1397 = vmatpush1.msra.mxu0 0.0
  %1398 = vmatprep.subr.mxu0 0.0
  %1399 = vmatpush1.msra.mxu0 0.0
  %1400 = vmatprep.subr.mxu0 0.0
  %1401 = vmatpush1.msra.mxu0 0.0
  %1402 = vmatprep.subr.mxu0 0.0
  %1403 = vmatpush1.msra.mxu0 0.0
  %1404 = vmatprep.subr.mxu0 0.0
  %1405 = vmatpush1.msra.mxu0 0.0
  %1406 = vmatprep.subr.mxu0 0.0
  %1407 = vmatpush1.msra.mxu0 0.0
  %1408 = vmatprep.subr.mxu0 0.0
  %1409 = vmatpush1.msra.mxu0 0.0
  %1410 = vmatprep.subr.mxu0 0.0
  %1411 = vmatpush1.msra.mxu0 0.0
  %1412 = vmatprep.subr.mxu0 0.0
  %1413 = vmatpush1.msra.mxu0 0.0
  %1414 = vmatprep.subr.mxu0 0.0
  %1415 = vmatpush1.msra.mxu0 0.0
  %1416 = vmatprep.subr.mxu0 0.0
  %1417 = vmatpush1.msra.mxu0 0.0
  %1418 = vmatprep.subr.mxu0 0.0
  %1419 = vmatpush1.msra.mxu0 0.0
  %1420 = vmatprep.subr.mxu0 0.0
  %1421 = vmatpush1.msra.mxu0 0.0
  %1422 = vmatprep.subr.mxu0 0.0
  %1423 = vmatpush1.msra.mxu0 0.0
  %1424 = vmatprep.subr.mxu0 0.0
  %1425 = vmatpush1.msra.mxu0 0.0
  %1426 = vmatprep.subr.mxu0 0.0
  %1427 = vmatpush1.msra.mxu0 0.0
  %1428 = vmatprep.subr.mxu0 0.0
  %1429 = vmatpush1.msra.mxu0 0.0
  %1430 = vmatprep.subr.mxu0 0.0
  %1431 = vmatpush1.msra.mxu0 0.0
  %1432 = vmatprep.subr.mxu0 0.0
  %1433 = vmatpush1.msra.mxu0 0.0
  %1434 = vmatprep.subr.mxu0 0.0
  %1435 = vmatpush1.msra.mxu0 0.0
  %1436 = vmatprep.subr.mxu0 0.0
  %1437 = vmatpush1.msra.mxu0 0.0
  %1438 = vmatprep.subr.mxu0 0.0
  %1439 = vmatpush1.msra.mxu0 0.0
  %1440 = vmatprep.subr.mxu0 0.0
  %1441 = vmatpush1.msra.mxu0 0.0
  %1442 = vmatprep.subr.mxu0 0.0
  %1443 = vmatpush1.msra.mxu0 0.0
  %1444 = vmatprep.subr.mxu0 0.0
  %1445 = vmatpush1.msra.mxu0 0.0
  %1446 = vmatprep.subr.mxu0 0.0
  %1447 = vmatpush1.msra.mxu0 0.0
  %1448 = vmatprep.subr.mxu0 0.0
  %1449 = vmatpush1.msra.mxu0 0.0
  %1450 = vmatprep.subr.mxu0 0.0
  %1451 = vmatpush1.msra.mxu0 0.0
  %1452 = vmatprep.subr.mxu0 0.0
  %1453 = vmatpush1.msra.mxu0 0.0
  %1454 = vmatprep.mubr.f32.mxu0 0.0
  %1455 = vmatmul.mubr.f32.gmra.mrb[0].mxu0 %v1384
  %v1456 = vpop.f32.mrb[0].mxu0
  %v1457 = vadd.f32 0.0, %v1456
  %v1458 = vpop.f32.mrb[0].mxu0
  %v1459 = vadd.f32 0.0, %v1458
  %1460 = vdwg.mxu0
  %v1461 = vadd.f32 %v1367, %v1457
  %v1462 = vadd.f32 %v1368, %v1459
  %v1463 = vld [vmem:[%s991] sm:$0xff]
  %v1464 = vld [vmem:[%s991 + $0x8] sm:$0xf]
  %v1465 = vmul.f32 %v1463, %v557
  %v1466 = vmul.f32 %v1464, %v555
  %v1467 = vld [vmem:[%s562] sm:$0xf]
  %v1470 = vcombine.high %v1465, %v1465
  %1471 = vrot.lane.b32.xlu0 %v1465, 110
  %v1472 = vpop.permute.xlu0 %1471
  %1473 = vrot.lane.b32.xlu0 %v1470, 110
  %v1474 = vpop.permute.xlu0 %1473
  %1475 = vrot.lane.b32.xlu0 %v1466, 110
  %v1476 = vpop.permute.xlu0 %1475
  %v1477 = vsel %vm573, %v1472, %v1474
  %v1478 = vsel %vm573, %v1474, %v1476
  %v1480 = vsel %vm75, %v1467, 0
  %v1482 = vsel %vm79, %v1477, 0
  %v1484 = vsel %vm79, %v1478, 0
  %1486 = vmatprep.subr.mxu0 %v1484
  %1487 = vmatpush1.msra.mxu0 %v1482
  %1488 = vmatprep.subr.mxu0 0.0
  %1489 = vmatpush1.msra.mxu0 0.0
  %1490 = vmatprep.subr.mxu0 0.0
  %1491 = vmatpush1.msra.mxu0 0.0
  %1492 = vmatprep.subr.mxu0 0.0
  %1493 = vmatpush1.msra.mxu0 0.0
  %1494 = vmatprep.subr.mxu0 0.0
  %1495 = vmatpush1.msra.mxu0 0.0
  %1496 = vmatprep.subr.mxu0 0.0
  %1497 = vmatpush1.msra.mxu0 0.0
  %1498 = vmatprep.subr.mxu0 0.0
  %1499 = vmatpush1.msra.mxu0 0.0
  %1500 = vmatprep.subr.mxu0 0.0
  %1501 = vmatpush1.msra.mxu0 0.0
  %1502 = vmatprep.subr.mxu0 0.0
  %1503 = vmatpush1.msra.mxu0 0.0
  %1504 = vmatprep.subr.mxu0 0.0
  %1505 = vmatpush1.msra.mxu0 0.0
  %1506 = vmatprep.subr.mxu0 0.0
  %1507 = vmatpush1.msra.mxu0 0.0
  %1508 = vmatprep.subr.mxu0 0.0
  %1509 = vmatpush1.msra.mxu0 0.0
  %1510 = vmatprep.subr.mxu0 0.0
  %1511 = vmatpush1.msra.mxu0 0.0
  %1512 = vmatprep.subr.mxu0 0.0
  %1513 = vmatpush1.msra.mxu0 0.0
  %1514 = vmatprep.subr.mxu0 0.0
  %1515 = vmatpush1.msra.mxu0 0.0
  %1516 = vmatprep.subr.mxu0 0.0
  %1517 = vmatpush1.msra.mxu0 0.0
  %1518 = vmatprep.subr.mxu0 0.0
  %1519 = vmatpush1.msra.mxu0 0.0
  %1520 = vmatprep.subr.mxu0 0.0
  %1521 = vmatpush1.msra.mxu0 0.0
  %1522 = vmatprep.subr.mxu0 0.0
  %1523 = vmatpush1.msra.mxu0 0.0
  %1524 = vmatprep.subr.mxu0 0.0
  %1525 = vmatpush1.msra.mxu0 0.0
  %1526 = vmatprep.subr.mxu0 0.0
  %1527 = vmatpush1.msra.mxu0 0.0
  %1528 = vmatprep.subr.mxu0 0.0
  %1529 = vmatpush1.msra.mxu0 0.0
  %1530 = vmatprep.subr.mxu0 0.0
  %1531 = vmatpush1.msra.mxu0 0.0
  %1532 = vmatprep.subr.mxu0 0.0
  %1533 = vmatpush1.msra.mxu0 0.0
  %1534 = vmatprep.subr.mxu0 0.0
  %1535 = vmatpush1.msra.mxu0 0.0
  %1536 = vmatprep.subr.mxu0 0.0
  %1537 = vmatpush1.msra.mxu0 0.0
  %1538 = vmatprep.subr.mxu0 0.0
  %1539 = vmatpush1.msra.mxu0 0.0
  %1540 = vmatprep.subr.mxu0 0.0
  %1541 = vmatpush1.msra.mxu0 0.0
  %1542 = vmatprep.subr.mxu0 0.0
  %1543 = vmatpush1.msra.mxu0 0.0
  %1544 = vmatprep.subr.mxu0 0.0
  %1545 = vmatpush1.msra.mxu0 0.0
  %1546 = vmatprep.subr.mxu0 0.0
  %1547 = vmatpush1.msra.mxu0 0.0
  %1548 = vmatprep.subr.mxu0 0.0
  %1549 = vmatpush1.msra.mxu0 0.0
  %1550 = vmatprep.mubr.f32.mxu0 0.0
  %1551 = vmatmul.mubr.f32.gmra.mrb[0].mxu0 %v1480
  %v1552 = vpop.f32.mrb[0].mxu0
  %v1553 = vadd.f32 0.0, %v1552
  %v1554 = vpop.f32.mrb[0].mxu0
  %v1555 = vadd.f32 0.0, %v1554
  %1556 = vdwg.mxu0
  %v1557 = vadd.f32 %v1461, %v1553
  %v1558 = vadd.f32 %v1462, %v1555
  %v1559 = vld [vmem:[%s991] sm:$0xff]
  %v1560 = vld [vmem:[%s991 + $0x8] sm:$0xf]
  %v1561 = vmul.f32 %v1559, %v662
  %v1562 = vmul.f32 %v1560, %v660
  %v1563 = vld [vmem:[%s667] sm:$0xf]
  %v1566 = vcombine.high %v1561, %v1561
  %1567 = vrot.lane.b32.xlu0 %v1561, 96
  %v1568 = vpop.permute.xlu0 %1567
  %1569 = vrot.lane.b32.xlu0 %v1566, 96
  %v1570 = vpop.permute.xlu0 %1569
  %1571 = vrot.lane.b32.xlu0 %v1562, 96
  %v1572 = vpop.permute.xlu0 %1571
  %v1573 = vsel %vm678, %v1568, %v1570
  %v1574 = vsel %vm678, %v1570, %v1572
  %v1576 = vsel %vm75, %v1563, 0
  %v1578 = vsel %vm79, %v1573, 0
  %v1580 = vsel %vm79, %v1574, 0
  %1582 = vmatprep.subr.mxu0 %v1580
  %1583 = vmatpush1.msra.mxu0 %v1578
  %1584 = vmatprep.subr.mxu0 0.0
  %1585 = vmatpush1.msra.mxu0 0.0
  %1586 = vmatprep.subr.mxu0 0.0
  %1587 = vmatpush1.msra.mxu0 0.0
  %1588 = vmatprep.subr.mxu0 0.0
  %1589 = vmatpush1.msra.mxu0 0.0
  %1590 = vmatprep.subr.mxu0 0.0
  %1591 = vmatpush1.msra.mxu0 0.0
  %1592 = vmatprep.subr.mxu0 0.0
  %1593 = vmatpush1.msra.mxu0 0.0
  %1594 = vmatprep.subr.mxu0 0.0
  %1595 = vmatpush1.msra.mxu0 0.0
  %1596 = vmatprep.subr.mxu0 0.0
  %1597 = vmatpush1.msra.mxu0 0.0
  %1598 = vmatprep.subr.mxu0 0.0
  %1599 = vmatpush1.msra.mxu0 0.0
  %1600 = vmatprep.subr.mxu0 0.0
  %1601 = vmatpush1.msra.mxu0 0.0
  %1602 = vmatprep.subr.mxu0 0.0
  %1603 = vmatpush1.msra.mxu0 0.0
  %1604 = vmatprep.subr.mxu0 0.0
  %1605 = vmatpush1.msra.mxu0 0.0
  %1606 = vmatprep.subr.mxu0 0.0
  %1607 = vmatpush1.msra.mxu0 0.0
  %1608 = vmatprep.subr.mxu0 0.0
  %1609 = vmatpush1.msra.mxu0 0.0
  %1610 = vmatprep.subr.mxu0 0.0
  %1611 = vmatpush1.msra.mxu0 0.0
  %1612 = vmatprep.subr.mxu0 0.0
  %1613 = vmatpush1.msra.mxu0 0.0
  %1614 = vmatprep.subr.mxu0 0.0
  %1615 = vmatpush1.msra.mxu0 0.0
  %1616 = vmatprep.subr.mxu0 0.0
  %1617 = vmatpush1.msra.mxu0 0.0
  %1618 = vmatprep.subr.mxu0 0.0
  %1619 = vmatpush1.msra.mxu0 0.0
  %1620 = vmatprep.subr.mxu0 0.0
  %1621 = vmatpush1.msra.mxu0 0.0
  %1622 = vmatprep.subr.mxu0 0.0
  %1623 = vmatpush1.msra.mxu0 0.0
  %1624 = vmatprep.subr.mxu0 0.0
  %1625 = vmatpush1.msra.mxu0 0.0
  %1626 = vmatprep.subr.mxu0 0.0
  %1627 = vmatpush1.msra.mxu0 0.0
  %1628 = vmatprep.subr.mxu0 0.0
  %1629 = vmatpush1.msra.mxu0 0.0
  %1630 = vmatprep.subr.mxu0 0.0
  %1631 = vmatpush1.msra.mxu0 0.0
  %1632 = vmatprep.subr.mxu0 0.0
  %1633 = vmatpush1.msra.mxu0 0.0
  %1634 = vmatprep.subr.mxu0 0.0
  %1635 = vmatpush1.msra.mxu0 0.0
  %1636 = vmatprep.subr.mxu0 0.0
  %1637 = vmatpush1.msra.mxu0 0.0
  %1638 = vmatprep.subr.mxu0 0.0
  %1639 = vmatpush1.msra.mxu0 0.0
  %1640 = vmatprep.subr.mxu0 0.0
  %1641 = vmatpush1.msra.mxu0 0.0
  %1642 = vmatprep.subr.mxu0 0.0
  %1643 = vmatpush1.msra.mxu0 0.0
  %1644 = vmatprep.subr.mxu0 0.0
  %1645 = vmatpush1.msra.mxu0 0.0
  %1646 = vmatprep.mubr.f32.mxu0 0.0
  %1647 = vmatmul.mubr.f32.gmra.mrb[0].mxu0 %v1576
  %v1648 = vpop.f32.mrb[0].mxu0
  %v1649 = vadd.f32 0.0, %v1648
  %v1650 = vpop.f32.mrb[0].mxu0
  %v1651 = vadd.f32 0.0, %v1650
  %1652 = vdwg.mxu0
  %v1653 = vadd.f32 %v1557, %v1649
  %v1654 = vadd.f32 %v1558, %v1651
  %v1655 = vld [vmem:[%s991] sm:$0xff]
  %v1656 = vld [vmem:[%s991 + $0x8] sm:$0xf]
  %v1657 = vld [vmem:[%s763] sm:$0xf]
  %v1660 = vcombine.high %v1655, %v1655
  %1661 = vrot.lane.b32.xlu0 %v1655, 95
  %v1662 = vpop.permute.xlu0 %1661
  %1663 = vrot.lane.b32.xlu0 %v1660, 95
  %v1664 = vpop.permute.xlu0 %1663
  %1665 = vrot.lane.b32.xlu0 %v1656, 95
  %v1666 = vpop.permute.xlu0 %1665
  %v1667 = vsel %vm774, %v1662, %v1664
  %v1668 = vsel %vm774, %v1664, %v1666
  %v1670 = vsel %vm75, %v1657, 0
  %v1672 = vsel %vm79, %v1667, 0
  %v1674 = vsel %vm79, %v1668, 0
  %1676 = vmatprep.subr.mxu0 %v1674
  %1677 = vmatpush1.msra.mxu0 %v1672
  %1678 = vmatprep.subr.mxu0 0.0
  %1679 = vmatpush1.msra.mxu0 0.0
  %1680 = vmatprep.subr.mxu0 0.0
  %1681 = vmatpush1.msra.mxu0 0.0
  %1682 = vmatprep.subr.mxu0 0.0
  %1683 = vmatpush1.msra.mxu0 0.0
  %1684 = vmatprep.subr.mxu0 0.0
  %1685 = vmatpush1.msra.mxu0 0.0
  %1686 = vmatprep.subr.mxu0 0.0
  %1687 = vmatpush1.msra.mxu0 0.0
  %1688 = vmatprep.subr.mxu0 0.0
  %1689 = vmatpush1.msra.mxu0 0.0
  %1690 = vmatprep.subr.mxu0 0.0
  %1691 = vmatpush1.msra.mxu0 0.0
  %1692 = vmatprep.subr.mxu0 0.0
  %1693 = vmatpush1.msra.mxu0 0.0
  %1694 = vmatprep.subr.mxu0 0.0
  %1695 = vmatpush1.msra.mxu0 0.0
  %1696 = vmatprep.subr.mxu0 0.0
  %1697 = vmatpush1.msra.mxu0 0.0
  %1698 = vmatprep.subr.mxu0 0.0
  %1699 = vmatpush1.msra.mxu0 0.0
  %1700 = vmatprep.subr.mxu0 0.0
  %1701 = vmatpush1.msra.mxu0 0.0
  %1702 = vmatprep.subr.mxu0 0.0
  %1703 = vmatpush1.msra.mxu0 0.0
  %1704 = vmatprep.subr.mxu0 0.0
  %1705 = vmatpush1.msra.mxu0 0.0
  %1706 = vmatprep.subr.mxu0 0.0
  %1707 = vmatpush1.msra.mxu0 0.0
  %1708 = vmatprep.subr.mxu0 0.0
  %1709 = vmatpush1.msra.mxu0 0.0
  %1710 = vmatprep.subr.mxu0 0.0
  %1711 = vmatpush1.msra.mxu0 0.0
  %1712 = vmatprep.subr.mxu0 0.0
  %1713 = vmatpush1.msra.mxu0 0.0
  %1714 = vmatprep.subr.mxu0 0.0
  %1715 = vmatpush1.msra.mxu0 0.0
  %1716 = vmatprep.subr.mxu0 0.0
  %1717 = vmatpush1.msra.mxu0 0.0
  %1718 = vmatprep.subr.mxu0 0.0
  %1719 = vmatpush1.msra.mxu0 0.0
  %1720 = vmatprep.subr.mxu0 0.0
  %1721 = vmatpush1.msra.mxu0 0.0
  %1722 = vmatprep.subr.mxu0 0.0
  %1723 = vmatpush1.msra.mxu0 0.0
  %1724 = vmatprep.subr.mxu0 0.0
  %1725 = vmatpush1.msra.mxu0 0.0
  %1726 = vmatprep.subr.mxu0 0.0
  %1727 = vmatpush1.msra.mxu0 0.0
  %1728 = vmatprep.subr.mxu0 0.0
  %1729 = vmatpush1.msra.mxu0 0.0
  %1730 = vmatprep.subr.mxu0 0.0
  %1731 = vmatpush1.msra.mxu0 0.0
  %1732 = vmatprep.subr.mxu0 0.0
  %1733 = vmatpush1.msra.mxu0 0.0
  %1734 = vmatprep.subr.mxu0 0.0
  %1735 = vmatpush1.msra.mxu0 0.0
  %1736 = vmatprep.subr.mxu0 0.0
  %1737 = vmatpush1.msra.mxu0 0.0
  %1738 = vmatprep.subr.mxu0 0.0
  %1739 = vmatpush1.msra.mxu0 0.0
  %1740 = vmatprep.mubr.f32.mxu0 0.0
  %1741 = vmatmul.mubr.f32.gmra.mrb[0].mxu0 %v1670
  %v1742 = vpop.f32.mrb[0].mxu0
  %v1743 = vadd.f32 0.0, %v1742
  %v1744 = vpop.f32.mrb[0].mxu0
  %v1745 = vadd.f32 0.0, %v1744
  %1746 = vdwg.mxu0
  %v1747 = vadd.f32 %v1653, %v1743
  %v1748 = vadd.f32 %v1654, %v1745
  %v1749 = vld [vmem:[%s991] sm:$0xff]
  %v1750 = vld [vmem:[%s991 + $0x8] sm:$0xf]
  %v1751 = vmul.f32 %v1749, %v863
  %v1752 = vmul.f32 %v1750, %v861
  %v1753 = vld [vmem:[%s868] sm:$0xf]
  %v1756 = vcombine.high %v1751, %v1751
  %1757 = vrot.lane.b32.xlu0 %v1751, 94
  %v1758 = vpop.permute.xlu0 %1757
  %1759 = vrot.lane.b32.xlu0 %v1756, 94
  %v1760 = vpop.permute.xlu0 %1759
  %1761 = vrot.lane.b32.xlu0 %v1752, 94
  %v1762 = vpop.permute.xlu0 %1761
  %v1763 = vsel %vm879, %v1758, %v1760
  %v1764 = vsel %vm879, %v1760, %v1762
  %v1766 = vsel %vm75, %v1753, 0
  %v1768 = vsel %vm79, %v1763, 0
  %v1770 = vsel %vm79, %v1764, 0
  %1772 = vmatprep.subr.mxu0 %v1770
  %1773 = vmatpush1.msra.mxu0 %v1768
  %1774 = vmatprep.subr.mxu0 0.0
  %1775 = vmatpush1.msra.mxu0 0.0
  %1776 = vmatprep.subr.mxu0 0.0
  %1777 = vmatpush1.msra.mxu0 0.0
  %1778 = vmatprep.subr.mxu0 0.0
  %1779 = vmatpush1.msra.mxu0 0.0
  %1780 = vmatprep.subr.mxu0 0.0
  %1781 = vmatpush1.msra.mxu0 0.0
  %1782 = vmatprep.subr.mxu0 0.0
  %1783 = vmatpush1.msra.mxu0 0.0
  %1784 = vmatprep.subr.mxu0 0.0
  %1785 = vmatpush1.msra.mxu0 0.0
  %1786 = vmatprep.subr.mxu0 0.0
  %1787 = vmatpush1.msra.mxu0 0.0
  %1788 = vmatprep.subr.mxu0 0.0
  %1789 = vmatpush1.msra.mxu0 0.0
  %1790 = vmatprep.subr.mxu0 0.0
  %1791 = vmatpush1.msra.mxu0 0.0
  %1792 = vmatprep.subr.mxu0 0.0
  %1793 = vmatpush1.msra.mxu0 0.0
  %1794 = vmatprep.subr.mxu0 0.0
  %1795 = vmatpush1.msra.mxu0 0.0
  %1796 = vmatprep.subr.mxu0 0.0
  %1797 = vmatpush1.msra.mxu0 0.0
  %1798 = vmatprep.subr.mxu0 0.0
  %1799 = vmatpush1.msra.mxu0 0.0
  %1800 = vmatprep.subr.mxu0 0.0
  %1801 = vmatpush1.msra.mxu0 0.0
  %1802 = vmatprep.subr.mxu0 0.0
  %1803 = vmatpush1.msra.mxu0 0.0
  %1804 = vmatprep.subr.mxu0 0.0
  %1805 = vmatpush1.msra.mxu0 0.0
  %1806 = vmatprep.subr.mxu0 0.0
  %1807 = vmatpush1.msra.mxu0 0.0
  %1808 = vmatprep.subr.mxu0 0.0
  %1809 = vmatpush1.msra.mxu0 0.0
  %1810 = vmatprep.subr.mxu0 0.0
  %1811 = vmatpush1.msra.mxu0 0.0
  %1812 = vmatprep.subr.mxu0 0.0
  %1813 = vmatpush1.msra.mxu0 0.0
  %1814 = vmatprep.subr.mxu0 0.0
  %1815 = vmatpush1.msra.mxu0 0.0
  %1816 = vmatprep.subr.mxu0 0.0
  %1817 = vmatpush1.msra.mxu0 0.0
  %1818 = vmatprep.subr.mxu0 0.0
  %1819 = vmatpush1.msra.mxu0 0.0
  %1820 = vmatprep.subr.mxu0 0.0
  %1821 = vmatpush1.msra.mxu0 0.0
  %1822 = vmatprep.subr.mxu0 0.0
  %1823 = vmatpush1.msra.mxu0 0.0
  %1824 = vmatprep.subr.mxu0 0.0
  %1825 = vmatpush1.msra.mxu0 0.0
  %1826 = vmatprep.subr.mxu0 0.0
  %1827 = vmatpush1.msra.mxu0 0.0
  %1828 = vmatprep.subr.mxu0 0.0
  %1829 = vmatpush1.msra.mxu0 0.0
  %1830 = vmatprep.subr.mxu0 0.0
  %1831 = vmatpush1.msra.mxu0 0.0
  %1832 = vmatprep.subr.mxu0 0.0
  %1833 = vmatpush1.msra.mxu0 0.0
  %1834 = vmatprep.subr.mxu0 0.0
  %1835 = vmatpush1.msra.mxu0 0.0
  %1836 = vmatprep.mubr.f32.mxu0 0.0
  %1837 = vmatmul.mubr.f32.gmra.mrb[0].mxu0 %v1766
  %v1838 = vpop.f32.mrb[0].mxu0
  %v1839 = vadd.f32 0.0, %v1838
  %v1840 = vpop.f32.mrb[0].mxu0
  %v1841 = vadd.f32 0.0, %v1840
  %1842 = vdwg.mxu0
  %v1843 = vadd.f32 %v1747, %v1839
  %v1844 = vadd.f32 %v1748, %v1841
  %v1845 = vld [vmem:[%s4] sm:$0xf]
  %1847 = vset.pattern.permute.xlu0 0
  %1848 = vperm.xlu0 %1847, %v1845
  %v1849 = vpop.permute.xlu0 %1848
  %v1851 = vadd.f32 %v1843, %v1849
  %v1852 = vadd.f32 %v1844, %v1849
  %v1855 = vcombine.low %v1851, %v1852
  %s1857 = scalar_lea.vmem %s6, 8
  %1858 = vst [vmem:[%s1857] sm:$0xff] %v1855
  %v1859 = vsel %vm79, %v1851, 0.0
  %v1860 = vsel %vm79, %v1852, 0.0
  %v1861 = vadd.f32 %v1859, %v1860
  %1862 = vadd.xlane.f32.xlu0 %v1861
  %v1863 = vpop.xlane.xlu0 %1862
  %v1864 = vadd.f32 %v980, %v1863
  %v1865 = vmul.f32 %v1851, %v1851
  %v1866 = vmul.f32 %v1852, %v1852
  %v1867 = vsel %vm79, %v1865, 0.0
  %v1868 = vsel %vm79, %v1866, 0.0
  %v1869 = vadd.f32 %v1867, %v1868
  %1870 = vadd.xlane.f32.xlu0 %v1869
  %v1871 = vpop.xlane.xlu0 %1870
  %v1872 = vadd.f32 %v988, %v1871
  %vm1873 = vcmask 3072
  %1874 = vst.msk [vmem:[%s7] sm:$0xf] %vm1873, %v1864
  %vm1875 = vcmask 11272
  %1876 = vst.msk [vmem:[%s7] sm:$0xf] %vm1875, %v1872
  // Predicated region
  $region26: #{_trans_block_forward_impl.3} parent=0 // pred_check
    _
  $region27: #{_trans_block_forward_impl.3} parent=0 // pred_check_branch
    %1878 = sbr.rel (0) target = $region29
  $region28: #{_trans_block_forward_impl.3} parent=0 // pred_region
    _
  $region29: #{_trans_block_forward_impl.3} parent=0 // pred_fallthru
    _
  // Predicated region
  $region30: #{_trans_block_forward_impl.3} parent=0 // pred_check
    _
  $region31: #{_trans_block_forward_impl.3} parent=0 // pred_check_branch
    %1880 = sbr.rel (0) target = $region33
  $region32: #{_trans_block_forward_impl.3} parent=0 // pred_region
    _
  $region33: #{_trans_block_forward_impl.3} parent=0 // pred_fallthru
    _
  // Predicated region
  $region34: #{_trans_block_forward_impl.3} parent=0 // pred_check
    _
  $region35: #{_trans_block_forward_impl.3} parent=0 // pred_check_branch
    %1882 = sbr.rel (0) target = $region37
  $region36: #{_trans_block_forward_impl.3} parent=0 // pred_region
    _
  $region37: #{_trans_block_forward_impl.3} parent=0 // pred_fallthru
    _
  // Predicated region
  $region38: #{_trans_block_forward_impl.3} parent=0 // pred_check
    _
  $region39: #{_trans_block_forward_impl.3} parent=0 // pred_check_branch
    %1884 = sbr.rel (0) target = $region41
  $region40: #{_trans_block_forward_impl.3} parent=0 // pred_region
    _
  $region41: #{_trans_block_forward_impl.3} parent=0 // pred_fallthru
    _

// kernel: _trans_block_forward_impl.4
$region0: #{_trans_block_forward_impl.4}
  #allocation0 [shape = 'u32[]', space=smem, size = 0x4, offset = 0x4, fixed_abs, tag = 'smem constant byte address 0x4 - core index']
  #allocation1 [shape = 'u32[144,128]{1,0:T(1,128)}', space=vmem, size = 0x12000, scoped, tag = 'internal scratch']
  #allocation2 [shape = 'f32[2,4,290]{2,1,0:T(4,128)}', space=vmem, size = 0x3000, scoped, tag = 'scratch operand']
  %s0 = inlined_call_operand.vmem [shape: f32[2,4,256], index: 0, kind: input, shape index: {}]
  %s1 = inlined_call_operand.vmem [shape: f32[4,1], index: 1, kind: input, shape index: {}]
  %s2 = inlined_call_operand.vmem [shape: f32[4,1], index: 2, kind: input, shape index: {}]
  %s3 = inlined_call_operand.vmem [shape: f32[9,4,4], index: 3, kind: input, shape index: {}]
  %s4 = inlined_call_operand.vmem [shape: f32[4,1], index: 4, kind: input, shape index: {}]
  %s5 = inlined_call_operand.vmem [shape: f32[2,256], index: 5, kind: input, shape index: {}]
  %s6 = inlined_call_operand.vmem [shape: f32[2,4,256], index: 6, kind: output, shape index: {0}]
  %s7 = inlined_call_operand.vmem [shape: f32[1,4,2], index: 7, kind: output, shape index: {1}]
  %8 = xla_tuple %s6, %s7
  %s9 = sld [smem:[#allocation0]]
  $region42: #{_trans_block_forward_impl.4} parent=0
    _
  %s11 = ssub.s32 1, %s9
  %s12 = scalar_select 0, %s11, %s9
  // Predicated region
  $region2: #{_trans_block_forward_impl.4} parent=0 // pred_check
    _
  $region3: #{_trans_block_forward_impl.4} parent=0 // pred_check_branch
    %14 = sbr.rel (0) target = $region5
  $region4: #{_trans_block_forward_impl.4} parent=0 // pred_region
    _
  $region5: #{_trans_block_forward_impl.4} parent=0 // pred_fallthru
    _
  // Predicated region
  $region6: #{_trans_block_forward_impl.4} parent=0 // pred_check
    _
  $region7: #{_trans_block_forward_impl.4} parent=0 // pred_check_branch
    %16 = sbr.rel (0) target = $region9
  $region8: #{_trans_block_forward_impl.4} parent=0 // pred_region
    _
  $region9: #{_trans_block_forward_impl.4} parent=0 // pred_fallthru
    _
  // Predicated region
  $region10: #{_trans_block_forward_impl.4} parent=0 // pred_check
    _
  $region11: #{_trans_block_forward_impl.4} parent=0 // pred_check_branch
    %18 = sbr.rel (0) target = $region13
  $region12: #{_trans_block_forward_impl.4} parent=0 // pred_region
    _
  $region13: #{_trans_block_forward_impl.4} parent=0 // pred_fallthru
    _
  // Predicated region
  $region14: #{_trans_block_forward_impl.4} parent=0 // pred_check
    _
  $region15: #{_trans_block_forward_impl.4} parent=0 // pred_check_branch
    %20 = sbr.rel (0) target = $region17
  $region16: #{_trans_block_forward_impl.4} parent=0 // pred_region
    _
  $region17: #{_trans_block_forward_impl.4} parent=0 // pred_fallthru
    _
  // Predicated region
  $region18: #{_trans_block_forward_impl.4} parent=0 // pred_check
    _
  $region19: #{_trans_block_forward_impl.4} parent=0 // pred_check_branch
    %22 = sbr.rel (0) target = $region21
  $region20: #{_trans_block_forward_impl.4} parent=0 // pred_region
    _
  $region21: #{_trans_block_forward_impl.4} parent=0 // pred_fallthru
    _
  // Predicated region
  $region22: #{_trans_block_forward_impl.4} parent=0 // pred_check
    _
  $region23: #{_trans_block_forward_impl.4} parent=0 // pred_check_branch
    %24 = sbr.rel (0) target = $region25
  $region24: #{_trans_block_forward_impl.4} parent=0 // pred_region
    _
  $region25: #{_trans_block_forward_impl.4} parent=0 // pred_fallthru
    _
  %v25 = vld [vmem:[%s5] ss:$2 sm:$0x3]
  %s26 = scalar_lea.vmem %s5, 1
  %v27 = vld [vmem:[%s26] ss:$2 sm:$0x3]
  %v28 = vld [vmem:[%s0] sm:$0xff]
  %v29 = vld [vmem:[%s1] sm:$0xf]
  %31 = vset.pattern.permute.xlu0 0
  %32 = vperm.xlu0 %31, %v29
  %v33 = vpop.permute.xlu0 %32
  %v35 = vunpack.c.l.s4 839922192
  %v36 = vunpack.c.0.s8 %v35
  %v37 = vlaneseq
  %v38 = vshrl.u32 %v37, 7
  %v39 = vsub.s32 %v36, %v38
  %v40 = vrot.slane %v33, %v39
  %v42 = vmul.f32 %v28, %v40
  %v43 = vld [vmem:[%s2] sm:$0xf]
  %45 = vset.pattern.permute.xlu0 0
  %46 = vperm.xlu0 %45, %v43
  %v47 = vpop.permute.xlu0 %46
  %v49 = vunpack.c.l.s4 839922192
  %v50 = vunpack.c.0.s8 %v49
  %v51 = vlaneseq
  %v52 = vshrl.u32 %v51, 7
  %v53 = vsub.s32 %v50, %v52
  %v54 = vrot.slane %v47, %v53
  %v56 = vadd.f32 %v42, %v54
  %v57 = vmax.f32 %v56, 0.0
  %vm58 = vcmask 134144
  %59 = vst.msk [vmem:[#allocation2] sm:$0xf] %vm58, 0.0
  %vm60 = vcmask 273544
  %61 = vst.msk [vmem:[#allocation2 + $0x8] sm:$0xf] %vm60, 0.0
  %63 = vrot.lane.b32.xlu0 %v57, 17
  %v64 = vpop.permute.xlu0 %63
  %v65 = vrot.slane %v64, 4
  %vm66 = vcmask 138240
  %v67 = vsel %vm66, %v65, %v64
  %vm70 = vcmask 1043592
  %vm71 = vcmask 1047556
  %vm72 = vmor %vm71, %vm70
  %73 = vst.msk [vmem:[#allocation2] sm:$0xff] %vm72, %v67
  %74 = vst.msk [vmem:[#allocation2 + $0x8] sm:$0xf] %vm58, %v65
  %v75 = vld [vmem:[#allocation2] sm:$0xff]
  %v77 = vlaneseq
  %v78 = vshrl.u32 %v77, 7
  %v79 = vsub.s32 0, %v78
  %v80 = vrot.slane %v25, %v79
  %v81 = vlaneseq
  %v82 = vshrl.u32 %v81, 7
  %v83 = vsub.s32 1, %v82
  %v84 = vrot.slane %v25, %v83
  %v85 = vcombine.low %v80, %v84
  %v87 = vmul.f32 %v75, %v85
  %v88 = vld [vmem:[%s3] sm:$0xf]
  %v89 = vld [vmem:[#allocation2 + $0x8] sm:$0xf]
  %s90 = scalar_lea.vmem %s3, 4
  %v91 = vld [vmem:[%s90] sm:$0xf]
  %v94 = vcombine.high %v75, %v75
  %95 = vrot.lane.b32.xlu0 %v75, 127
  %v96 = vpop.permute.xlu0 %95
  %97 = vrot.lane.b32.xlu0 %v94, 127
  %v98 = vpop.permute.xlu0 %97
  %99 = vrot.lane.b32.xlu0 %v89, 127
  %v100 = vpop.permute.xlu0 %99
  %vm101 = vcmask 1039360
  %v102 = vsel %vm101, %v96, %v98
  %v103 = vsel %vm101, %v98, %v100
  %vm104 = vcmask 31744
  %v106 = vsel %vm104, %v91, 0
  %vm108 = vcmask 1043456
  %v109 = vsel %vm108, %v102, 0
  %v111 = vsel %vm108, %v103, 0
  %113 = vmatprep.subr.mxu0 %v111
  %114 = vmatpush1.msra.mxu0 %v109
  %115 = vmatprep.subr.mxu0 0.0
  %116 = vmatpush1.msra.mxu0 0.0
  %117 = vmatprep.subr.mxu0 0.0
  %118 = vmatpush1.msra.mxu0 0.0
  %119 = vmatprep.subr.mxu0 0.0
  %120 = vmatpush1.msra.mxu0 0.0
  %121 = vmatprep.subr.mxu0 0.0
  %122 = vmatpush1.msra.mxu0 0.0
  %123 = vmatprep.subr.mxu0 0.0
  %124 = vmatpush1.msra.mxu0 0.0
  %125 = vmatprep.subr.mxu0 0.0
  %126 = vmatpush1.msra.mxu0 0.0
  %127 = vmatprep.subr.mxu0 0.0
  %128 = vmatpush1.msra.mxu0 0.0
  %129 = vmatprep.subr.mxu0 0.0
  %130 = vmatpush1.msra.mxu0 0.0
  %131 = vmatprep.subr.mxu0 0.0
  %132 = vmatpush1.msra.mxu0 0.0
  %133 = vmatprep.subr.mxu0 0.0
  %134 = vmatpush1.msra.mxu0 0.0
  %135 = vmatprep.subr.mxu0 0.0
  %136 = vmatpush1.msra.mxu0 0.0
  %137 = vmatprep.subr.mxu0 0.0
  %138 = vmatpush1.msra.mxu0 0.0
  %139 = vmatprep.subr.mxu0 0.0
  %140 = vmatpush1.msra.mxu0 0.0
  %141 = vmatprep.subr.mxu0 0.0
  %142 = vmatpush1.msra.mxu0 0.0
  %143 = vmatprep.subr.mxu0 0.0
  %144 = vmatpush1.msra.mxu0 0.0
  %145 = vmatprep.subr.mxu0 0.0
  %146 = vmatpush1.msra.mxu0 0.0
  %147 = vmatprep.subr.mxu0 0.0
  %148 = vmatpush1.msra.mxu0 0.0
  %149 = vmatprep.subr.mxu0 0.0
  %150 = vmatpush1.msra.mxu0 0.0
  %151 = vmatprep.subr.mxu0 0.0
  %152 = vmatpush1.msra.mxu0 0.0
  %153 = vmatprep.subr.mxu0 0.0
  %154 = vmatpush1.msra.mxu0 0.0
  %155 = vmatprep.subr.mxu0 0.0
  %156 = vmatpush1.msra.mxu0 0.0
  %157 = vmatprep.subr.mxu0 0.0
  %158 = vmatpush1.msra.mxu0 0.0
  %159 = vmatprep.subr.mxu0 0.0
  %160 = vmatpush1.msra.mxu0 0.0
  %161 = vmatprep.subr.mxu0 0.0
  %162 = vmatpush1.msra.mxu0 0.0
  %163 = vmatprep.subr.mxu0 0.0
  %164 = vmatpush1.msra.mxu0 0.0
  %165 = vmatprep.subr.mxu0 0.0
  %166 = vmatpush1.msra.mxu0 0.0
  %167 = vmatprep.subr.mxu0 0.0
  %168 = vmatpush1.msra.mxu0 0.0
  %169 = vmatprep.subr.mxu0 0.0
  %170 = vmatpush1.msra.mxu0 0.0
  %171 = vmatprep.subr.mxu0 0.0
  %172 = vmatpush1.msra.mxu0 0.0
  %173 = vmatprep.subr.mxu0 0.0
  %174 = vmatpush1.msra.mxu0 0.0
  %175 = vmatprep.subr.mxu0 0.0
  %176 = vmatpush1.msra.mxu0 0.0
  %177 = vmatprep.mubr.f32.mxu0 0.0
  %178 = vmatmul.mubr.f32.gmra.mrb[0].mxu0 %v106
  %v179 = vpop.f32.mrb[0].mxu0
  %v180 = vadd.f32 0.0, %v179
  %v181 = vpop.f32.mrb[0].mxu0
  %v182 = vadd.f32 0.0, %v181
  %183 = vdwg.mxu0
  %v185 = vcombine.high %v87, %v87
  %v187 = vsel %vm104, %v88, 0
  %v189 = vsel %vm108, %v87, 0
  %v191 = vsel %vm108, %v185, 0
  %193 = vmatprep.subr.mxu0 %v191
  %194 = vmatpush1.msra.mxu0 %v189
  %195 = vmatprep.subr.mxu0 0.0
  %196 = vmatpush1.msra.mxu0 0.0
  %197 = vmatprep.subr.mxu0 0.0
  %198 = vmatpush1.msra.mxu0 0.0
  %199 = vmatprep.subr.mxu0 0.0
  %200 = vmatpush1.msra.mxu0 0.0
  %201 = vmatprep.subr.mxu0 0.0
  %202 = vmatpush1.msra.mxu0 0.0
  %203 = vmatprep.subr.mxu0 0.0
  %204 = vmatpush1.msra.mxu0 0.0
  %205 = vmatprep.subr.mxu0 0.0
  %206 = vmatpush1.msra.mxu0 0.0
  %207 = vmatprep.subr.mxu0 0.0
  %208 = vmatpush1.msra.mxu0 0.0
  %209 = vmatprep.subr.mxu0 0.0
  %210 = vmatpush1.msra.mxu0 0.0
  %211 = vmatprep.subr.mxu0 0.0
  %212 = vmatpush1.msra.mxu0 0.0
  %213 = vmatprep.subr.mxu0 0.0
  %214 = vmatpush1.msra.mxu0 0.0
  %215 = vmatprep.subr.mxu0 0.0
  %216 = vmatpush1.msra.mxu0 0.0
  %217 = vmatprep.subr.mxu0 0.0
  %218 = vmatpush1.msra.mxu0 0.0
  %219 = vmatprep.subr.mxu0 0.0
  %220 = vmatpush1.msra.mxu0 0.0
  %221 = vmatprep.subr.mxu0 0.0
  %222 = vmatpush1.msra.mxu0 0.0
  %223 = vmatprep.subr.mxu0 0.0
  %224 = vmatpush1.msra.mxu0 0.0
  %225 = vmatprep.subr.mxu0 0.0
  %226 = vmatpush1.msra.mxu0 0.0
  %227 = vmatprep.subr.mxu0 0.0
  %228 = vmatpush1.msra.mxu0 0.0
  %229 = vmatprep.subr.mxu0 0.0
  %230 = vmatpush1.msra.mxu0 0.0
  %231 = vmatprep.subr.mxu0 0.0
  %232 = vmatpush1.msra.mxu0 0.0
  %233 = vmatprep.subr.mxu0 0.0
  %234 = vmatpush1.msra.mxu0 0.0
  %235 = vmatprep.subr.mxu0 0.0
  %236 = vmatpush1.msra.mxu0 0.0
  %237 = vmatprep.subr.mxu0 0.0
  %238 = vmatpush1.msra.mxu0 0.0
  %239 = vmatprep.subr.mxu0 0.0
  %240 = vmatpush1.msra.mxu0 0.0
  %241 = vmatprep.subr.mxu0 0.0
  %242 = vmatpush1.msra.mxu0 0.0
  %243 = vmatprep.subr.mxu0 0.0
  %244 = vmatpush1.msra.mxu0 0.0
  %245 = vmatprep.subr.mxu0 0.0
  %246 = vmatpush1.msra.mxu0 0.0
  %247 = vmatprep.subr.mxu0 0.0
  %248 = vmatpush1.msra.mxu0 0.0
  %249 = vmatprep.subr.mxu0 0.0
  %250 = vmatpush1.msra.mxu0 0.0
  %251 = vmatprep.subr.mxu0 0.0
  %252 = vmatpush1.msra.mxu0 0.0
  %253 = vmatprep.subr.mxu0 0.0
  %254 = vmatpush1.msra.mxu0 0.0
  %255 = vmatprep.subr.mxu0 0.0
  %256 = vmatpush1.msra.mxu0 0.0
  %257 = vmatprep.mubr.f32.mxu0 0.0
  %258 = vmatmul.mubr.f32.gmra.mrb[0].mxu0 %v187
  %v259 = vpop.f32.mrb[0].mxu0
  %v260 = vadd.f32 %v180, %v259
  %v261 = vpop.f32.mrb[0].mxu0
  %v262 = vadd.f32 %v182, %v261
  %263 = vdwg.mxu0
  %v264 = vld [vmem:[#allocation2] sm:$0xff]
  %v265 = vld [vmem:[#allocation2 + $0x8] sm:$0xf]
  %v267 = vlaneseq
  %v268 = vshrl.u32 %v267, 7
  %v269 = vsub.s32 0, %v268
  %v270 = vrot.slane %v27, %v269
  %v271 = vlaneseq
  %v272 = vshrl.u32 %v271, 7
  %v273 = vsub.s32 1, %v272
  %v274 = vrot.slane %v27, %v273
  %v275 = vcombine.low %v270, %v274
  %276 = vrot.lane.b32.xlu0 %v275, 2
  %v277 = vpop.permute.xlu0 %276
  %v278 = vrot.slane %v277, 4
  %vm279 = vcmask 15360
  %v280 = vsel %vm279, %v278, %v277
  %v283 = vmul.f32 %v264, %v280
  %v284 = vmul.f32 %v265, %v278
  %s285 = scalar_lea.vmem %s3, 8
  %v286 = vld [vmem:[%s285] sm:$0xf]
  %v289 = vcombine.high %v283, %v283
  %290 = vrot.lane.b32.xlu0 %v283, 126
  %v291 = vpop.permute.xlu0 %290
  %292 = vrot.lane.b32.xlu0 %v289, 126
  %v293 = vpop.permute.xlu0 %292
  %294 = vrot.lane.b32.xlu0 %v284, 126
  %v295 = vpop.permute.xlu0 %294
  %vm296 = vcmask 1031168
  %v297 = vsel %vm296, %v291, %v293
  %v298 = vsel %vm296, %v293, %v295
  %v300 = vsel %vm104, %v286, 0
  %v302 = vsel %vm108, %v297, 0
  %v304 = vsel %vm108, %v298, 0
  %306 = vmatprep.subr.mxu0 %v304
  %307 = vmatpush1.msra.mxu0 %v302
  %308 = vmatprep.subr.mxu0 0.0
  %309 = vmatpush1.msra.mxu0 0.0
  %310 = vmatprep.subr.mxu0 0.0
  %311 = vmatpush1.msra.mxu0 0.0
  %312 = vmatprep.subr.mxu0 0.0
  %313 = vmatpush1.msra.mxu0 0.0
  %314 = vmatprep.subr.mxu0 0.0
  %315 = vmatpush1.msra.mxu0 0.0
  %316 = vmatprep.subr.mxu0 0.0
  %317 = vmatpush1.msra.mxu0 0.0
  %318 = vmatprep.subr.mxu0 0.0
  %319 = vmatpush1.msra.mxu0 0.0
  %320 = vmatprep.subr.mxu0 0.0
  %321 = vmatpush1.msra.mxu0 0.0
  %322 = vmatprep.subr.mxu0 0.0
  %323 = vmatpush1.msra.mxu0 0.0
  %324 = vmatprep.subr.mxu0 0.0
  %325 = vmatpush1.msra.mxu0 0.0
  %326 = vmatprep.subr.mxu0 0.0
  %327 = vmatpush1.msra.mxu0 0.0
  %328 = vmatprep.subr.mxu0 0.0
  %329 = vmatpush1.msra.mxu0 0.0
  %330 = vmatprep.subr.mxu0 0.0
  %331 = vmatpush1.msra.mxu0 0.0
  %332 = vmatprep.subr.mxu0 0.0
  %333 = vmatpush1.msra.mxu0 0.0
  %334 = vmatprep.subr.mxu0 0.0
  %335 = vmatpush1.msra.mxu0 0.0
  %336 = vmatprep.subr.mxu0 0.0
  %337 = vmatpush1.msra.mxu0 0.0
  %338 = vmatprep.subr.mxu0 0.0
  %339 = vmatpush1.msra.mxu0 0.0
  %340 = vmatprep.subr.mxu0 0.0
  %341 = vmatpush1.msra.mxu0 0.0
  %342 = vmatprep.subr.mxu0 0.0
  %343 = vmatpush1.msra.mxu0 0.0
  %344 = vmatprep.subr.mxu0 0.0
  %345 = vmatpush1.msra.mxu0 0.0
  %346 = vmatprep.subr.mxu0 0.0
  %347 = vmatpush1.msra.mxu0 0.0
  %348 = vmatprep.subr.mxu0 0.0
  %349 = vmatpush1.msra.mxu0 0.0
  %350 = vmatprep.subr.mxu0 0.0
  %351 = vmatpush1.msra.mxu0 0.0
  %352 = vmatprep.subr.mxu0 0.0
  %353 = vmatpush1.msra.mxu0 0.0
  %354 = vmatprep.subr.mxu0 0.0
  %355 = vmatpush1.msra.mxu0 0.0
  %356 = vmatprep.subr.mxu0 0.0
  %357 = vmatpush1.msra.mxu0 0.0
  %358 = vmatprep.subr.mxu0 0.0
  %359 = vmatpush1.msra.mxu0 0.0
  %360 = vmatprep.subr.mxu0 0.0
  %361 = vmatpush1.msra.mxu0 0.0
  %362 = vmatprep.subr.mxu0 0.0
  %363 = vmatpush1.msra.mxu0 0.0
  %364 = vmatprep.subr.mxu0 0.0
  %365 = vmatpush1.msra.mxu0 0.0
  %366 = vmatprep.subr.mxu0 0.0
  %367 = vmatpush1.msra.mxu0 0.0
  %368 = vmatprep.subr.mxu0 0.0
  %369 = vmatpush1.msra.mxu0 0.0
  %370 = vmatprep.mubr.f32.mxu0 0.0
  %371 = vmatmul.mubr.f32.gmra.mrb[0].mxu0 %v300
  %v372 = vpop.f32.mrb[0].mxu0
  %v373 = vadd.f32 0.0, %v372
  %v374 = vpop.f32.mrb[0].mxu0
  %v375 = vadd.f32 0.0, %v374
  %376 = vdwg.mxu0
  %v377 = vadd.f32 %v260, %v373
  %v378 = vadd.f32 %v262, %v375
  %v379 = vld [vmem:[#allocation2] sm:$0xff]
  %v380 = vld [vmem:[#allocation2 + $0x8] sm:$0xf]
  %381 = vrot.lane.b32.xlu0 %v85, 16
  %v382 = vpop.permute.xlu0 %381
  %v383 = vrot.slane %v382, 4
  %vm384 = vcmask 130048
  %v385 = vsel %vm384, %v383, %v382
  %v388 = vmul.f32 %v379, %v385
  %v389 = vmul.f32 %v380, %v383
  %s390 = scalar_lea.vmem %s3, 12
  %v391 = vld [vmem:[%s390] sm:$0xf]
  %v394 = vcombine.high %v388, %v388
  %395 = vrot.lane.b32.xlu0 %v388, 112
  %v396 = vpop.permute.xlu0 %395
  %397 = vrot.lane.b32.xlu0 %v394, 112
  %v398 = vpop.permute.xlu0 %397
  %399 = vrot.lane.b32.xlu0 %v389, 112
  %v400 = vpop.permute.xlu0 %399
  %vm401 = vcmask 916480
  %v402 = vsel %vm401, %v396, %v398
  %v403 = vsel %vm401, %v398, %v400
  %v405 = vsel %vm104, %v391, 0
  %v407 = vsel %vm108, %v402, 0
  %v409 = vsel %vm108, %v403, 0
  %411 = vmatprep.subr.mxu0 %v409
  %412 = vmatpush1.msra.mxu0 %v407
  %413 = vmatprep.subr.mxu0 0.0
  %414 = vmatpush1.msra.mxu0 0.0
  %415 = vmatprep.subr.mxu0 0.0
  %416 = vmatpush1.msra.mxu0 0.0
  %417 = vmatprep.subr.mxu0 0.0
  %418 = vmatpush1.msra.mxu0 0.0
  %419 = vmatprep.subr.mxu0 0.0
  %420 = vmatpush1.msra.mxu0 0.0
  %421 = vmatprep.subr.mxu0 0.0
  %422 = vmatpush1.msra.mxu0 0.0
  %423 = vmatprep.subr.mxu0 0.0
  %424 = vmatpush1.msra.mxu0 0.0
  %425 = vmatprep.subr.mxu0 0.0
  %426 = vmatpush1.msra.mxu0 0.0
  %427 = vmatprep.subr.mxu0 0.0
  %428 = vmatpush1.msra.mxu0 0.0
  %429 = vmatprep.subr.mxu0 0.0
  %430 = vmatpush1.msra.mxu0 0.0
  %431 = vmatprep.subr.mxu0 0.0
  %432 = vmatpush1.msra.mxu0 0.0
  %433 = vmatprep.subr.mxu0 0.0
  %434 = vmatpush1.msra.mxu0 0.0
  %435 = vmatprep.subr.mxu0 0.0
  %436 = vmatpush1.msra.mxu0 0.0
  %437 = vmatprep.subr.mxu0 0.0
  %438 = vmatpush1.msra.mxu0 0.0
  %439 = vmatprep.subr.mxu0 0.0
  %440 = vmatpush1.msra.mxu0 0.0
  %441 = vmatprep.subr.mxu0 0.0
  %442 = vmatpush1.msra.mxu0 0.0
  %443 = vmatprep.subr.mxu0 0.0
  %444 = vmatpush1.msra.mxu0 0.0
  %445 = vmatprep.subr.mxu0 0.0
  %446 = vmatpush1.msra.mxu0 0.0
  %447 = vmatprep.subr.mxu0 0.0
  %448 = vmatpush1.msra.mxu0 0.0
  %449 = vmatprep.subr.mxu0 0.0
  %450 = vmatpush1.msra.mxu0 0.0
  %451 = vmatprep.subr.mxu0 0.0
  %452 = vmatpush1.msra.mxu0 0.0
  %453 = vmatprep.subr.mxu0 0.0
  %454 = vmatpush1.msra.mxu0 0.0
  %455 = vmatprep.subr.mxu0 0.0
  %456 = vmatpush1.msra.mxu0 0.0
  %457 = vmatprep.subr.mxu0 0.0
  %458 = vmatpush1.msra.mxu0 0.0
  %459 = vmatprep.subr.mxu0 0.0
  %460 = vmatpush1.msra.mxu0 0.0
  %461 = vmatprep.subr.mxu0 0.0
  %462 = vmatpush1.msra.mxu0 0.0
  %463 = vmatprep.subr.mxu0 0.0
  %464 = vmatpush1.msra.mxu0 0.0
  %465 = vmatprep.subr.mxu0 0.0
  %466 = vmatpush1.msra.mxu0 0.0
  %467 = vmatprep.subr.mxu0 0.0
  %468 = vmatpush1.msra.mxu0 0.0
  %469 = vmatprep.subr.mxu0 0.0
  %470 = vmatpush1.msra.mxu0 0.0
  %471 = vmatprep.subr.mxu0 0.0
  %472 = vmatpush1.msra.mxu0 0.0
  %473 = vmatprep.subr.mxu0 0.0
  %474 = vmatpush1.msra.mxu0 0.0
  %475 = vmatprep.mubr.f32.mxu0 0.0
  %476 = vmatmul.mubr.f32.gmra.mrb[0].mxu0 %v405
  %v477 = vpop.f32.mrb[0].mxu0
  %v478 = vadd.f32 0.0, %v477
  %v479 = vpop.f32.mrb[0].mxu0
  %v480 = vadd.f32 0.0, %v479
  %481 = vdwg.mxu0
  %v482 = vadd.f32 %v377, %v478
  %v483 = vadd.f32 %v378, %v480
  %v484 = vld [vmem:[#allocation2] sm:$0xff]
  %v485 = vld [vmem:[#allocation2 + $0x8] sm:$0xf]
  %s486 = scalar_lea.vmem %s3, 16
  %v487 = vld [vmem:[%s486] sm:$0xf]
  %v490 = vcombine.high %v484, %v484
  %491 = vrot.lane.b32.xlu0 %v484, 111
  %v492 = vpop.permute.xlu0 %491
  %493 = vrot.lane.b32.xlu0 %v490, 111
  %v494 = vpop.permute.xlu0 %493
  %495 = vrot.lane.b32.xlu0 %v485, 111
  %v496 = vpop.permute.xlu0 %495
  %vm497 = vcmask 908288
  %v498 = vsel %vm497, %v492, %v494
  %v499 = vsel %vm497, %v494, %v496
  %v501 = vsel %vm104, %v487, 0
  %v503 = vsel %vm108, %v498, 0
  %v505 = vsel %vm108, %v499, 0
  %507 = vmatprep.subr.mxu0 %v505
  %508 = vmatpush1.msra.mxu0 %v503
  %509 = vmatprep.subr.mxu0 0.0
  %510 = vmatpush1.msra.mxu0 0.0
  %511 = vmatprep.subr.mxu0 0.0
  %512 = vmatpush1.msra.mxu0 0.0
  %513 = vmatprep.subr.mxu0 0.0
  %514 = vmatpush1.msra.mxu0 0.0
  %515 = vmatprep.subr.mxu0 0.0
  %516 = vmatpush1.msra.mxu0 0.0
  %517 = vmatprep.subr.mxu0 0.0
  %518 = vmatpush1.msra.mxu0 0.0
  %519 = vmatprep.subr.mxu0 0.0
  %520 = vmatpush1.msra.mxu0 0.0
  %521 = vmatprep.subr.mxu0 0.0
  %522 = vmatpush1.msra.mxu0 0.0
  %523 = vmatprep.subr.mxu0 0.0
  %524 = vmatpush1.msra.mxu0 0.0
  %525 = vmatprep.subr.mxu0 0.0
  %526 = vmatpush1.msra.mxu0 0.0
  %527 = vmatprep.subr.mxu0 0.0
  %528 = vmatpush1.msra.mxu0 0.0
  %529 = vmatprep.subr.mxu0 0.0
  %530 = vmatpush1.msra.mxu0 0.0
  %531 = vmatprep.subr.mxu0 0.0
  %532 = vmatpush1.msra.mxu0 0.0
  %533 = vmatprep.subr.mxu0 0.0
  %534 = vmatpush1.msra.mxu0 0.0
  %535 = vmatprep.subr.mxu0 0.0
  %536 = vmatpush1.msra.mxu0 0.0
  %537 = vmatprep.subr.mxu0 0.0
  %538 = vmatpush1.msra.mxu0 0.0
  %539 = vmatprep.subr.mxu0 0.0
  %540 = vmatpush1.msra.mxu0 0.0
  %541 = vmatprep.subr.mxu0 0.0
  %542 = vmatpush1.msra.mxu0 0.0
  %543 = vmatprep.subr.mxu0 0.0
  %544 = vmatpush1.msra.mxu0 0.0
  %545 = vmatprep.subr.mxu0 0.0
  %546 = vmatpush1.msra.mxu0 0.0
  %547 = vmatprep.subr.mxu0 0.0
  %548 = vmatpush1.msra.mxu0 0.0
  %549 = vmatprep.subr.mxu0 0.0
  %550 = vmatpush1.msra.mxu0 0.0
  %551 = vmatprep.subr.mxu0 0.0
  %552 = vmatpush1.msra.mxu0 0.0
  %553 = vmatprep.subr.mxu0 0.0
  %554 = vmatpush1.msra.mxu0 0.0
  %555 = vmatprep.subr.mxu0 0.0
  %556 = vmatpush1.msra.mxu0 0.0
  %557 = vmatprep.subr.mxu0 0.0
  %558 = vmatpush1.msra.mxu0 0.0
  %559 = vmatprep.subr.mxu0 0.0
  %560 = vmatpush1.msra.mxu0 0.0
  %561 = vmatprep.subr.mxu0 0.0
  %562 = vmatpush1.msra.mxu0 0.0
  %563 = vmatprep.subr.mxu0 0.0
  %564 = vmatpush1.msra.mxu0 0.0
  %565 = vmatprep.subr.mxu0 0.0
  %566 = vmatpush1.msra.mxu0 0.0
  %567 = vmatprep.subr.mxu0 0.0
  %568 = vmatpush1.msra.mxu0 0.0
  %569 = vmatprep.subr.mxu0 0.0
  %570 = vmatpush1.msra.mxu0 0.0
  %571 = vmatprep.mubr.f32.mxu0 0.0
  %572 = vmatmul.mubr.f32.gmra.mrb[0].mxu0 %v501
  %v573 = vpop.f32.mrb[0].mxu0
  %v574 = vadd.f32 0.0, %v573
  %v575 = vpop.f32.mrb[0].mxu0
  %v576 = vadd.f32 0.0, %v575
  %577 = vdwg.mxu0
  %v578 = vadd.f32 %v482, %v574
  %v579 = vadd.f32 %v483, %v576
  %v580 = vld [vmem:[#allocation2] sm:$0xff]
  %v581 = vld [vmem:[#allocation2 + $0x8] sm:$0xf]
  %582 = vrot.lane.b32.xlu0 %v275, 18
  %v583 = vpop.permute.xlu0 %582
  %v584 = vrot.slane %v583, 4
  %vm585 = vcmask 146432
  %v586 = vsel %vm585, %v584, %v583
  %v589 = vmul.f32 %v580, %v586
  %v590 = vmul.f32 %v581, %v584
  %s591 = scalar_lea.vmem %s3, 20
  %v592 = vld [vmem:[%s591] sm:$0xf]
  %v595 = vcombine.high %v589, %v589
  %596 = vrot.lane.b32.xlu0 %v589, 110
  %v597 = vpop.permute.xlu0 %596
  %598 = vrot.lane.b32.xlu0 %v595, 110
  %v599 = vpop.permute.xlu0 %598
  %600 = vrot.lane.b32.xlu0 %v590, 110
  %v601 = vpop.permute.xlu0 %600
  %vm602 = vcmask 900096
  %v603 = vsel %vm602, %v597, %v599
  %v604 = vsel %vm602, %v599, %v601
  %v606 = vsel %vm104, %v592, 0
  %v608 = vsel %vm108, %v603, 0
  %v610 = vsel %vm108, %v604, 0
  %612 = vmatprep.subr.mxu0 %v610
  %613 = vmatpush1.msra.mxu0 %v608
  %614 = vmatprep.subr.mxu0 0.0
  %615 = vmatpush1.msra.mxu0 0.0
  %616 = vmatprep.subr.mxu0 0.0
  %617 = vmatpush1.msra.mxu0 0.0
  %618 = vmatprep.subr.mxu0 0.0
  %619 = vmatpush1.msra.mxu0 0.0
  %620 = vmatprep.subr.mxu0 0.0
  %621 = vmatpush1.msra.mxu0 0.0
  %622 = vmatprep.subr.mxu0 0.0
  %623 = vmatpush1.msra.mxu0 0.0
  %624 = vmatprep.subr.mxu0 0.0
  %625 = vmatpush1.msra.mxu0 0.0
  %626 = vmatprep.subr.mxu0 0.0
  %627 = vmatpush1.msra.mxu0 0.0
  %628 = vmatprep.subr.mxu0 0.0
  %629 = vmatpush1.msra.mxu0 0.0
  %630 = vmatprep.subr.mxu0 0.0
  %631 = vmatpush1.msra.mxu0 0.0
  %632 = vmatprep.subr.mxu0 0.0
  %633 = vmatpush1.msra.mxu0 0.0
  %634 = vmatprep.subr.mxu0 0.0
  %635 = vmatpush1.msra.mxu0 0.0
  %636 = vmatprep.subr.mxu0 0.0
  %637 = vmatpush1.msra.mxu0 0.0
  %638 = vmatprep.subr.mxu0 0.0
  %639 = vmatpush1.msra.mxu0 0.0
  %640 = vmatprep.subr.mxu0 0.0
  %641 = vmatpush1.msra.mxu0 0.0
  %642 = vmatprep.subr.mxu0 0.0
  %643 = vmatpush1.msra.mxu0 0.0
  %644 = vmatprep.subr.mxu0 0.0
  %645 = vmatpush1.msra.mxu0 0.0
  %646 = vmatprep.subr.mxu0 0.0
  %647 = vmatpush1.msra.mxu0 0.0
  %648 = vmatprep.subr.mxu0 0.0
  %649 = vmatpush1.msra.mxu0 0.0
  %650 = vmatprep.subr.mxu0 0.0
  %651 = vmatpush1.msra.mxu0 0.0
  %652 = vmatprep.subr.mxu0 0.0
  %653 = vmatpush1.msra.mxu0 0.0
  %654 = vmatprep.subr.mxu0 0.0
  %655 = vmatpush1.msra.mxu0 0.0
  %656 = vmatprep.subr.mxu0 0.0
  %657 = vmatpush1.msra.mxu0 0.0
  %658 = vmatprep.subr.mxu0 0.0
  %659 = vmatpush1.msra.mxu0 0.0
  %660 = vmatprep.subr.mxu0 0.0
  %661 = vmatpush1.msra.mxu0 0.0
  %662 = vmatprep.subr.mxu0 0.0
  %663 = vmatpush1.msra.mxu0 0.0
  %664 = vmatprep.subr.mxu0 0.0
  %665 = vmatpush1.msra.mxu0 0.0
  %666 = vmatprep.subr.mxu0 0.0
  %667 = vmatpush1.msra.mxu0 0.0
  %668 = vmatprep.subr.mxu0 0.0
  %669 = vmatpush1.msra.mxu0 0.0
  %670 = vmatprep.subr.mxu0 0.0
  %671 = vmatpush1.msra.mxu0 0.0
  %672 = vmatprep.subr.mxu0 0.0
  %673 = vmatpush1.msra.mxu0 0.0
  %674 = vmatprep.subr.mxu0 0.0
  %675 = vmatpush1.msra.mxu0 0.0
  %676 = vmatprep.mubr.f32.mxu0 0.0
  %677 = vmatmul.mubr.f32.gmra.mrb[0].mxu0 %v606
  %v678 = vpop.f32.mrb[0].mxu0
  %v679 = vadd.f32 0.0, %v678
  %v680 = vpop.f32.mrb[0].mxu0
  %v681 = vadd.f32 0.0, %v680
  %682 = vdwg.mxu0
  %v683 = vadd.f32 %v578, %v679
  %v684 = vadd.f32 %v579, %v681
  %v685 = vld [vmem:[#allocation2] sm:$0xff]
  %v686 = vld [vmem:[#allocation2 + $0x8] sm:$0xf]
  %687 = vrot.lane.b32.xlu0 %v85, 32
  %v688 = vpop.permute.xlu0 %687
  %v689 = vrot.slane %v688, 4
  %vm690 = vcmask 261120
  %v691 = vsel %vm690, %v689, %v688
  %v694 = vmul.f32 %v685, %v691
  %v695 = vmul.f32 %v686, %v689
  %s696 = scalar_lea.vmem %s3, 24
  %v697 = vld [vmem:[%s696] sm:$0xf]
  %v700 = vcombine.high %v694, %v694
  %701 = vrot.lane.b32.xlu0 %v694, 96
  %v702 = vpop.permute.xlu0 %701
  %703 = vrot.lane.b32.xlu0 %v700, 96
  %v704 = vpop.permute.xlu0 %703
  %705 = vrot.lane.b32.xlu0 %v695, 96
  %v706 = vpop.permute.xlu0 %705
  %vm707 = vcmask 785408
  %v708 = vsel %vm707, %v702, %v704
  %v709 = vsel %vm707, %v704, %v706
  %v711 = vsel %vm104, %v697, 0
  %v713 = vsel %vm108, %v708, 0
  %v715 = vsel %vm108, %v709, 0
  %717 = vmatprep.subr.mxu0 %v715
  %718 = vmatpush1.msra.mxu0 %v713
  %719 = vmatprep.subr.mxu0 0.0
  %720 = vmatpush1.msra.mxu0 0.0
  %721 = vmatprep.subr.mxu0 0.0
  %722 = vmatpush1.msra.mxu0 0.0
  %723 = vmatprep.subr.mxu0 0.0
  %724 = vmatpush1.msra.mxu0 0.0
  %725 = vmatprep.subr.mxu0 0.0
  %726 = vmatpush1.msra.mxu0 0.0
  %727 = vmatprep.subr.mxu0 0.0
  %728 = vmatpush1.msra.mxu0 0.0
  %729 = vmatprep.subr.mxu0 0.0
  %730 = vmatpush1.msra.mxu0 0.0
  %731 = vmatprep.subr.mxu0 0.0
  %732 = vmatpush1.msra.mxu0 0.0
  %733 = vmatprep.subr.mxu0 0.0
  %734 = vmatpush1.msra.mxu0 0.0
  %735 = vmatprep.subr.mxu0 0.0
  %736 = vmatpush1.msra.mxu0 0.0
  %737 = vmatprep.subr.mxu0 0.0
  %738 = vmatpush1.msra.mxu0 0.0
  %739 = vmatprep.subr.mxu0 0.0
  %740 = vmatpush1.msra.mxu0 0.0
  %741 = vmatprep.subr.mxu0 0.0
  %742 = vmatpush1.msra.mxu0 0.0
  %743 = vmatprep.subr.mxu0 0.0
  %744 = vmatpush1.msra.mxu0 0.0
  %745 = vmatprep.subr.mxu0 0.0
  %746 = vmatpush1.msra.mxu0 0.0
  %747 = vmatprep.subr.mxu0 0.0
  %748 = vmatpush1.msra.mxu0 0.0
  %749 = vmatprep.subr.mxu0 0.0
  %750 = vmatpush1.msra.mxu0 0.0
  %751 = vmatprep.subr.mxu0 0.0
  %752 = vmatpush1.msra.mxu0 0.0
  %753 = vmatprep.subr.mxu0 0.0
  %754 = vmatpush1.msra.mxu0 0.0
  %755 = vmatprep.subr.mxu0 0.0
  %756 = vmatpush1.msra.mxu0 0.0
  %757 = vmatprep.subr.mxu0 0.0
  %758 = vmatpush1.msra.mxu0 0.0
  %759 = vmatprep.subr.mxu0 0.0
  %760 = vmatpush1.msra.mxu0 0.0
  %761 = vmatprep.subr.mxu0 0.0
  %762 = vmatpush1.msra.mxu0 0.0
  %763 = vmatprep.subr.mxu0 0.0
  %764 = vmatpush1.msra.mxu0 0.0
  %765 = vmatprep.subr.mxu0 0.0
  %766 = vmatpush1.msra.mxu0 0.0
  %767 = vmatprep.subr.mxu0 0.0
  %768 = vmatpush1.msra.mxu0 0.0
  %769 = vmatprep.subr.mxu0 0.0
  %770 = vmatpush1.msra.mxu0 0.0
  %771 = vmatprep.subr.mxu0 0.0
  %772 = vmatpush1.msra.mxu0 0.0
  %773 = vmatprep.subr.mxu0 0.0
  %774 = vmatpush1.msra.mxu0 0.0
  %775 = vmatprep.subr.mxu0 0.0
  %776 = vmatpush1.msra.mxu0 0.0
  %777 = vmatprep.subr.mxu0 0.0
  %778 = vmatpush1.msra.mxu0 0.0
  %779 = vmatprep.subr.mxu0 0.0
  %780 = vmatpush1.msra.mxu0 0.0
  %781 = vmatprep.mubr.f32.mxu0 0.0
  %782 = vmatmul.mubr.f32.gmra.mrb[0].mxu0 %v711
  %v783 = vpop.f32.mrb[0].mxu0
  %v784 = vadd.f32 0.0, %v783
  %v785 = vpop.f32.mrb[0].mxu0
  %v786 = vadd.f32 0.0, %v785
  %787 = vdwg.mxu0
  %v788 = vadd.f32 %v683, %v784
  %v789 = vadd.f32 %v684, %v786
  %v790 = vld [vmem:[#allocation2] sm:$0xff]
  %v791 = vld [vmem:[#allocation2 + $0x8] sm:$0xf]
  %s792 = scalar_lea.vmem %s3, 28
  %v793 = vld [vmem:[%s792] sm:$0xf]
  %v796 = vcombine.high %v790, %v790
  %797 = vrot.lane.b32.xlu0 %v790, 95
  %v798 = vpop.permute.xlu0 %797
  %799 = vrot.lane.b32.xlu0 %v796, 95
  %v800 = vpop.permute.xlu0 %799
  %801 = vrot.lane.b32.xlu0 %v791, 95
  %v802 = vpop.permute.xlu0 %801
  %vm803 = vcmask 777216
  %v804 = vsel %vm803, %v798, %v800
  %v805 = vsel %vm803, %v800, %v802
  %v807 = vsel %vm104, %v793, 0
  %v809 = vsel %vm108, %v804, 0
  %v811 = vsel %vm108, %v805, 0
  %813 = vmatprep.subr.mxu0 %v811
  %814 = vmatpush1.msra.mxu0 %v809
  %815 = vmatprep.subr.mxu0 0.0
  %816 = vmatpush1.msra.mxu0 0.0
  %817 = vmatprep.subr.mxu0 0.0
  %818 = vmatpush1.msra.mxu0 0.0
  %819 = vmatprep.subr.mxu0 0.0
  %820 = vmatpush1.msra.mxu0 0.0
  %821 = vmatprep.subr.mxu0 0.0
  %822 = vmatpush1.msra.mxu0 0.0
  %823 = vmatprep.subr.mxu0 0.0
  %824 = vmatpush1.msra.mxu0 0.0
  %825 = vmatprep.subr.mxu0 0.0
  %826 = vmatpush1.msra.mxu0 0.0
  %827 = vmatprep.subr.mxu0 0.0
  %828 = vmatpush1.msra.mxu0 0.0
  %829 = vmatprep.subr.mxu0 0.0
  %830 = vmatpush1.msra.mxu0 0.0
  %831 = vmatprep.subr.mxu0 0.0
  %832 = vmatpush1.msra.mxu0 0.0
  %833 = vmatprep.subr.mxu0 0.0
  %834 = vmatpush1.msra.mxu0 0.0
  %835 = vmatprep.subr.mxu0 0.0
  %836 = vmatpush1.msra.mxu0 0.0
  %837 = vmatprep.subr.mxu0 0.0
  %838 = vmatpush1.msra.mxu0 0.0
  %839 = vmatprep.subr.mxu0 0.0
  %840 = vmatpush1.msra.mxu0 0.0
  %841 = vmatprep.subr.mxu0 0.0
  %842 = vmatpush1.msra.mxu0 0.0
  %843 = vmatprep.subr.mxu0 0.0
  %844 = vmatpush1.msra.mxu0 0.0
  %845 = vmatprep.subr.mxu0 0.0
  %846 = vmatpush1.msra.mxu0 0.0
  %847 = vmatprep.subr.mxu0 0.0
  %848 = vmatpush1.msra.mxu0 0.0
  %849 = vmatprep.subr.mxu0 0.0
  %850 = vmatpush1.msra.mxu0 0.0
  %851 = vmatprep.subr.mxu0 0.0
  %852 = vmatpush1.msra.mxu0 0.0
  %853 = vmatprep.subr.mxu0 0.0
  %854 = vmatpush1.msra.mxu0 0.0
  %855 = vmatprep.subr.mxu0 0.0
  %856 = vmatpush1.msra.mxu0 0.0
  %857 = vmatprep.subr.mxu0 0.0
  %858 = vmatpush1.msra.mxu0 0.0
  %859 = vmatprep.subr.mxu0 0.0
  %860 = vmatpush1.msra.mxu0 0.0
  %861 = vmatprep.subr.mxu0 0.0
  %862 = vmatpush1.msra.mxu0 0.0
  %863 = vmatprep.subr.mxu0 0.0
  %864 = vmatpush1.msra.mxu0 0.0
  %865 = vmatprep.subr.mxu0 0.0
  %866 = vmatpush1.msra.mxu0 0.0
  %867 = vmatprep.subr.mxu0 0.0
  %868 = vmatpush1.msra.mxu0 0.0
  %869 = vmatprep.subr.mxu0 0.0
  %870 = vmatpush1.msra.mxu0 0.0
  %871 = vmatprep.subr.mxu0 0.0
  %872 = vmatpush1.msra.mxu0 0.0
  %873 = vmatprep.subr.mxu0 0.0
  %874 = vmatpush1.msra.mxu0 0.0
  %875 = vmatprep.subr.mxu0 0.0
  %876 = vmatpush1.msra.mxu0 0.0
  %877 = vmatprep.mubr.f32.mxu0 0.0
  %878 = vmatmul.mubr.f32.gmra.mrb[0].mxu0 %v807
  %v879 = vpop.f32.mrb[0].mxu0
  %v880 = vadd.f32 0.0, %v879
  %v881 = vpop.f32.mrb[0].mxu0
  %v882 = vadd.f32 0.0, %v881
  %883 = vdwg.mxu0
  %v884 = vadd.f32 %v788, %v880
  %v885 = vadd.f32 %v789, %v882
  %v886 = vld [vmem:[#allocation2] sm:$0xff]
  %v887 = vld [vmem:[#allocation2 + $0x8] sm:$0xf]
  %888 = vrot.lane.b32.xlu0 %v275, 34
  %v889 = vpop.permute.xlu0 %888
  %v890 = vrot.slane %v889, 4
  %vm891 = vcmask 277504
  %v892 = vsel %vm891, %v890, %v889
  %v895 = vmul.f32 %v886, %v892
  %v896 = vmul.f32 %v887, %v890
  %s897 = scalar_lea.vmem %s3, 32
  %v898 = vld [vmem:[%s897] sm:$0xf]
  %v901 = vcombine.high %v895, %v895
  %902 = vrot.lane.b32.xlu0 %v895, 94
  %v903 = vpop.permute.xlu0 %902
  %904 = vrot.lane.b32.xlu0 %v901, 94
  %v905 = vpop.permute.xlu0 %904
  %906 = vrot.lane.b32.xlu0 %v896, 94
  %v907 = vpop.permute.xlu0 %906
  %vm908 = vcmask 769024
  %v909 = vsel %vm908, %v903, %v905
  %v910 = vsel %vm908, %v905, %v907
  %v912 = vsel %vm104, %v898, 0
  %v914 = vsel %vm108, %v909, 0
  %v916 = vsel %vm108, %v910, 0
  %918 = vmatprep.subr.mxu0 %v916
  %919 = vmatpush1.msra.mxu0 %v914
  %920 = vmatprep.subr.mxu0 0.0
  %921 = vmatpush1.msra.mxu0 0.0
  %922 = vmatprep.subr.mxu0 0.0
  %923 = vmatpush1.msra.mxu0 0.0
  %924 = vmatprep.subr.mxu0 0.0
  %925 = vmatpush1.msra.mxu0 0.0
  %926 = vmatprep.subr.mxu0 0.0
  %927 = vmatpush1.msra.mxu0 0.0
  %928 = vmatprep.subr.mxu0 0.0
  %929 = vmatpush1.msra.mxu0 0.0
  %930 = vmatprep.subr.mxu0 0.0
  %931 = vmatpush1.msra.mxu0 0.0
  %932 = vmatprep.subr.mxu0 0.0
  %933 = vmatpush1.msra.mxu0 0.0
  %934 = vmatprep.subr.mxu0 0.0
  %935 = vmatpush1.msra.mxu0 0.0
  %936 = vmatprep.subr.mxu0 0.0
  %937 = vmatpush1.msra.mxu0 0.0
  %938 = vmatprep.subr.mxu0 0.0
  %939 = vmatpush1.msra.mxu0 0.0
  %940 = vmatprep.subr.mxu0 0.0
  %941 = vmatpush1.msra.mxu0 0.0
  %942 = vmatprep.subr.mxu0 0.0
  %943 = vmatpush1.msra.mxu0 0.0
  %944 = vmatprep.subr.mxu0 0.0
  %945 = vmatpush1.msra.mxu0 0.0
  %946 = vmatprep.subr.mxu0 0.0
  %947 = vmatpush1.msra.mxu0 0.0
  %948 = vmatprep.subr.mxu0 0.0
  %949 = vmatpush1.msra.mxu0 0.0
  %950 = vmatprep.subr.mxu0 0.0
  %951 = vmatpush1.msra.mxu0 0.0
  %952 = vmatprep.subr.mxu0 0.0
  %953 = vmatpush1.msra.mxu0 0.0
  %954 = vmatprep.subr.mxu0 0.0
  %955 = vmatpush1.msra.mxu0 0.0
  %956 = vmatprep.subr.mxu0 0.0
  %957 = vmatpush1.msra.mxu0 0.0
  %958 = vmatprep.subr.mxu0 0.0
  %959 = vmatpush1.msra.mxu0 0.0
  %960 = vmatprep.subr.mxu0 0.0
  %961 = vmatpush1.msra.mxu0 0.0
  %962 = vmatprep.subr.mxu0 0.0
  %963 = vmatpush1.msra.mxu0 0.0
  %964 = vmatprep.subr.mxu0 0.0
  %965 = vmatpush1.msra.mxu0 0.0
  %966 = vmatprep.subr.mxu0 0.0
  %967 = vmatpush1.msra.mxu0 0.0
  %968 = vmatprep.subr.mxu0 0.0
  %969 = vmatpush1.msra.mxu0 0.0
  %970 = vmatprep.subr.mxu0 0.0
  %971 = vmatpush1.msra.mxu0 0.0
  %972 = vmatprep.subr.mxu0 0.0
  %973 = vmatpush1.msra.mxu0 0.0
  %974 = vmatprep.subr.mxu0 0.0
  %975 = vmatpush1.msra.mxu0 0.0
  %976 = vmatprep.subr.mxu0 0.0
  %977 = vmatpush1.msra.mxu0 0.0
  %978 = vmatprep.subr.mxu0 0.0
  %979 = vmatpush1.msra.mxu0 0.0
  %980 = vmatprep.subr.mxu0 0.0
  %981 = vmatpush1.msra.mxu0 0.0
  %982 = vmatprep.mubr.f32.mxu0 0.0
  %983 = vmatmul.mubr.f32.gmra.mrb[0].mxu0 %v912
  %v984 = vpop.f32.mrb[0].mxu0
  %v985 = vadd.f32 0.0, %v984
  %v986 = vpop.f32.mrb[0].mxu0
  %v987 = vadd.f32 0.0, %v986
  %988 = vdwg.mxu0
  %v989 = vadd.f32 %v884, %v985
  %v990 = vadd.f32 %v885, %v987
  %v991 = vld [vmem:[%s4] sm:$0xf]
  %993 = vset.pattern.permute.xlu0 0
  %994 = vperm.xlu0 %993, %v991
  %v995 = vpop.permute.xlu0 %994
  %v997 = vadd.f32 %v989, %v995
  %v998 = vadd.f32 %v990, %v995
  %v1001 = vcombine.low %v997, %v998
  %1003 = vst [vmem:[%s6] sm:$0xff] %v1001
  %v1004 = vsel %vm108, %v997, 0.0
  %v1005 = vsel %vm108, %v998, 0.0
  %v1006 = vadd.f32 %v1004, %v1005
  %1007 = vadd.xlane.f32.xlu0 %v1006
  %v1008 = vpop.xlane.xlu0 %1007
  %v1009 = vadd.f32 %v1008, 0.0
  %v1010 = vmul.f32 %v997, %v997
  %v1011 = vmul.f32 %v998, %v998
  %v1012 = vsel %vm108, %v1010, 0.0
  %v1013 = vsel %vm108, %v1011, 0.0
  %v1014 = vadd.f32 %v1012, %v1013
  %1015 = vadd.xlane.f32.xlu0 %v1014
  %v1016 = vpop.xlane.xlu0 %1015
  %v1017 = vadd.f32 %v1016, 0.0
  %s1018 = scalar_lea.vmem %s0, 8
  %v1019 = vld [vmem:[%s1018] sm:$0xff]
  %v1020 = vld [vmem:[%s1] sm:$0xf]
  %1022 = vset.pattern.permute.xlu0 0
  %1023 = vperm.xlu0 %1022, %v1020
  %v1024 = vpop.permute.xlu0 %1023
  %v1026 = vunpack.c.l.s4 839922192
  %v1027 = vunpack.c.0.s8 %v1026
  %v1028 = vlaneseq
  %v1029 = vshrl.u32 %v1028, 7
  %v1030 = vsub.s32 %v1027, %v1029
  %v1031 = vrot.slane %v1024, %v1030
  %v1033 = vmul.f32 %v1019, %v1031
  %v1034 = vld [vmem:[%s2] sm:$0xf]
  %1036 = vset.pattern.permute.xlu0 0
  %1037 = vperm.xlu0 %1036, %v1034
  %v1038 = vpop.permute.xlu0 %1037
  %v1040 = vunpack.c.l.s4 839922192
  %v1041 = vunpack.c.0.s8 %v1040
  %v1042 = vlaneseq
  %v1043 = vshrl.u32 %v1042, 7
  %v1044 = vsub.s32 %v1041, %v1043
  %v1045 = vrot.slane %v1038, %v1044
  %v1047 = vadd.f32 %v1033, %v1045
  %v1048 = vmax.f32 %v1047, 0.0
  %s1049 = scalar_lea.vmem [#allocation2], 12
  %1050 = vst.msk [vmem:[%s1049] sm:$0xf] %vm58, 0.0
  %1051 = vst.msk [vmem:[%s1049 + $0x8] sm:$0xf] %vm60, 0.0
  %1053 = vrot.lane.b32.xlu0 %v1048, 17
  %v1054 = vpop.permute.xlu0 %1053
  %v1055 = vrot.slane %v1054, 4
  %v1056 = vsel %vm66, %v1055, %v1054
  %1059 = vst.msk [vmem:[%s1049] sm:$0xff] %vm72, %v1056
  %1060 = vst.msk [vmem:[%s1049 + $0x8] sm:$0xf] %vm58, %v1055
  %v1061 = vld [vmem:[%s1049] sm:$0xff]
  %v1062 = vmul.f32 %v1061, %v85
  %v1063 = vld [vmem:[%s3] sm:$0xf]
  %v1064 = vld [vmem:[%s1049 + $0x8] sm:$0xf]
  %v1065 = vld [vmem:[%s90] sm:$0xf]
  %v1068 = vcombine.high %v1061, %v1061
  %1069 = vrot.lane.b32.xlu0 %v1061, 127
  %v1070 = vpop.permute.xlu0 %1069
  %1071 = vrot.lane.b32.xlu0 %v1068, 127
  %v1072 = vpop.permute.xlu0 %1071
  %1073 = vrot.lane.b32.xlu0 %v1064, 127
  %v1074 = vpop.permute.xlu0 %1073
  %v1075 = vsel %vm101, %v1070, %v1072
  %v1076 = vsel %vm101, %v1072, %v1074
  %v1078 = vsel %vm104, %v1065, 0
  %v1080 = vsel %vm108, %v1075, 0
  %v1082 = vsel %vm108, %v1076, 0
  %1084 = vmatprep.subr.mxu0 %v1082
  %1085 = vmatpush1.msra.mxu0 %v1080
  %1086 = vmatprep.subr.mxu0 0.0
  %1087 = vmatpush1.msra.mxu0 0.0
  %1088 = vmatprep.subr.mxu0 0.0
  %1089 = vmatpush1.msra.mxu0 0.0
  %1090 = vmatprep.subr.mxu0 0.0
  %1091 = vmatpush1.msra.mxu0 0.0
  %1092 = vmatprep.subr.mxu0 0.0
  %1093 = vmatpush1.msra.mxu0 0.0
  %1094 = vmatprep.subr.mxu0 0.0
  %1095 = vmatpush1.msra.mxu0 0.0
  %1096 = vmatprep.subr.mxu0 0.0
  %1097 = vmatpush1.msra.mxu0 0.0
  %1098 = vmatprep.subr.mxu0 0.0
  %1099 = vmatpush1.msra.mxu0 0.0
  %1100 = vmatprep.subr.mxu0 0.0
  %1101 = vmatpush1.msra.mxu0 0.0
  %1102 = vmatprep.subr.mxu0 0.0
  %1103 = vmatpush1.msra.mxu0 0.0
  %1104 = vmatprep.subr.mxu0 0.0
  %1105 = vmatpush1.msra.mxu0 0.0
  %1106 = vmatprep.subr.mxu0 0.0
  %1107 = vmatpush1.msra.mxu0 0.0
  %1108 = vmatprep.subr.mxu0 0.0
  %1109 = vmatpush1.msra.mxu0 0.0
  %1110 = vmatprep.subr.mxu0 0.0
  %1111 = vmatpush1.msra.mxu0 0.0
  %1112 = vmatprep.subr.mxu0 0.0
  %1113 = vmatpush1.msra.mxu0 0.0
  %1114 = vmatprep.subr.mxu0 0.0
  %1115 = vmatpush1.msra.mxu0 0.0
  %1116 = vmatprep.subr.mxu0 0.0
  %1117 = vmatpush1.msra.mxu0 0.0
  %1118 = vmatprep.subr.mxu0 0.0
  %1119 = vmatpush1.msra.mxu0 0.0
  %1120 = vmatprep.subr.mxu0 0.0
  %1121 = vmatpush1.msra.mxu0 0.0
  %1122 = vmatprep.subr.mxu0 0.0
  %1123 = vmatpush1.msra.mxu0 0.0
  %1124 = vmatprep.subr.mxu0 0.0
  %1125 = vmatpush1.msra.mxu0 0.0
  %1126 = vmatprep.subr.mxu0 0.0
  %1127 = vmatpush1.msra.mxu0 0.0
  %1128 = vmatprep.subr.mxu0 0.0
  %1129 = vmatpush1.msra.mxu0 0.0
  %1130 = vmatprep.subr.mxu0 0.0
  %1131 = vmatpush1.msra.mxu0 0.0
  %1132 = vmatprep.subr.mxu0 0.0
  %1133 = vmatpush1.msra.mxu0 0.0
  %1134 = vmatprep.subr.mxu0 0.0
  %1135 = vmatpush1.msra.mxu0 0.0
  %1136 = vmatprep.subr.mxu0 0.0
  %1137 = vmatpush1.msra.mxu0 0.0
  %1138 = vmatprep.subr.mxu0 0.0
  %1139 = vmatpush1.msra.mxu0 0.0
  %1140 = vmatprep.subr.mxu0 0.0
  %1141 = vmatpush1.msra.mxu0 0.0
  %1142 = vmatprep.subr.mxu0 0.0
  %1143 = vmatpush1.msra.mxu0 0.0
  %1144 = vmatprep.subr.mxu0 0.0
  %1145 = vmatpush1.msra.mxu0 0.0
  %1146 = vmatprep.subr.mxu0 0.0
  %1147 = vmatpush1.msra.mxu0 0.0
  %1148 = vmatprep.mubr.f32.mxu0 0.0
  %1149 = vmatmul.mubr.f32.gmra.mrb[0].mxu0 %v1078
  %v1150 = vpop.f32.mrb[0].mxu0
  %v1151 = vadd.f32 0.0, %v1150
  %v1152 = vpop.f32.mrb[0].mxu0
  %v1153 = vadd.f32 0.0, %v1152
  %1154 = vdwg.mxu0
  %v1156 = vcombine.high %v1062, %v1062
  %v1158 = vsel %vm104, %v1063, 0
  %v1160 = vsel %vm108, %v1062, 0
  %v1162 = vsel %vm108, %v1156, 0
  %1164 = vmatprep.subr.mxu0 %v1162
  %1165 = vmatpush1.msra.mxu0 %v1160
  %1166 = vmatprep.subr.mxu0 0.0
  %1167 = vmatpush1.msra.mxu0 0.0
  %1168 = vmatprep.subr.mxu0 0.0
  %1169 = vmatpush1.msra.mxu0 0.0
  %1170 = vmatprep.subr.mxu0 0.0
  %1171 = vmatpush1.msra.mxu0 0.0
  %1172 = vmatprep.subr.mxu0 0.0
  %1173 = vmatpush1.msra.mxu0 0.0
  %1174 = vmatprep.subr.mxu0 0.0
  %1175 = vmatpush1.msra.mxu0 0.0
  %1176 = vmatprep.subr.mxu0 0.0
  %1177 = vmatpush1.msra.mxu0 0.0
  %1178 = vmatprep.subr.mxu0 0.0
  %1179 = vmatpush1.msra.mxu0 0.0
  %1180 = vmatprep.subr.mxu0 0.0
  %1181 = vmatpush1.msra.mxu0 0.0
  %1182 = vmatprep.subr.mxu0 0.0
  %1183 = vmatpush1.msra.mxu0 0.0
  %1184 = vmatprep.subr.mxu0 0.0
  %1185 = vmatpush1.msra.mxu0 0.0
  %1186 = vmatprep.subr.mxu0 0.0
  %1187 = vmatpush1.msra.mxu0 0.0
  %1188 = vmatprep.subr.mxu0 0.0
  %1189 = vmatpush1.msra.mxu0 0.0
  %1190 = vmatprep.subr.mxu0 0.0
  %1191 = vmatpush1.msra.mxu0 0.0
  %1192 = vmatprep.subr.mxu0 0.0
  %1193 = vmatpush1.msra.mxu0 0.0
  %1194 = vmatprep.subr.mxu0 0.0
  %1195 = vmatpush1.msra.mxu0 0.0
  %1196 = vmatprep.subr.mxu0 0.0
  %1197 = vmatpush1.msra.mxu0 0.0
  %1198 = vmatprep.subr.mxu0 0.0
  %1199 = vmatpush1.msra.mxu0 0.0
  %1200 = vmatprep.subr.mxu0 0.0
  %1201 = vmatpush1.msra.mxu0 0.0
  %1202 = vmatprep.subr.mxu0 0.0
  %1203 = vmatpush1.msra.mxu0 0.0
  %1204 = vmatprep.subr.mxu0 0.0
  %1205 = vmatpush1.msra.mxu0 0.0
  %1206 = vmatprep.subr.mxu0 0.0
  %1207 = vmatpush1.msra.mxu0 0.0
  %1208 = vmatprep.subr.mxu0 0.0
  %1209 = vmatpush1.msra.mxu0 0.0
  %1210 = vmatprep.subr.mxu0 0.0
  %1211 = vmatpush1.msra.mxu0 0.0
  %1212 = vmatprep.subr.mxu0 0.0
  %1213 = vmatpush1.msra.mxu0 0.0
  %1214 = vmatprep.subr.mxu0 0.0
  %1215 = vmatpush1.msra.mxu0 0.0
  %1216 = vmatprep.subr.mxu0 0.0
  %1217 = vmatpush1.msra.mxu0 0.0
  %1218 = vmatprep.subr.mxu0 0.0
  %1219 = vmatpush1.msra.mxu0 0.0
  %1220 = vmatprep.subr.mxu0 0.0
  %1221 = vmatpush1.msra.mxu0 0.0
  %1222 = vmatprep.subr.mxu0 0.0
  %1223 = vmatpush1.msra.mxu0 0.0
  %1224 = vmatprep.subr.mxu0 0.0
  %1225 = vmatpush1.msra.mxu0 0.0
  %1226 = vmatprep.subr.mxu0 0.0
  %1227 = vmatpush1.msra.mxu0 0.0
  %1228 = vmatprep.mubr.f32.mxu0 0.0
  %1229 = vmatmul.mubr.f32.gmra.mrb[0].mxu0 %v1158
  %v1230 = vpop.f32.mrb[0].mxu0
  %v1231 = vadd.f32 %v1151, %v1230
  %v1232 = vpop.f32.mrb[0].mxu0
  %v1233 = vadd.f32 %v1153, %v1232
  %1234 = vdwg.mxu0
  %v1235 = vld [vmem:[%s1049] sm:$0xff]
  %v1236 = vld [vmem:[%s1049 + $0x8] sm:$0xf]
  %v1237 = vmul.f32 %v1235, %v280
  %v1238 = vmul.f32 %v1236, %v278
  %v1239 = vld [vmem:[%s285] sm:$0xf]
  %v1242 = vcombine.high %v1237, %v1237
  %1243 = vrot.lane.b32.xlu0 %v1237, 126
  %v1244 = vpop.permute.xlu0 %1243
  %1245 = vrot.lane.b32.xlu0 %v1242, 126
  %v1246 = vpop.permute.xlu0 %1245
  %1247 = vrot.lane.b32.xlu0 %v1238, 126
  %v1248 = vpop.permute.xlu0 %1247
  %v1249 = vsel %vm296, %v1244, %v1246
  %v1250 = vsel %vm296, %v1246, %v1248
  %v1252 = vsel %vm104, %v1239, 0
  %v1254 = vsel %vm108, %v1249, 0
  %v1256 = vsel %vm108, %v1250, 0
  %1258 = vmatprep.subr.mxu0 %v1256
  %1259 = vmatpush1.msra.mxu0 %v1254
  %1260 = vmatprep.subr.mxu0 0.0
  %1261 = vmatpush1.msra.mxu0 0.0
  %1262 = vmatprep.subr.mxu0 0.0
  %1263 = vmatpush1.msra.mxu0 0.0
  %1264 = vmatprep.subr.mxu0 0.0
  %1265 = vmatpush1.msra.mxu0 0.0
  %1266 = vmatprep.subr.mxu0 0.0
  %1267 = vmatpush1.msra.mxu0 0.0
  %1268 = vmatprep.subr.mxu0 0.0
  %1269 = vmatpush1.msra.mxu0 0.0
  %1270 = vmatprep.subr.mxu0 0.0
  %1271 = vmatpush1.msra.mxu0 0.0
  %1272 = vmatprep.subr.mxu0 0.0
  %1273 = vmatpush1.msra.mxu0 0.0
  %1274 = vmatprep.subr.mxu0 0.0
  %1275 = vmatpush1.msra.mxu0 0.0
  %1276 = vmatprep.subr.mxu0 0.0
  %1277 = vmatpush1.msra.mxu0 0.0
  %1278 = vmatprep.subr.mxu0 0.0
  %1279 = vmatpush1.msra.mxu0 0.0
  %1280 = vmatprep.subr.mxu0 0.0
  %1281 = vmatpush1.msra.mxu0 0.0
  %1282 = vmatprep.subr.mxu0 0.0
  %1283 = vmatpush1.msra.mxu0 0.0
  %1284 = vmatprep.subr.mxu0 0.0
  %1285 = vmatpush1.msra.mxu0 0.0
  %1286 = vmatprep.subr.mxu0 0.0
  %1287 = vmatpush1.msra.mxu0 0.0
  %1288 = vmatprep.subr.mxu0 0.0
  %1289 = vmatpush1.msra.mxu0 0.0
  %1290 = vmatprep.subr.mxu0 0.0
  %1291 = vmatpush1.msra.mxu0 0.0
  %1292 = vmatprep.subr.mxu0 0.0
  %1293 = vmatpush1.msra.mxu0 0.0
  %1294 = vmatprep.subr.mxu0 0.0
  %1295 = vmatpush1.msra.mxu0 0.0
  %1296 = vmatprep.subr.mxu0 0.0
  %1297 = vmatpush1.msra.mxu0 0.0
  %1298 = vmatprep.subr.mxu0 0.0
  %1299 = vmatpush1.msra.mxu0 0.0
  %1300 = vmatprep.subr.mxu0 0.0
  %1301 = vmatpush1.msra.mxu0 0.0
  %1302 = vmatprep.subr.mxu0 0.0
  %1303 = vmatpush1.msra.mxu0 0.0
  %1304 = vmatprep.subr.mxu0 0.0
  %1305 = vmatpush1.msra.mxu0 0.0
  %1306 = vmatprep.subr.mxu0 0.0
  %1307 = vmatpush1.msra.mxu0 0.0
  %1308 = vmatprep.subr.mxu0 0.0
  %1309 = vmatpush1.msra.mxu0 0.0
  %1310 = vmatprep.subr.mxu0 0.0
  %1311 = vmatpush1.msra.mxu0 0.0
  %1312 = vmatprep.subr.mxu0 0.0
  %1313 = vmatpush1.msra.mxu0 0.0
  %1314 = vmatprep.subr.mxu0 0.0
  %1315 = vmatpush1.msra.mxu0 0.0
  %1316 = vmatprep.subr.mxu0 0.0
  %1317 = vmatpush1.msra.mxu0 0.0
  %1318 = vmatprep.subr.mxu0 0.0
  %1319 = vmatpush1.msra.mxu0 0.0
  %1320 = vmatprep.subr.mxu0 0.0
  %1321 = vmatpush1.msra.mxu0 0.0
  %1322 = vmatprep.mubr.f32.mxu0 0.0
  %1323 = vmatmul.mubr.f32.gmra.mrb[0].mxu0 %v1252
  %v1324 = vpop.f32.mrb[0].mxu0
  %v1325 = vadd.f32 0.0, %v1324
  %v1326 = vpop.f32.mrb[0].mxu0
  %v1327 = vadd.f32 0.0, %v1326
  %1328 = vdwg.mxu0
  %v1329 = vadd.f32 %v1231, %v1325
  %v1330 = vadd.f32 %v1233, %v1327
  %v1331 = vld [vmem:[%s1049] sm:$0xff]
  %v1332 = vld [vmem:[%s1049 + $0x8] sm:$0xf]
  %v1333 = vmul.f32 %v1331, %v385
  %v1334 = vmul.f32 %v1332, %v383
  %v1335 = vld [vmem:[%s390] sm:$0xf]
  %v1338 = vcombine.high %v1333, %v1333
  %1339 = vrot.lane.b32.xlu0 %v1333, 112
  %v1340 = vpop.permute.xlu0 %1339
  %1341 = vrot.lane.b32.xlu0 %v1338, 112
  %v1342 = vpop.permute.xlu0 %1341
  %1343 = vrot.lane.b32.xlu0 %v1334, 112
  %v1344 = vpop.permute.xlu0 %1343
  %v1345 = vsel %vm401, %v1340, %v1342
  %v1346 = vsel %vm401, %v1342, %v1344
  %v1348 = vsel %vm104, %v1335, 0
  %v1350 = vsel %vm108, %v1345, 0
  %v1352 = vsel %vm108, %v1346, 0
  %1354 = vmatprep.subr.mxu0 %v1352
  %1355 = vmatpush1.msra.mxu0 %v1350
  %1356 = vmatprep.subr.mxu0 0.0
  %1357 = vmatpush1.msra.mxu0 0.0
  %1358 = vmatprep.subr.mxu0 0.0
  %1359 = vmatpush1.msra.mxu0 0.0
  %1360 = vmatprep.subr.mxu0 0.0
  %1361 = vmatpush1.msra.mxu0 0.0
  %1362 = vmatprep.subr.mxu0 0.0
  %1363 = vmatpush1.msra.mxu0 0.0
  %1364 = vmatprep.subr.mxu0 0.0
  %1365 = vmatpush1.msra.mxu0 0.0
  %1366 = vmatprep.subr.mxu0 0.0
  %1367 = vmatpush1.msra.mxu0 0.0
  %1368 = vmatprep.subr.mxu0 0.0
  %1369 = vmatpush1.msra.mxu0 0.0
  %1370 = vmatprep.subr.mxu0 0.0
  %1371 = vmatpush1.msra.mxu0 0.0
  %1372 = vmatprep.subr.mxu0 0.0
  %1373 = vmatpush1.msra.mxu0 0.0
  %1374 = vmatprep.subr.mxu0 0.0
  %1375 = vmatpush1.msra.mxu0 0.0
  %1376 = vmatprep.subr.mxu0 0.0
  %1377 = vmatpush1.msra.mxu0 0.0
  %1378 = vmatprep.subr.mxu0 0.0
  %1379 = vmatpush1.msra.mxu0 0.0
  %1380 = vmatprep.subr.mxu0 0.0
  %1381 = vmatpush1.msra.mxu0 0.0
  %1382 = vmatprep.subr.mxu0 0.0
  %1383 = vmatpush1.msra.mxu0 0.0
  %1384 = vmatprep.subr.mxu0 0.0
  %1385 = vmatpush1.msra.mxu0 0.0
  %1386 = vmatprep.subr.mxu0 0.0
  %1387 = vmatpush1.msra.mxu0 0.0
  %1388 = vmatprep.subr.mxu0 0.0
  %1389 = vmatpush1.msra.mxu0 0.0
  %1390 = vmatprep.subr.mxu0 0.0
  %1391 = vmatpush1.msra.mxu0 0.0
  %1392 = vmatprep.subr.mxu0 0.0
  %1393 = vmatpush1.msra.mxu0 0.0
  %1394 = vmatprep.subr.mxu0 0.0
  %1395 = vmatpush1.msra.mxu0 0.0
  %1396 = vmatprep.subr.mxu0 0.0
  %1397 = vmatpush1.msra.mxu0 0.0
  %1398 = vmatprep.subr.mxu0 0.0
  %1399 = vmatpush1.msra.mxu0 0.0
  %1400 = vmatprep.subr.mxu0 0.0
  %1401 = vmatpush1.msra.mxu0 0.0
  %1402 = vmatprep.subr.mxu0 0.0
  %1403 = vmatpush1.msra.mxu0 0.0
  %1404 = vmatprep.subr.mxu0 0.0
  %1405 = vmatpush1.msra.mxu0 0.0
  %1406 = vmatprep.subr.mxu0 0.0
  %1407 = vmatpush1.msra.mxu0 0.0
  %1408 = vmatprep.subr.mxu0 0.0
  %1409 = vmatpush1.msra.mxu0 0.0
  %1410 = vmatprep.subr.mxu0 0.0
  %1411 = vmatpush1.msra.mxu0 0.0
  %1412 = vmatprep.subr.mxu0 0.0
  %1413 = vmatpush1.msra.mxu0 0.0
  %1414 = vmatprep.subr.mxu0 0.0
  %1415 = vmatpush1.msra.mxu0 0.0
  %1416 = vmatprep.subr.mxu0 0.0
  %1417 = vmatpush1.msra.mxu0 0.0
  %1418 = vmatprep.mubr.f32.mxu0 0.0
  %1419 = vmatmul.mubr.f32.gmra.mrb[0].mxu0 %v1348
  %v1420 = vpop.f32.mrb[0].mxu0
  %v1421 = vadd.f32 0.0, %v1420
  %v1422 = vpop.f32.mrb[0].mxu0
  %v1423 = vadd.f32 0.0, %v1422
  %1424 = vdwg.mxu0
  %v1425 = vadd.f32 %v1329, %v1421
  %v1426 = vadd.f32 %v1330, %v1423
  %v1427 = vld [vmem:[%s1049] sm:$0xff]
  %v1428 = vld [vmem:[%s1049 + $0x8] sm:$0xf]
  %v1429 = vld [vmem:[%s486] sm:$0xf]
  %v1432 = vcombine.high %v1427, %v1427
  %1433 = vrot.lane.b32.xlu0 %v1427, 111
  %v1434 = vpop.permute.xlu0 %1433
  %1435 = vrot.lane.b32.xlu0 %v1432, 111
  %v1436 = vpop.permute.xlu0 %1435
  %1437 = vrot.lane.b32.xlu0 %v1428, 111
  %v1438 = vpop.permute.xlu0 %1437
  %v1439 = vsel %vm497, %v1434, %v1436
  %v1440 = vsel %vm497, %v1436, %v1438
  %v1442 = vsel %vm104, %v1429, 0
  %v1444 = vsel %vm108, %v1439, 0
  %v1446 = vsel %vm108, %v1440, 0
  %1448 = vmatprep.subr.mxu0 %v1446
  %1449 = vmatpush1.msra.mxu0 %v1444
  %1450 = vmatprep.subr.mxu0 0.0
  %1451 = vmatpush1.msra.mxu0 0.0
  %1452 = vmatprep.subr.mxu0 0.0
  %1453 = vmatpush1.msra.mxu0 0.0
  %1454 = vmatprep.subr.mxu0 0.0
  %1455 = vmatpush1.msra.mxu0 0.0
  %1456 = vmatprep.subr.mxu0 0.0
  %1457 = vmatpush1.msra.mxu0 0.0
  %1458 = vmatprep.subr.mxu0 0.0
  %1459 = vmatpush1.msra.mxu0 0.0
  %1460 = vmatprep.subr.mxu0 0.0
  %1461 = vmatpush1.msra.mxu0 0.0
  %1462 = vmatprep.subr.mxu0 0.0
  %1463 = vmatpush1.msra.mxu0 0.0
  %1464 = vmatprep.subr.mxu0 0.0
  %1465 = vmatpush1.msra.mxu0 0.0
  %1466 = vmatprep.subr.mxu0 0.0
  %1467 = vmatpush1.msra.mxu0 0.0
  %1468 = vmatprep.subr.mxu0 0.0
  %1469 = vmatpush1.msra.mxu0 0.0
  %1470 = vmatprep.subr.mxu0 0.0
  %1471 = vmatpush1.msra.mxu0 0.0
  %1472 = vmatprep.subr.mxu0 0.0
  %1473 = vmatpush1.msra.mxu0 0.0
  %1474 = vmatprep.subr.mxu0 0.0
  %1475 = vmatpush1.msra.mxu0 0.0
  %1476 = vmatprep.subr.mxu0 0.0
  %1477 = vmatpush1.msra.mxu0 0.0
  %1478 = vmatprep.subr.mxu0 0.0
  %1479 = vmatpush1.msra.mxu0 0.0
  %1480 = vmatprep.subr.mxu0 0.0
  %1481 = vmatpush1.msra.mxu0 0.0
  %1482 = vmatprep.subr.mxu0 0.0
  %1483 = vmatpush1.msra.mxu0 0.0
  %1484 = vmatprep.subr.mxu0 0.0
  %1485 = vmatpush1.msra.mxu0 0.0
  %1486 = vmatprep.subr.mxu0 0.0
  %1487 = vmatpush1.msra.mxu0 0.0
  %1488 = vmatprep.subr.mxu0 0.0
  %1489 = vmatpush1.msra.mxu0 0.0
  %1490 = vmatprep.subr.mxu0 0.0
  %1491 = vmatpush1.msra.mxu0 0.0
  %1492 = vmatprep.subr.mxu0 0.0
  %1493 = vmatpush1.msra.mxu0 0.0
  %1494 = vmatprep.subr.mxu0 0.0
  %1495 = vmatpush1.msra.mxu0 0.0
  %1496 = vmatprep.subr.mxu0 0.0
  %1497 = vmatpush1.msra.mxu0 0.0
  %1498 = vmatprep.subr.mxu0 0.0
  %1499 = vmatpush1.msra.mxu0 0.0
  %1500 = vmatprep.subr.mxu0 0.0
  %1501 = vmatpush1.msra.mxu0 0.0
  %1502 = vmatprep.subr.mxu0 0.0
  %1503 = vmatpush1.msra.mxu0 0.0
  %1504 = vmatprep.subr.mxu0 0.0
  %1505 = vmatpush1.msra.mxu0 0.0
  %1506 = vmatprep.subr.mxu0 0.0
  %1507 = vmatpush1.msra.mxu0 0.0
  %1508 = vmatprep.subr.mxu0 0.0
  %1509 = vmatpush1.msra.mxu0 0.0
  %1510 = vmatprep.subr.mxu0 0.0
  %1511 = vmatpush1.msra.mxu0 0.0
  %1512 = vmatprep.mubr.f32.mxu0 0.0
  %1513 = vmatmul.mubr.f32.gmra.mrb[0].mxu0 %v1442
  %v1514 = vpop.f32.mrb[0].mxu0
  %v1515 = vadd.f32 0.0, %v1514
  %v1516 = vpop.f32.mrb[0].mxu0
  %v1517 = vadd.f32 0.0, %v1516
  %1518 = vdwg.mxu0
  %v1519 = vadd.f32 %v1425, %v1515
  %v1520 = vadd.f32 %v1426, %v1517
  %v1521 = vld [vmem:[%s1049] sm:$0xff]
  %v1522 = vld [vmem:[%s1049 + $0x8] sm:$0xf]
  %v1523 = vmul.f32 %v1521, %v586
  %v1524 = vmul.f32 %v1522, %v584
  %v1525 = vld [vmem:[%s591] sm:$0xf]
  %v1528 = vcombine.high %v1523, %v1523
  %1529 = vrot.lane.b32.xlu0 %v1523, 110
  %v1530 = vpop.permute.xlu0 %1529
  %1531 = vrot.lane.b32.xlu0 %v1528, 110
  %v1532 = vpop.permute.xlu0 %1531
  %1533 = vrot.lane.b32.xlu0 %v1524, 110
  %v1534 = vpop.permute.xlu0 %1533
  %v1535 = vsel %vm602, %v1530, %v1532
  %v1536 = vsel %vm602, %v1532, %v1534
  %v1538 = vsel %vm104, %v1525, 0
  %v1540 = vsel %vm108, %v1535, 0
  %v1542 = vsel %vm108, %v1536, 0
  %1544 = vmatprep.subr.mxu0 %v1542
  %1545 = vmatpush1.msra.mxu0 %v1540
  %1546 = vmatprep.subr.mxu0 0.0
  %1547 = vmatpush1.msra.mxu0 0.0
  %1548 = vmatprep.subr.mxu0 0.0
  %1549 = vmatpush1.msra.mxu0 0.0
  %1550 = vmatprep.subr.mxu0 0.0
  %1551 = vmatpush1.msra.mxu0 0.0
  %1552 = vmatprep.subr.mxu0 0.0
  %1553 = vmatpush1.msra.mxu0 0.0
  %1554 = vmatprep.subr.mxu0 0.0
  %1555 = vmatpush1.msra.mxu0 0.0
  %1556 = vmatprep.subr.mxu0 0.0
  %1557 = vmatpush1.msra.mxu0 0.0
  %1558 = vmatprep.subr.mxu0 0.0
  %1559 = vmatpush1.msra.mxu0 0.0
  %1560 = vmatprep.subr.mxu0 0.0
  %1561 = vmatpush1.msra.mxu0 0.0
  %1562 = vmatprep.subr.mxu0 0.0
  %1563 = vmatpush1.msra.mxu0 0.0
  %1564 = vmatprep.subr.mxu0 0.0
  %1565 = vmatpush1.msra.mxu0 0.0
  %1566 = vmatprep.subr.mxu0 0.0
  %1567 = vmatpush1.msra.mxu0 0.0
  %1568 = vmatprep.subr.mxu0 0.0
  %1569 = vmatpush1.msra.mxu0 0.0
  %1570 = vmatprep.subr.mxu0 0.0
  %1571 = vmatpush1.msra.mxu0 0.0
  %1572 = vmatprep.subr.mxu0 0.0
  %1573 = vmatpush1.msra.mxu0 0.0
  %1574 = vmatprep.subr.mxu0 0.0
  %1575 = vmatpush1.msra.mxu0 0.0
  %1576 = vmatprep.subr.mxu0 0.0
  %1577 = vmatpush1.msra.mxu0 0.0
  %1578 = vmatprep.subr.mxu0 0.0
  %1579 = vmatpush1.msra.mxu0 0.0
  %1580 = vmatprep.subr.mxu0 0.0
  %1581 = vmatpush1.msra.mxu0 0.0
  %1582 = vmatprep.subr.mxu0 0.0
  %1583 = vmatpush1.msra.mxu0 0.0
  %1584 = vmatprep.subr.mxu0 0.0
  %1585 = vmatpush1.msra.mxu0 0.0
  %1586 = vmatprep.subr.mxu0 0.0
  %1587 = vmatpush1.msra.mxu0 0.0
  %1588 = vmatprep.subr.mxu0 0.0
  %1589 = vmatpush1.msra.mxu0 0.0
  %1590 = vmatprep.subr.mxu0 0.0
  %1591 = vmatpush1.msra.mxu0 0.0
  %1592 = vmatprep.subr.mxu0 0.0
  %1593 = vmatpush1.msra.mxu0 0.0
  %1594 = vmatprep.subr.mxu0 0.0
  %1595 = vmatpush1.msra.mxu0 0.0
  %1596 = vmatprep.subr.mxu0 0.0
  %1597 = vmatpush1.msra.mxu0 0.0
  %1598 = vmatprep.subr.mxu0 0.0
  %1599 = vmatpush1.msra.mxu0 0.0
  %1600 = vmatprep.subr.mxu0 0.0
  %1601 = vmatpush1.msra.mxu0 0.0
  %1602 = vmatprep.subr.mxu0 0.0
  %1603 = vmatpush1.msra.mxu0 0.0
  %1604 = vmatprep.subr.mxu0 0.0
  %1605 = vmatpush1.msra.mxu0 0.0
  %1606 = vmatprep.subr.mxu0 0.0
  %1607 = vmatpush1.msra.mxu0 0.0
  %1608 = vmatprep.mubr.f32.mxu0 0.0
  %1609 = vmatmul.mubr.f32.gmra.mrb[0].mxu0 %v1538
  %v1610 = vpop.f32.mrb[0].mxu0
  %v1611 = vadd.f32 0.0, %v1610
  %v1612 = vpop.f32.mrb[0].mxu0
  %v1613 = vadd.f32 0.0, %v1612
  %1614 = vdwg.mxu0
  %v1615 = vadd.f32 %v1519, %v1611
  %v1616 = vadd.f32 %v1520, %v1613
  %v1617 = vld [vmem:[%s1049] sm:$0xff]
  %v1618 = vld [vmem:[%s1049 + $0x8] sm:$0xf]
  %v1619 = vmul.f32 %v1617, %v691
  %v1620 = vmul.f32 %v1618, %v689
  %v1621 = vld [vmem:[%s696] sm:$0xf]
  %v1624 = vcombine.high %v1619, %v1619
  %1625 = vrot.lane.b32.xlu0 %v1619, 96
  %v1626 = vpop.permute.xlu0 %1625
  %1627 = vrot.lane.b32.xlu0 %v1624, 96
  %v1628 = vpop.permute.xlu0 %1627
  %1629 = vrot.lane.b32.xlu0 %v1620, 96
  %v1630 = vpop.permute.xlu0 %1629
  %v1631 = vsel %vm707, %v1626, %v1628
  %v1632 = vsel %vm707, %v1628, %v1630
  %v1634 = vsel %vm104, %v1621, 0
  %v1636 = vsel %vm108, %v1631, 0
  %v1638 = vsel %vm108, %v1632, 0
  %1640 = vmatprep.subr.mxu0 %v1638
  %1641 = vmatpush1.msra.mxu0 %v1636
  %1642 = vmatprep.subr.mxu0 0.0
  %1643 = vmatpush1.msra.mxu0 0.0
  %1644 = vmatprep.subr.mxu0 0.0
  %1645 = vmatpush1.msra.mxu0 0.0
  %1646 = vmatprep.subr.mxu0 0.0
  %1647 = vmatpush1.msra.mxu0 0.0
  %1648 = vmatprep.subr.mxu0 0.0
  %1649 = vmatpush1.msra.mxu0 0.0
  %1650 = vmatprep.subr.mxu0 0.0
  %1651 = vmatpush1.msra.mxu0 0.0
  %1652 = vmatprep.subr.mxu0 0.0
  %1653 = vmatpush1.msra.mxu0 0.0
  %1654 = vmatprep.subr.mxu0 0.0
  %1655 = vmatpush1.msra.mxu0 0.0
  %1656 = vmatprep.subr.mxu0 0.0
  %1657 = vmatpush1.msra.mxu0 0.0
  %1658 = vmatprep.subr.mxu0 0.0
  %1659 = vmatpush1.msra.mxu0 0.0
  %1660 = vmatprep.subr.mxu0 0.0
  %1661 = vmatpush1.msra.mxu0 0.0
  %1662 = vmatprep.subr.mxu0 0.0
  %1663 = vmatpush1.msra.mxu0 0.0
  %1664 = vmatprep.subr.mxu0 0.0
  %1665 = vmatpush1.msra.mxu0 0.0
  %1666 = vmatprep.subr.mxu0 0.0
  %1667 = vmatpush1.msra.mxu0 0.0
  %1668 = vmatprep.subr.mxu0 0.0
  %1669 = vmatpush1.msra.mxu0 0.0
  %1670 = vmatprep.subr.mxu0 0.0
  %1671 = vmatpush1.msra.mxu0 0.0
  %1672 = vmatprep.subr.mxu0 0.0
  %1673 = vmatpush1.msra.mxu0 0.0
  %1674 = vmatprep.subr.mxu0 0.0
  %1675 = vmatpush1.msra.mxu0 0.0
  %1676 = vmatprep.subr.mxu0 0.0
  %1677 = vmatpush1.msra.mxu0 0.0
  %1678 = vmatprep.subr.mxu0 0.0
  %1679 = vmatpush1.msra.mxu0 0.0
  %1680 = vmatprep.subr.mxu0 0.0
  %1681 = vmatpush1.msra.mxu0 0.0
  %1682 = vmatprep.subr.mxu0 0.0
  %1683 = vmatpush1.msra.mxu0 0.0
  %1684 = vmatprep.subr.mxu0 0.0
  %1685 = vmatpush1.msra.mxu0 0.0
  %1686 = vmatprep.subr.mxu0 0.0
  %1687 = vmatpush1.msra.mxu0 0.0
  %1688 = vmatprep.subr.mxu0 0.0
  %1689 = vmatpush1.msra.mxu0 0.0
  %1690 = vmatprep.subr.mxu0 0.0
  %1691 = vmatpush1.msra.mxu0 0.0
  %1692 = vmatprep.subr.mxu0 0.0
  %1693 = vmatpush1.msra.mxu0 0.0
  %1694 = vmatprep.subr.mxu0 0.0
  %1695 = vmatpush1.msra.mxu0 0.0
  %1696 = vmatprep.subr.mxu0 0.0
  %1697 = vmatpush1.msra.mxu0 0.0
  %1698 = vmatprep.subr.mxu0 0.0
  %1699 = vmatpush1.msra.mxu0 0.0
  %1700 = vmatprep.subr.mxu0 0.0
  %1701 = vmatpush1.msra.mxu0 0.0
  %1702 = vmatprep.subr.mxu0 0.0
  %1703 = vmatpush1.msra.mxu0 0.0
  %1704 = vmatprep.mubr.f32.mxu0 0.0
  %1705 = vmatmul.mubr.f32.gmra.mrb[0].mxu0 %v1634
  %v1706 = vpop.f32.mrb[0].mxu0
  %v1707 = vadd.f32 0.0, %v1706
  %v1708 = vpop.f32.mrb[0].mxu0
  %v1709 = vadd.f32 0.0, %v1708
  %1710 = vdwg.mxu0
  %v1711 = vadd.f32 %v1615, %v1707
  %v1712 = vadd.f32 %v1616, %v1709
  %v1713 = vld [vmem:[%s1049] sm:$0xff]
  %v1714 = vld [vmem:[%s1049 + $0x8] sm:$0xf]
  %v1715 = vld [vmem:[%s792] sm:$0xf]
  %v1718 = vcombine.high %v1713, %v1713
  %1719 = vrot.lane.b32.xlu0 %v1713, 95
  %v1720 = vpop.permute.xlu0 %1719
  %1721 = vrot.lane.b32.xlu0 %v1718, 95
  %v1722 = vpop.permute.xlu0 %1721
  %1723 = vrot.lane.b32.xlu0 %v1714, 95
  %v1724 = vpop.permute.xlu0 %1723
  %v1725 = vsel %vm803, %v1720, %v1722
  %v1726 = vsel %vm803, %v1722, %v1724
  %v1728 = vsel %vm104, %v1715, 0
  %v1730 = vsel %vm108, %v1725, 0
  %v1732 = vsel %vm108, %v1726, 0
  %1734 = vmatprep.subr.mxu0 %v1732
  %1735 = vmatpush1.msra.mxu0 %v1730
  %1736 = vmatprep.subr.mxu0 0.0
  %1737 = vmatpush1.msra.mxu0 0.0
  %1738 = vmatprep.subr.mxu0 0.0
  %1739 = vmatpush1.msra.mxu0 0.0
  %1740 = vmatprep.subr.mxu0 0.0
  %1741 = vmatpush1.msra.mxu0 0.0
  %1742 = vmatprep.subr.mxu0 0.0
  %1743 = vmatpush1.msra.mxu0 0.0
  %1744 = vmatprep.subr.mxu0 0.0
  %1745 = vmatpush1.msra.mxu0 0.0
  %1746 = vmatprep.subr.mxu0 0.0
  %1747 = vmatpush1.msra.mxu0 0.0
  %1748 = vmatprep.subr.mxu0 0.0
  %1749 = vmatpush1.msra.mxu0 0.0
  %1750 = vmatprep.subr.mxu0 0.0
  %1751 = vmatpush1.msra.mxu0 0.0
  %1752 = vmatprep.subr.mxu0 0.0
  %1753 = vmatpush1.msra.mxu0 0.0
  %1754 = vmatprep.subr.mxu0 0.0
  %1755 = vmatpush1.msra.mxu0 0.0
  %1756 = vmatprep.subr.mxu0 0.0
  %1757 = vmatpush1.msra.mxu0 0.0
  %1758 = vmatprep.subr.mxu0 0.0
  %1759 = vmatpush1.msra.mxu0 0.0
  %1760 = vmatprep.subr.mxu0 0.0
  %1761 = vmatpush1.msra.mxu0 0.0
  %1762 = vmatprep.subr.mxu0 0.0
  %1763 = vmatpush1.msra.mxu0 0.0
  %1764 = vmatprep.subr.mxu0 0.0
  %1765 = vmatpush1.msra.mxu0 0.0
  %1766 = vmatprep.subr.mxu0 0.0
  %1767 = vmatpush1.msra.mxu0 0.0
  %1768 = vmatprep.subr.mxu0 0.0
  %1769 = vmatpush1.msra.mxu0 0.0
  %1770 = vmatprep.subr.mxu0 0.0
  %1771 = vmatpush1.msra.mxu0 0.0
  %1772 = vmatprep.subr.mxu0 0.0
  %1773 = vmatpush1.msra.mxu0 0.0
  %1774 = vmatprep.subr.mxu0 0.0
  %1775 = vmatpush1.msra.mxu0 0.0
  %1776 = vmatprep.subr.mxu0 0.0
  %1777 = vmatpush1.msra.mxu0 0.0
  %1778 = vmatprep.subr.mxu0 0.0
  %1779 = vmatpush1.msra.mxu0 0.0
  %1780 = vmatprep.subr.mxu0 0.0
  %1781 = vmatpush1.msra.mxu0 0.0
  %1782 = vmatprep.subr.mxu0 0.0
  %1783 = vmatpush1.msra.mxu0 0.0
  %1784 = vmatprep.subr.mxu0 0.0
  %1785 = vmatpush1.msra.mxu0 0.0
  %1786 = vmatprep.subr.mxu0 0.0
  %1787 = vmatpush1.msra.mxu0 0.0
  %1788 = vmatprep.subr.mxu0 0.0
  %1789 = vmatpush1.msra.mxu0 0.0
  %1790 = vmatprep.subr.mxu0 0.0
  %1791 = vmatpush1.msra.mxu0 0.0
  %1792 = vmatprep.subr.mxu0 0.0
  %1793 = vmatpush1.msra.mxu0 0.0
  %1794 = vmatprep.subr.mxu0 0.0
  %1795 = vmatpush1.msra.mxu0 0.0
  %1796 = vmatprep.subr.mxu0 0.0
  %1797 = vmatpush1.msra.mxu0 0.0
  %1798 = vmatprep.mubr.f32.mxu0 0.0
  %1799 = vmatmul.mubr.f32.gmra.mrb[0].mxu0 %v1728
  %v1800 = vpop.f32.mrb[0].mxu0
  %v1801 = vadd.f32 0.0, %v1800
  %v1802 = vpop.f32.mrb[0].mxu0
  %v1803 = vadd.f32 0.0, %v1802
  %1804 = vdwg.mxu0
  %v1805 = vadd.f32 %v1711, %v1801
  %v1806 = vadd.f32 %v1712, %v1803
  %v1807 = vld [vmem:[%s1049] sm:$0xff]
  %v1808 = vld [vmem:[%s1049 + $0x8] sm:$0xf]
  %v1809 = vmul.f32 %v1807, %v892
  %v1810 = vmul.f32 %v1808, %v890
  %v1811 = vld [vmem:[%s897] sm:$0xf]
  %v1814 = vcombine.high %v1809, %v1809
  %1815 = vrot.lane.b32.xlu0 %v1809, 94
  %v1816 = vpop.permute.xlu0 %1815
  %1817 = vrot.lane.b32.xlu0 %v1814, 94
  %v1818 = vpop.permute.xlu0 %1817
  %1819 = vrot.lane.b32.xlu0 %v1810, 94
  %v1820 = vpop.permute.xlu0 %1819
  %v1821 = vsel %vm908, %v1816, %v1818
  %v1822 = vsel %vm908, %v1818, %v1820
  %v1824 = vsel %vm104, %v1811, 0
  %v1826 = vsel %vm108, %v1821, 0
  %v1828 = vsel %vm108, %v1822, 0
  %1830 = vmatprep.subr.mxu0 %v1828
  %1831 = vmatpush1.msra.mxu0 %v1826
  %1832 = vmatprep.subr.mxu0 0.0
  %1833 = vmatpush1.msra.mxu0 0.0
  %1834 = vmatprep.subr.mxu0 0.0
  %1835 = vmatpush1.msra.mxu0 0.0
  %1836 = vmatprep.subr.mxu0 0.0
  %1837 = vmatpush1.msra.mxu0 0.0
  %1838 = vmatprep.subr.mxu0 0.0
  %1839 = vmatpush1.msra.mxu0 0.0
  %1840 = vmatprep.subr.mxu0 0.0
  %1841 = vmatpush1.msra.mxu0 0.0
  %1842 = vmatprep.subr.mxu0 0.0
  %1843 = vmatpush1.msra.mxu0 0.0
  %1844 = vmatprep.subr.mxu0 0.0
  %1845 = vmatpush1.msra.mxu0 0.0
  %1846 = vmatprep.subr.mxu0 0.0
  %1847 = vmatpush1.msra.mxu0 0.0
  %1848 = vmatprep.subr.mxu0 0.0
  %1849 = vmatpush1.msra.mxu0 0.0
  %1850 = vmatprep.subr.mxu0 0.0
  %1851 = vmatpush1.msra.mxu0 0.0
  %1852 = vmatprep.subr.mxu0 0.0
  %1853 = vmatpush1.msra.mxu0 0.0
  %1854 = vmatprep.subr.mxu0 0.0
  %1855 = vmatpush1.msra.mxu0 0.0
  %1856 = vmatprep.subr.mxu0 0.0
  %1857 = vmatpush1.msra.mxu0 0.0
  %1858 = vmatprep.subr.mxu0 0.0
  %1859 = vmatpush1.msra.mxu0 0.0
  %1860 = vmatprep.subr.mxu0 0.0
  %1861 = vmatpush1.msra.mxu0 0.0
  %1862 = vmatprep.subr.mxu0 0.0
  %1863 = vmatpush1.msra.mxu0 0.0
  %1864 = vmatprep.subr.mxu0 0.0
  %1865 = vmatpush1.msra.mxu0 0.0
  %1866 = vmatprep.subr.mxu0 0.0
  %1867 = vmatpush1.msra.mxu0 0.0
  %1868 = vmatprep.subr.mxu0 0.0
  %1869 = vmatpush1.msra.mxu0 0.0
  %1870 = vmatprep.subr.mxu0 0.0
  %1871 = vmatpush1.msra.mxu0 0.0
  %1872 = vmatprep.subr.mxu0 0.0
  %1873 = vmatpush1.msra.mxu0 0.0
  %1874 = vmatprep.subr.mxu0 0.0
  %1875 = vmatpush1.msra.mxu0 0.0
  %1876 = vmatprep.subr.mxu0 0.0
  %1877 = vmatpush1.msra.mxu0 0.0
  %1878 = vmatprep.subr.mxu0 0.0
  %1879 = vmatpush1.msra.mxu0 0.0
  %1880 = vmatprep.subr.mxu0 0.0
  %1881 = vmatpush1.msra.mxu0 0.0
  %1882 = vmatprep.subr.mxu0 0.0
  %1883 = vmatpush1.msra.mxu0 0.0
  %1884 = vmatprep.subr.mxu0 0.0
  %1885 = vmatpush1.msra.mxu0 0.0
  %1886 = vmatprep.subr.mxu0 0.0
  %1887 = vmatpush1.msra.mxu0 0.0
  %1888 = vmatprep.subr.mxu0 0.0
  %1889 = vmatpush1.msra.mxu0 0.0
  %1890 = vmatprep.subr.mxu0 0.0
  %1891 = vmatpush1.msra.mxu0 0.0
  %1892 = vmatprep.subr.mxu0 0.0
  %1893 = vmatpush1.msra.mxu0 0.0
  %1894 = vmatprep.mubr.f32.mxu0 0.0
  %1895 = vmatmul.mubr.f32.gmra.mrb[0].mxu0 %v1824
  %v1896 = vpop.f32.mrb[0].mxu0
  %v1897 = vadd.f32 0.0, %v1896
  %v1898 = vpop.f32.mrb[0].mxu0
  %v1899 = vadd.f32 0.0, %v1898
  %1900 = vdwg.mxu0
  %v1901 = vadd.f32 %v1805, %v1897
  %v1902 = vadd.f32 %v1806, %v1899
  %v1903 = vld [vmem:[%s4] sm:$0xf]
  %1905 = vset.pattern.permute.xlu0 0
  %1906 = vperm.xlu0 %1905, %v1903
  %v1907 = vpop.permute.xlu0 %1906
  %v1909 = vadd.f32 %v1901, %v1907
  %v1910 = vadd.f32 %v1902, %v1907
  %v1913 = vcombine.low %v1909, %v1910
  %s1915 = scalar_lea.vmem %s6, 8
  %1916 = vst [vmem:[%s1915] sm:$0xff] %v1913
  %v1917 = vsel %vm108, %v1909, 0.0
  %v1918 = vsel %vm108, %v1910, 0.0
  %v1919 = vadd.f32 %v1917, %v1918
  %1920 = vadd.xlane.f32.xlu0 %v1919
  %v1921 = vpop.xlane.xlu0 %1920
  %v1922 = vadd.f32 %v1009, %v1921
  %v1923 = vmul.f32 %v1909, %v1909
  %v1924 = vmul.f32 %v1910, %v1910
  %v1925 = vsel %vm108, %v1923, 0.0
  %v1926 = vsel %vm108, %v1924, 0.0
  %v1927 = vadd.f32 %v1925, %v1926
  %1928 = vadd.xlane.f32.xlu0 %v1927
  %v1929 = vpop.xlane.xlu0 %1928
  %v1930 = vadd.f32 %v1017, %v1929
  %vm1931 = vcmask 3072
  %1932 = vst.msk [vmem:[%s7] sm:$0xf] %vm1931, %v1922
  %vm1933 = vcmask 11272
  %1934 = vst.msk [vmem:[%s7] sm:$0xf] %vm1933, %v1930
  // Predicated region
  $region26: #{_trans_block_forward_impl.4} parent=0 // pred_check
    _
  $region27: #{_trans_block_forward_impl.4} parent=0 // pred_check_branch
    %1936 = sbr.rel (0) target = $region29
  $region28: #{_trans_block_forward_impl.4} parent=0 // pred_region
    _
  $region29: #{_trans_block_forward_impl.4} parent=0 // pred_fallthru
    _
  // Predicated region
  $region30: #{_trans_block_forward_impl.4} parent=0 // pred_check
    _
  $region31: #{_trans_block_forward_impl.4} parent=0 // pred_check_branch
    %1938 = sbr.rel (0) target = $region33
  $region32: #{_trans_block_forward_impl.4} parent=0 // pred_region
    _
  $region33: #{_trans_block_forward_impl.4} parent=0 // pred_fallthru
    _
  // Predicated region
  $region34: #{_trans_block_forward_impl.4} parent=0 // pred_check
    _
  $region35: #{_trans_block_forward_impl.4} parent=0 // pred_check_branch
    %1940 = sbr.rel (0) target = $region37
  $region36: #{_trans_block_forward_impl.4} parent=0 // pred_region
    _
  $region37: #{_trans_block_forward_impl.4} parent=0 // pred_fallthru
    _
  // Predicated region
  $region38: #{_trans_block_forward_impl.4} parent=0 // pred_check
    _
  $region39: #{_trans_block_forward_impl.4} parent=0 // pred_check_branch
    %1942 = sbr.rel (0) target = $region41
  $region40: #{_trans_block_forward_impl.4} parent=0 // pred_region
    _
  $region41: #{_trans_block_forward_impl.4} parent=0 // pred_fallthru
    _

</llo_original>
